<compile_context>
chip_gen: v7x
topology: tpu7x:2x2x1
jax: 0.10.0
libtpu: 0.0.40
codegen_flags: <defaults>
</compile_context>

<pallas_src>
import functools
import math

import jax
import jax.numpy as jnp
from jax.experimental import pallas as pl
from jax.experimental.pallas import tpu as pltpu


# ----------------------------------------------------------------------------
# Small math helpers (pure jnp; usable both inside the kernel and in the
# pure-JAX reference)
# ----------------------------------------------------------------------------
def _layernorm(x, g, b, eps=1e-5):
    mu = jnp.mean(x, axis=-1, keepdims=True)
    xc = x - mu
    var = jnp.mean(xc * xc, axis=-1, keepdims=True)
    return xc * jax.lax.rsqrt(var + eps) * g + b


def timestep_sinusoid(t, dim, max_period=10000.0):
    half = dim // 2
    freqs = jnp.exp(-math.log(max_period) * jnp.arange(half, dtype=jnp.float32) / half)
    args = t.astype(jnp.float32)[:, None] * freqs[None, :]
    return jnp.concatenate([jnp.cos(args), jnp.sin(args)], axis=-1)  # (B, dim)


def harmonic_embedding(x, n_harmonics):
    # PyTorch3D HarmonicEmbedding(append_input=True): [sin(x*f), cos(x*f), x]
    freqs = 2.0 ** jnp.arange(n_harmonics, dtype=jnp.float32)        # (H,)
    emb = x[..., None] * freqs                                       # (..., D, H)
    emb = emb.reshape(*x.shape[:-1], -1)                             # (..., D*H)
    return jnp.concatenate([jnp.sin(emb), jnp.cos(emb), x], axis=-1)


# ----------------------------------------------------------------------------
# The single fused Pallas kernel
# ----------------------------------------------------------------------------
def _fused_denoiser_kernel(*refs, B, N, nhead, d_model, nlayers):
    """refs = inputs (10 + 12*nlayers + 6), out_ref, qkv_scratch, attn_scratch."""
    n_in = 10 + 12 * nlayers + 6
    in_refs = refs[:n_in]
    out_ref = refs[n_in]
    qkv_scr = refs[n_in + 1]      # VMEM (B*N, 3*d_model)
    attn_scr = refs[n_in + 2]     # VMEM (B*N, d_model)

    f32 = jnp.float32
    dh = d_model // nhead
    scale = 1.0 / math.sqrt(dh)

    it = iter(in_refs)
    nxt = lambda: next(it)[...]

    feed = nxt()            # (B*N, pose_out + z_dim + 1)
    bcast = nxt()           # (B*N, B)  one-hot row->batch map
    t_sin = nxt()           # (B, time_dim)
    tw1 = nxt(); tb1 = nxt()
    tw2 = nxt(); tb2 = nxt()
    wxz = nxt(); wt = nxt(); bf = nxt()

    # --- time embedding MLP: Linear -> SiLU -> Linear, projected to d_model ---
    h_t = jnp.dot(t_sin, tw1, preferred_element_type=f32) + tb1
    h_t = h_t * pl.reciprocal(1.0 + jnp.exp(-h_t), approx=True)          # SiLU (EUP recip)
    t_emb = jnp.dot(h_t, tw2, preferred_element_type=f32) + tb2          # (B, time_out)
    t_proj = jnp.dot(t_emb, wt, preferred_element_type=f32)              # (B, d_model)
    t_rows = jnp.dot(bcast, t_proj, preferred_element_type=f32)          # (B*N, d_model)

    # --- _first linear (pose/z part + broadcast time part) ---
    h = jnp.dot(feed, wxz, preferred_element_type=f32) + t_rows + bf     # (B*N, d_model)

    # --- _trunk: post-norm transformer encoder layers ---
    for _ in range(nlayers):
        in_w = nxt(); in_b = nxt()
        out_w = nxt(); out_b = nxt()
        ff1_w = nxt(); ff1_b = nxt()
        ff2_w = nxt(); ff2_b = nxt()
        ln1_g = nxt(); ln1_b = nxt()
        ln2_g = nxt(); ln2_b = nxt()

        # QKV projection as one lane-dense (B*N, 3*d_model) slab
        qkv_scr[...] = jnp.dot(h, in_w, preferred_element_type=f32) + in_b

        # per-(batch, head) attention, fully unrolled in-kernel
        for b in range(B):
            r0 = b * N
            for hh in range(nhead):
                c = hh * dh
                q = qkv_scr[r0:r0 + N, c:c + dh]
                k = qkv_scr[r0:r0 + N, d_model + c:d_model + c + dh]
                v = qkv_scr[r0:r0 + N, 2 * d_model + c:2 * d_model + c + dh]
                s = jax.lax.dot_general(q, k, (((1,), (1,)), ((), ())),
                                        preferred_element_type=f32) * scale
                s = s - jnp.max(s, axis=-1, keepdims=True)
                p = jnp.exp(s)
                p = p * pl.reciprocal(jnp.sum(p, axis=-1, keepdims=True), approx=True)
                attn_scr[r0:r0 + N, c:c + dh] = jnp.dot(
                    p, v, preferred_element_type=f32)

        # out-proj + residual + LayerNorm (fused)
        attn = jnp.dot(attn_scr[...], out_w, preferred_element_type=f32) + out_b
        h = _layernorm(h + attn, ln1_g, ln1_b)

        # FFN + residual + LayerNorm (fused)
        ff = jnp.maximum(jnp.dot(h, ff1_w, preferred_element_type=f32) + ff1_b, 0.0)
        ff = jnp.dot(ff, ff2_w, preferred_element_type=f32) + ff2_b
        h = _layernorm(h + ff, ln2_g, ln2_b)

    # --- _last: Linear -> LayerNorm -> ReLU -> Linear (no zeros residual) ---
    lw1 = nxt(); lb1 = nxt()
    lng = nxt(); lnb = nxt()
    lw2 = nxt(); lb2 = nxt()
    y = jnp.dot(h, lw1, preferred_element_type=f32) + lb1
    y = jnp.maximum(_layernorm(y, lng, lnb), 0.0)
    y = jnp.dot(y, lw2, preferred_element_type=f32) + lb2                # (B*N, target_dim)
    out_ref[...] = y.astype(out_ref.dtype)


# ----------------------------------------------------------------------------
# Parameters (same layout / init as the PyTorch module)
# ----------------------------------------------------------------------------
def _init_linear(key, in_dim, out_dim):
    kw, kb = jax.random.split(key)
    bound = 1.0 / math.sqrt(in_dim)
    w = jax.random.uniform(kw, (in_dim, out_dim), jnp.float32, -bound, bound)
    b = jax.random.uniform(kb, (out_dim,), jnp.float32, -bound, bound)
    return w, b


def init_params(key, *, target_dim, z_dim, time_dim, n_harm,
                d_model, nlayers, dff, mlp_hidden):
    pose_out = target_dim * (2 * n_harm + 1)
    time_out = time_dim // 2
    first_dim = pose_out + time_out + z_dim + 1  # +1 for pivot_cam_onehot
    keys = jax.random.split(key, 5 + nlayers)
    p = {}
    p["time_w1"], p["time_b1"] = _init_linear(keys[0], time_dim, time_out)
    p["time_w2"], p["time_b2"] = _init_linear(keys[1], time_out, time_out)
    p["first_w"], p["first_b"] = _init_linear(keys[2], first_dim, d_model)
    layers = []
    for li in range(nlayers):
        k = jax.random.split(keys[3 + li], 4)
        lw = {}
        lw["in_w"], lw["in_b"] = _init_linear(k[0], d_model, 3 * d_model)
        lw["out_w"], lw["out_b"] = _init_linear(k[1], d_model, d_model)
        lw["ff1_w"], lw["ff1_b"] = _init_linear(k[2], d_model, dff)
        lw["ff2_w"], lw["ff2_b"] = _init_linear(k[3], dff, d_model)
        lw["ln1_g"] = jnp.ones((d_model,), jnp.float32)
        lw["ln1_b"] = jnp.zeros((d_model,), jnp.float32)
        lw["ln2_g"] = jnp.ones((d_model,), jnp.float32)
        lw["ln2_b"] = jnp.zeros((d_model,), jnp.float32)
        layers.append(lw)
    p["layers"] = layers
    p["last_w1"], p["last_b1"] = _init_linear(keys[3 + nlayers], d_model, mlp_hidden)
    p["last_ln_g"] = jnp.ones((mlp_hidden,), jnp.float32)
    p["last_ln_b"] = jnp.zeros((mlp_hidden,), jnp.float32)
    p["last_w2"], p["last_b2"] = _init_linear(keys[4 + nlayers], mlp_hidden, target_dim)
    return p


# ----------------------------------------------------------------------------
# Denoiser_bev forward: tiny XLA prologue + ONE fused pallas_call
# ----------------------------------------------------------------------------
def denoiser_bev_forward(params, x, t, z, *, nhead, n_harm, time_dim):
    B, N, target_dim = x.shape
    d_model = params["first_w"].shape[1]
    pose_out = target_dim * (2 * n_harm + 1)
    time_out = params["time_w2"].shape[1]
    nlayers = len(params["layers"])

    # --- prologue: one-time tiny elementwise embedding features ---
    t_sin = timestep_sinusoid(t, time_dim)                               # (B, time_dim)
    x_emb = harmonic_embedding(x, n_harm)                                # (B, N, pose_out)
    cam_pivot = jnp.zeros((B, N, 1), jnp.float32).at[:, 0, :].set(1.0)
    feed_xz = jnp.concatenate([x_emb, z, cam_pivot], axis=-1).reshape(B * N, -1)

    # row -> batch one-hot map so the kernel can broadcast the time embedding
    bcast = (jnp.arange(B * N) // N)[:, None] == jnp.arange(B)[None, :]
    bcast = bcast.astype(jnp.float32)                                    # (B*N, B)

    # split _first weight: feed order in the reference is [x_emb, t_emb, z, cam]
    w_pose = params["first_w"][:pose_out]
    w_time = params["first_w"][pose_out:pose_out + time_out]
    w_z = params["first_w"][pose_out + time_out:]
    w_xz = jnp.concatenate([w_pose, w_z], axis=0)                        # (pose+z+1, d_model)

    def r2(v):  # 1D vectors -> (1, K) rows for clean VMEM layouts
        return v.reshape(1, -1)

    args = [feed_xz, bcast, t_sin,
            params["time_w1"], r2(params["time_b1"]),
            params["time_w2"], r2(params["time_b2"]),
            w_xz, w_time, r2(params["first_b"])]
    for lw in params["layers"]:
        args += [lw["in_w"], r2(lw["in_b"]), lw["out_w"], r2(lw["out_b"]),
                 lw["ff1_w"], r2(lw["ff1_b"]), lw["ff2_w"], r2(lw["ff2_b"]),
                 r2(lw["ln1_g"]), r2(lw["ln1_b"]), r2(lw["ln2_g"]), r2(lw["ln2_b"])]
    args += [params["last_w1"], r2(params["last_b1"]),
             r2(params["last_ln_g"]), r2(params["last_ln_b"]),
             params["last_w2"], r2(params["last_b2"])]

    kernel = functools.partial(_fused_denoiser_kernel, B=B, N=N, nhead=nhead,
                               d_model=d_model, nlayers=nlayers)
    out = pl.pallas_call(
        kernel,
        out_shape=jax.ShapeDtypeStruct((B * N, target_dim), jnp.float32),
        scratch_shapes=[pltpu.VMEM((B * N, 3 * d_model), jnp.float32),
                        pltpu.VMEM((B * N, d_model), jnp.float32)],
    )(*args)
    return out.reshape(B, N, target_dim)


# ----------------------------------------------------------------------------
# Pure-JAX reference (for a loose numerical sanity check)
# ----------------------------------------------------------------------------
def reference_forward(params, x, t, z, *, nhead, n_harm, time_dim):
    B, N, target_dim = x.shape
    d_model = params["first_w"].shape[1]
    dh = d_model // nhead
    t_sin = timestep_sinusoid(t, time_dim)
    h_t = t_sin @ params["time_w1"] + params["time_b1"]
    h_t = h_t * jax.nn.sigmoid(h_t)
    t_emb = h_t @ params["time_w2"] + params["time_b2"]
    t_emb = jnp.broadcast_to(t_emb[:, None, :], (B, N, t_emb.shape[-1]))
    x_emb = harmonic_embedding(x, n_harm)
    cam = jnp.zeros((B, N, 1), jnp.float32).at[:, 0, :].set(1.0)
    feed = jnp.concatenate([x_emb, t_emb, z, cam], axis=-1)
    h = feed.reshape(B * N, -1) @ params["first_w"] + params["first_b"]
    for lw in params["layers"]:
        qkv = (h @ lw["in_w"] + lw["in_b"]).reshape(B, N, 3, nhead, dh)
        q = qkv[:, :, 0].transpose(0, 2, 1, 3)
        k = qkv[:, :, 1].transpose(0, 2, 1, 3)
        v = qkv[:, :, 2].transpose(0, 2, 1, 3)
        s = jnp.einsum("bhqd,bhkd->bhqk", q, k) / math.sqrt(dh)
        p = jax.nn.softmax(s, axis=-1)
        a = jnp.einsum("bhqk,bhkd->bhqd", p, v).transpose(0, 2, 1, 3).reshape(B * N, d_model)
        a = a @ lw["out_w"] + lw["out_b"]
        h = _layernorm(h + a, lw["ln1_g"], lw["ln1_b"])
        ff = jnp.maximum(h @ lw["ff1_w"] + lw["ff1_b"], 0.0)
        ff = ff @ lw["ff2_w"] + lw["ff2_b"]
        h = _layernorm(h + ff, lw["ln2_g"], lw["ln2_b"])
    y = h @ params["last_w1"] + params["last_b1"]
    y = jnp.maximum(_layernorm(y, params["last_ln_g"], params["last_ln_b"]), 0.0)
    y = y @ params["last_w2"] + params["last_b2"]
    return y.reshape(B, N, target_dim)


# ----------------------------------------------------------------------------
if __name__ == "__main__":
    # Small shapes consistent with the module: B batches, N cameras.
    B, N = 2, 8
    target_dim, z_dim = 3, 32
    time_dim, n_harm = 32, 4
    d_model, nhead, nlayers, dff, mlp_hidden = 64, 4, 2, 128, 32

    key = jax.random.PRNGKey(0)
    kp, kx, kt, kz = jax.random.split(key, 4)
    params = init_params(kp, target_dim=target_dim, z_dim=z_dim, time_dim=time_dim,
                         n_harm=n_harm, d_model=d_model, nlayers=nlayers,
                         dff=dff, mlp_hidden=mlp_hidden)

    x = jax.random.normal(kx, (B, N, target_dim), jnp.float32)
    t = jax.random.randint(kt, (B,), 0, 100).astype(jnp.float32)
    z = jax.random.normal(kz, (B, N, z_dim), jnp.float32)

    fwd = jax.jit(functools.partial(denoiser_bev_forward,
                                    nhead=nhead, n_harm=n_harm, time_dim=time_dim))
    out = jax.block_until_ready(fwd(params, x, t, z))
    assert out.shape == (B, N, target_dim) and out.dtype == jnp.float32

    ref = reference_forward(params, x, t, z, nhead=nhead, n_harm=n_harm, time_dim=time_dim)
    assert bool(jnp.allclose(out, ref, atol=5e-2, rtol=5e-2))
    print("KERNEL_OK")
</pallas_src>

<mosaic_0001>
module attributes {stable_mosaic.version = 11 : i64} {
  func.func @_fused_denoiser_kernel(%arg0: memref<16x60xf32, #tpu.memory_space<vmem>>, %arg1: memref<16x2xf32, #tpu.memory_space<vmem>>, %arg2: memref<2x32xf32, #tpu.memory_space<vmem>>, %arg3: memref<32x16xf32, #tpu.memory_space<vmem>>, %arg4: memref<1x16xf32, #tpu.memory_space<vmem>>, %arg5: memref<16x16xf32, #tpu.memory_space<vmem>>, %arg6: memref<1x16xf32, #tpu.memory_space<vmem>>, %arg7: memref<60x64xf32, #tpu.memory_space<vmem>>, %arg8: memref<16x64xf32, #tpu.memory_space<vmem>>, %arg9: memref<1x64xf32, #tpu.memory_space<vmem>>, %arg10: memref<64x192xf32, #tpu.memory_space<vmem>>, %arg11: memref<1x192xf32, #tpu.memory_space<vmem>>, %arg12: memref<64x64xf32, #tpu.memory_space<vmem>>, %arg13: memref<1x64xf32, #tpu.memory_space<vmem>>, %arg14: memref<64x128xf32, #tpu.memory_space<vmem>>, %arg15: memref<1x128xf32, #tpu.memory_space<vmem>>, %arg16: memref<128x64xf32, #tpu.memory_space<vmem>>, %arg17: memref<1x64xf32, #tpu.memory_space<vmem>>, %arg18: memref<1x64xf32, #tpu.memory_space<vmem>>, %arg19: memref<1x64xf32, #tpu.memory_space<vmem>>, %arg20: memref<1x64xf32, #tpu.memory_space<vmem>>, %arg21: memref<1x64xf32, #tpu.memory_space<vmem>>, %arg22: memref<64x192xf32, #tpu.memory_space<vmem>>, %arg23: memref<1x192xf32, #tpu.memory_space<vmem>>, %arg24: memref<64x64xf32, #tpu.memory_space<vmem>>, %arg25: memref<1x64xf32, #tpu.memory_space<vmem>>, %arg26: memref<64x128xf32, #tpu.memory_space<vmem>>, %arg27: memref<1x128xf32, #tpu.memory_space<vmem>>, %arg28: memref<128x64xf32, #tpu.memory_space<vmem>>, %arg29: memref<1x64xf32, #tpu.memory_space<vmem>>, %arg30: memref<1x64xf32, #tpu.memory_space<vmem>>, %arg31: memref<1x64xf32, #tpu.memory_space<vmem>>, %arg32: memref<1x64xf32, #tpu.memory_space<vmem>>, %arg33: memref<1x64xf32, #tpu.memory_space<vmem>>, %arg34: memref<64x32xf32, #tpu.memory_space<vmem>>, %arg35: memref<1x32xf32, #tpu.memory_space<vmem>>, %arg36: memref<1x32xf32, #tpu.memory_space<vmem>>, %arg37: memref<1x32xf32, #tpu.memory_space<vmem>>, %arg38: memref<32x3xf32, #tpu.memory_space<vmem>>, %arg39: memref<1x3xf32, #tpu.memory_space<vmem>>, %arg40: memref<16x3xf32, #tpu.memory_space<vmem>>, %arg41: memref<16x192xf32, #tpu.memory_space<vmem>>, %arg42: memref<16x64xf32, #tpu.memory_space<vmem>>) attributes {dimension_semantics = [], scalar_prefetch = 0 : i64, scratch_operands = 2 : i64, tpu.core_type = #tpu.core_type<tc>} {
    %c0 = arith.constant 0 : index
    %c0_0 = arith.constant 0 : index
    %0 = vector.load %arg0[%c0, %c0_0] : memref<16x60xf32, #tpu.memory_space<vmem>>, vector<16x60xf32>
    %c0_1 = arith.constant 0 : index
    %c0_2 = arith.constant 0 : index
    %1 = vector.load %arg1[%c0_1, %c0_2] : memref<16x2xf32, #tpu.memory_space<vmem>>, vector<16x2xf32>
    %c0_3 = arith.constant 0 : index
    %c0_4 = arith.constant 0 : index
    %2 = vector.load %arg2[%c0_3, %c0_4] : memref<2x32xf32, #tpu.memory_space<vmem>>, vector<2x32xf32>
    %c0_5 = arith.constant 0 : index
    %c0_6 = arith.constant 0 : index
    %3 = vector.load %arg3[%c0_5, %c0_6] : memref<32x16xf32, #tpu.memory_space<vmem>>, vector<32x16xf32>
    %c0_7 = arith.constant 0 : index
    %c0_8 = arith.constant 0 : index
    %4 = vector.load %arg4[%c0_7, %c0_8] : memref<1x16xf32, #tpu.memory_space<vmem>>, vector<1x16xf32>
    %c0_9 = arith.constant 0 : index
    %c0_10 = arith.constant 0 : index
    %5 = vector.load %arg5[%c0_9, %c0_10] : memref<16x16xf32, #tpu.memory_space<vmem>>, vector<16x16xf32>
    %c0_11 = arith.constant 0 : index
    %c0_12 = arith.constant 0 : index
    %6 = vector.load %arg6[%c0_11, %c0_12] : memref<1x16xf32, #tpu.memory_space<vmem>>, vector<1x16xf32>
    %c0_13 = arith.constant 0 : index
    %c0_14 = arith.constant 0 : index
    %7 = vector.load %arg7[%c0_13, %c0_14] : memref<60x64xf32, #tpu.memory_space<vmem>>, vector<60x64xf32>
    %c0_15 = arith.constant 0 : index
    %c0_16 = arith.constant 0 : index
    %8 = vector.load %arg8[%c0_15, %c0_16] : memref<16x64xf32, #tpu.memory_space<vmem>>, vector<16x64xf32>
    %c0_17 = arith.constant 0 : index
    %c0_18 = arith.constant 0 : index
    %9 = vector.load %arg9[%c0_17, %c0_18] : memref<1x64xf32, #tpu.memory_space<vmem>>, vector<1x64xf32>
    %cst = arith.constant dense<0.000000e+00> : vector<2x16xf32>
    %10 = tpu.matmul %2, %3, %cst {dimension_numbers = #tpu.dot_dimension_numbers<[1], [0], [0], [1], [0, 0, 1, 1], [], []>} : vector<2x32xf32>, vector<32x16xf32>, vector<2x16xf32> -> vector<2x16xf32>
    %11 = vector.broadcast %4 : vector<1x16xf32> to vector<2x16xf32>
    %12 = arith.addf %10, %11 : vector<2x16xf32>
    %cst_19 = arith.constant 0.000000e+00 : f32
    %13 = vector.broadcast %cst_19 : f32 to vector<2x16xf32>
    %14 = arith.subf %13, %12 : vector<2x16xf32>
    %15 = math.exp %14 : vector<2x16xf32>
    %cst_20 = arith.constant 1.000000e+00 : f32
    %16 = vector.broadcast %cst_20 : f32 to vector<2x16xf32>
    %17 = arith.addf %16, %15 : vector<2x16xf32>
    %18 = tpu.reciprocal %17 {approx = true} : vector<2x16xf32> -> vector<2x16xf32>
    %19 = arith.mulf %12, %18 : vector<2x16xf32>
    %cst_21 = arith.constant dense<0.000000e+00> : vector<2x16xf32>
    %20 = tpu.matmul %19, %5, %cst_21 {dimension_numbers = #tpu.dot_dimension_numbers<[1], [0], [0], [1], [0, 0, 1, 1], [], []>} : vector<2x16xf32>, vector<16x16xf32>, vector<2x16xf32> -> vector<2x16xf32>
    %21 = vector.broadcast %6 : vector<1x16xf32> to vector<2x16xf32>
    %22 = arith.addf %20, %21 : vector<2x16xf32>
    %cst_22 = arith.constant dense<0.000000e+00> : vector<2x64xf32>
    %23 = tpu.matmul %22, %8, %cst_22 {dimension_numbers = #tpu.dot_dimension_numbers<[1], [0], [0], [1], [0, 0, 1, 1], [], []>} : vector<2x16xf32>, vector<16x64xf32>, vector<2x64xf32> -> vector<2x64xf32>
    %cst_23 = arith.constant dense<0.000000e+00> : vector<16x64xf32>
    %24 = tpu.matmul %1, %23, %cst_23 {dimension_numbers = #tpu.dot_dimension_numbers<[1], [0], [0], [1], [0, 0, 1, 1], [], []>} : vector<16x2xf32>, vector<2x64xf32>, vector<16x64xf32> -> vector<16x64xf32>
    %cst_24 = arith.constant dense<0.000000e+00> : vector<16x64xf32>
    %25 = tpu.matmul %0, %7, %cst_24 {dimension_numbers = #tpu.dot_dimension_numbers<[1], [0], [0], [1], [0, 0, 1, 1], [], []>} : vector<16x60xf32>, vector<60x64xf32>, vector<16x64xf32> -> vector<16x64xf32>
    %26 = arith.addf %25, %24 : vector<16x64xf32>
    %27 = vector.broadcast %9 : vector<1x64xf32> to vector<16x64xf32>
    %28 = arith.addf %26, %27 : vector<16x64xf32>
    %c0_25 = arith.constant 0 : index
    %c0_26 = arith.constant 0 : index
    %29 = vector.load %arg10[%c0_25, %c0_26] : memref<64x192xf32, #tpu.memory_space<vmem>>, vector<64x192xf32>
    %c0_27 = arith.constant 0 : index
    %c0_28 = arith.constant 0 : index
    %30 = vector.load %arg11[%c0_27, %c0_28] : memref<1x192xf32, #tpu.memory_space<vmem>>, vector<1x192xf32>
    %c0_29 = arith.constant 0 : index
    %c0_30 = arith.constant 0 : index
    %31 = vector.load %arg12[%c0_29, %c0_30] : memref<64x64xf32, #tpu.memory_space<vmem>>, vector<64x64xf32>
    %c0_31 = arith.constant 0 : index
    %c0_32 = arith.constant 0 : index
    %32 = vector.load %arg13[%c0_31, %c0_32] : memref<1x64xf32, #tpu.memory_space<vmem>>, vector<1x64xf32>
    %c0_33 = arith.constant 0 : index
    %c0_34 = arith.constant 0 : index
    %33 = vector.load %arg14[%c0_33, %c0_34] : memref<64x128xf32, #tpu.memory_space<vmem>>, vector<64x128xf32>
    %c0_35 = arith.constant 0 : index
    %c0_36 = arith.constant 0 : index
    %34 = vector.load %arg15[%c0_35, %c0_36] : memref<1x128xf32, #tpu.memory_space<vmem>>, vector<1x128xf32>
    %c0_37 = arith.constant 0 : index
    %c0_38 = arith.constant 0 : index
    %35 = vector.load %arg16[%c0_37, %c0_38] : memref<128x64xf32, #tpu.memory_space<vmem>>, vector<128x64xf32>
    %c0_39 = arith.constant 0 : index
    %c0_40 = arith.constant 0 : index
    %36 = vector.load %arg17[%c0_39, %c0_40] : memref<1x64xf32, #tpu.memory_space<vmem>>, vector<1x64xf32>
    %c0_41 = arith.constant 0 : index
    %c0_42 = arith.constant 0 : index
    %37 = vector.load %arg18[%c0_41, %c0_42] : memref<1x64xf32, #tpu.memory_space<vmem>>, vector<1x64xf32>
    %c0_43 = arith.constant 0 : index
    %c0_44 = arith.constant 0 : index
    %38 = vector.load %arg19[%c0_43, %c0_44] : memref<1x64xf32, #tpu.memory_space<vmem>>, vector<1x64xf32>
    %c0_45 = arith.constant 0 : index
    %c0_46 = arith.constant 0 : index
    %39 = vector.load %arg20[%c0_45, %c0_46] : memref<1x64xf32, #tpu.memory_space<vmem>>, vector<1x64xf32>
    %c0_47 = arith.constant 0 : index
    %c0_48 = arith.constant 0 : index
    %40 = vector.load %arg21[%c0_47, %c0_48] : memref<1x64xf32, #tpu.memory_space<vmem>>, vector<1x64xf32>
    %cst_49 = arith.constant dense<0.000000e+00> : vector<16x192xf32>
    %41 = tpu.matmul %28, %29, %cst_49 {dimension_numbers = #tpu.dot_dimension_numbers<[1], [0], [0], [1], [0, 0, 1, 1], [], []>} : vector<16x64xf32>, vector<64x192xf32>, vector<16x192xf32> -> vector<16x192xf32>
    %42 = vector.broadcast %30 : vector<1x192xf32> to vector<16x192xf32>
    %43 = arith.addf %41, %42 : vector<16x192xf32>
    %c0_50 = arith.constant 0 : index
    %c0_51 = arith.constant 0 : index
    %44 = vector.load %arg41[%c0_50, %c0_51] : memref<16x192xf32, #tpu.memory_space<vmem>>, vector<16x192xf32>
    tpu.vector_store %arg41[%c0_50, %c0_51], %43 {strides = array<i32>} : memref<16x192xf32, #tpu.memory_space<vmem>>, vector<16x192xf32>,
    %c0_52 = arith.constant 0 : index
    %c0_53 = arith.constant 0 : index
    %45 = vector.load %arg41[%c0_52, %c0_53] : memref<16x192xf32, #tpu.memory_space<vmem>>, vector<8x16xf32>
    %c0_54 = arith.constant 0 : index
    %c64 = arith.constant 64 : index
    %46 = vector.load %arg41[%c0_54, %c64] : memref<16x192xf32, #tpu.memory_space<vmem>>, vector<8x16xf32>
    %c0_55 = arith.constant 0 : index
    %c128 = arith.constant 128 : index
    %47 = vector.load %arg41[%c0_55, %c128] : memref<16x192xf32, #tpu.memory_space<vmem>>, vector<8x16xf32>
    %cst_56 = arith.constant dense<0.000000e+00> : vector<8x8xf32>
    %48 = tpu.matmul %45, %46, %cst_56 {dimension_numbers = #tpu.dot_dimension_numbers<[1], [1], [0], [0], [0, 0, 1, 0], [], []>} : vector<8x16xf32>, vector<8x16xf32>, vector<8x8xf32> -> vector<8x8xf32>
    %cst_57 = arith.constant 2.500000e-01 : f32
    %49 = vector.broadcast %cst_57 : f32 to vector<8x8xf32>
    %50 = arith.mulf %48, %49 : vector<8x8xf32>
    %cst_58 = arith.constant dense<0xFF800000> : vector<8xf32>
    %51 = vector.multi_reduction <maximumf>, %50, %cst_58 [1] : vector<8x8xf32> to vector<8xf32>
    %52 = vector.shape_cast %51 : vector<8xf32> to vector<8x1xf32>
    %53 = vector.broadcast %52 : vector<8x1xf32> to vector<8x8xf32>
    %54 = arith.subf %50, %53 : vector<8x8xf32>
    %55 = math.exp %54 : vector<8x8xf32>
    %cst_59 = arith.constant dense<0.000000e+00> : vector<8xf32>
    %56 = vector.multi_reduction <add>, %55, %cst_59 [1] : vector<8x8xf32> to vector<8xf32>
    %57 = vector.shape_cast %56 : vector<8xf32> to vector<8x1xf32>
    %58 = tpu.reciprocal %57 {approx = true} : vector<8x1xf32> -> vector<8x1xf32>
    %59 = vector.broadcast %58 : vector<8x1xf32> to vector<8x8xf32>
    %60 = arith.mulf %55, %59 : vector<8x8xf32>
    %cst_60 = arith.constant dense<0.000000e+00> : vector<8x16xf32>
    %61 = tpu.matmul %60, %47, %cst_60 {dimension_numbers = #tpu.dot_dimension_numbers<[1], [0], [0], [1], [0, 0, 1, 1], [], []>} : vector<8x8xf32>, vector<8x16xf32>, vector<8x16xf32> -> vector<8x16xf32>
    %c0_61 = arith.constant 0 : index
    %c0_62 = arith.constant 0 : index
    %62 = vector.load %arg42[%c0_61, %c0_62] : memref<16x64xf32, #tpu.memory_space<vmem>>, vector<8x16xf32>
    tpu.vector_store %arg42[%c0_61, %c0_62], %61 {strides = array<i32>} : memref<16x64xf32, #tpu.memory_space<vmem>>, vector<8x16xf32>,
    %c0_63 = arith.constant 0 : index
    %c16 = arith.constant 16 : index
    %63 = vector.load %arg41[%c0_63, %c16] : memref<16x192xf32, #tpu.memory_space<vmem>>, vector<8x16xf32>
    %c0_64 = arith.constant 0 : index
    %c80 = arith.constant 80 : index
    %64 = vector.load %arg41[%c0_64, %c80] : memref<16x192xf32, #tpu.memory_space<vmem>>, vector<8x16xf32>
    %c0_65 = arith.constant 0 : index
    %c144 = arith.constant 144 : index
    %65 = vector.load %arg41[%c0_65, %c144] : memref<16x192xf32, #tpu.memory_space<vmem>>, vector<8x16xf32>
    %cst_66 = arith.constant dense<0.000000e+00> : vector<8x8xf32>
    %66 = tpu.matmul %63, %64, %cst_66 {dimension_numbers = #tpu.dot_dimension_numbers<[1], [1], [0], [0], [0, 0, 1, 0], [], []>} : vector<8x16xf32>, vector<8x16xf32>, vector<8x8xf32> -> vector<8x8xf32>
    %cst_67 = arith.constant 2.500000e-01 : f32
    %67 = vector.broadcast %cst_67 : f32 to vector<8x8xf32>
    %68 = arith.mulf %66, %67 : vector<8x8xf32>
    %cst_68 = arith.constant dense<0xFF800000> : vector<8xf32>
    %69 = vector.multi_reduction <maximumf>, %68, %cst_68 [1] : vector<8x8xf32> to vector<8xf32>
    %70 = vector.shape_cast %69 : vector<8xf32> to vector<8x1xf32>
    %71 = vector.broadcast %70 : vector<8x1xf32> to vector<8x8xf32>
    %72 = arith.subf %68, %71 : vector<8x8xf32>
    %73 = math.exp %72 : vector<8x8xf32>
    %cst_69 = arith.constant dense<0.000000e+00> : vector<8xf32>
    %74 = vector.multi_reduction <add>, %73, %cst_69 [1] : vector<8x8xf32> to vector<8xf32>
    %75 = vector.shape_cast %74 : vector<8xf32> to vector<8x1xf32>
    %76 = tpu.reciprocal %75 {approx = true} : vector<8x1xf32> -> vector<8x1xf32>
    %77 = vector.broadcast %76 : vector<8x1xf32> to vector<8x8xf32>
    %78 = arith.mulf %73, %77 : vector<8x8xf32>
    %cst_70 = arith.constant dense<0.000000e+00> : vector<8x16xf32>
    %79 = tpu.matmul %78, %65, %cst_70 {dimension_numbers = #tpu.dot_dimension_numbers<[1], [0], [0], [1], [0, 0, 1, 1], [], []>} : vector<8x8xf32>, vector<8x16xf32>, vector<8x16xf32> -> vector<8x16xf32>
    %c0_71 = arith.constant 0 : index
    %c16_72 = arith.constant 16 : index
    %80 = vector.load %arg42[%c0_71, %c16_72] : memref<16x64xf32, #tpu.memory_space<vmem>>, vector<8x16xf32>
    tpu.vector_store %arg42[%c0_71, %c16_72], %79 {strides = array<i32>} : memref<16x64xf32, #tpu.memory_space<vmem>>, vector<8x16xf32>,
    %c0_73 = arith.constant 0 : index
    %c32 = arith.constant 32 : index
    %81 = vector.load %arg41[%c0_73, %c32] : memref<16x192xf32, #tpu.memory_space<vmem>>, vector<8x16xf32>
    %c0_74 = arith.constant 0 : index
    %c96 = arith.constant 96 : index
    %82 = vector.load %arg41[%c0_74, %c96] : memref<16x192xf32, #tpu.memory_space<vmem>>, vector<8x16xf32>
    %c0_75 = arith.constant 0 : index
    %c160 = arith.constant 160 : index
    %83 = vector.load %arg41[%c0_75, %c160] : memref<16x192xf32, #tpu.memory_space<vmem>>, vector<8x16xf32>
    %cst_76 = arith.constant dense<0.000000e+00> : vector<8x8xf32>
    %84 = tpu.matmul %81, %82, %cst_76 {dimension_numbers = #tpu.dot_dimension_numbers<[1], [1], [0], [0], [0, 0, 1, 0], [], []>} : vector<8x16xf32>, vector<8x16xf32>, vector<8x8xf32> -> vector<8x8xf32>
    %cst_77 = arith.constant 2.500000e-01 : f32
    %85 = vector.broadcast %cst_77 : f32 to vector<8x8xf32>
    %86 = arith.mulf %84, %85 : vector<8x8xf32>
    %cst_78 = arith.constant dense<0xFF800000> : vector<8xf32>
    %87 = vector.multi_reduction <maximumf>, %86, %cst_78 [1] : vector<8x8xf32> to vector<8xf32>
    %88 = vector.shape_cast %87 : vector<8xf32> to vector<8x1xf32>
    %89 = vector.broadcast %88 : vector<8x1xf32> to vector<8x8xf32>
    %90 = arith.subf %86, %89 : vector<8x8xf32>
    %91 = math.exp %90 : vector<8x8xf32>
    %cst_79 = arith.constant dense<0.000000e+00> : vector<8xf32>
    %92 = vector.multi_reduction <add>, %91, %cst_79 [1] : vector<8x8xf32> to vector<8xf32>
    %93 = vector.shape_cast %92 : vector<8xf32> to vector<8x1xf32>
    %94 = tpu.reciprocal %93 {approx = true} : vector<8x1xf32> -> vector<8x1xf32>
    %95 = vector.broadcast %94 : vector<8x1xf32> to vector<8x8xf32>
    %96 = arith.mulf %91, %95 : vector<8x8xf32>
    %cst_80 = arith.constant dense<0.000000e+00> : vector<8x16xf32>
    %97 = tpu.matmul %96, %83, %cst_80 {dimension_numbers = #tpu.dot_dimension_numbers<[1], [0], [0], [1], [0, 0, 1, 1], [], []>} : vector<8x8xf32>, vector<8x16xf32>, vector<8x16xf32> -> vector<8x16xf32>
    %c0_81 = arith.constant 0 : index
    %c32_82 = arith.constant 32 : index
    %98 = vector.load %arg42[%c0_81, %c32_82] : memref<16x64xf32, #tpu.memory_space<vmem>>, vector<8x16xf32>
    tpu.vector_store %arg42[%c0_81, %c32_82], %97 {strides = array<i32>} : memref<16x64xf32, #tpu.memory_space<vmem>>, vector<8x16xf32>,
    %c0_83 = arith.constant 0 : index
    %c48 = arith.constant 48 : index
    %99 = vector.load %arg41[%c0_83, %c48] : memref<16x192xf32, #tpu.memory_space<vmem>>, vector<8x16xf32>
    %c0_84 = arith.constant 0 : index
    %c112 = arith.constant 112 : index
    %100 = vector.load %arg41[%c0_84, %c112] : memref<16x192xf32, #tpu.memory_space<vmem>>, vector<8x16xf32>
    %c0_85 = arith.constant 0 : index
    %c176 = arith.constant 176 : index
    %101 = vector.load %arg41[%c0_85, %c176] : memref<16x192xf32, #tpu.memory_space<vmem>>, vector<8x16xf32>
    %cst_86 = arith.constant dense<0.000000e+00> : vector<8x8xf32>
    %102 = tpu.matmul %99, %100, %cst_86 {dimension_numbers = #tpu.dot_dimension_numbers<[1], [1], [0], [0], [0, 0, 1, 0], [], []>} : vector<8x16xf32>, vector<8x16xf32>, vector<8x8xf32> -> vector<8x8xf32>
    %cst_87 = arith.constant 2.500000e-01 : f32
    %103 = vector.broadcast %cst_87 : f32 to vector<8x8xf32>
    %104 = arith.mulf %102, %103 : vector<8x8xf32>
    %cst_88 = arith.constant dense<0xFF800000> : vector<8xf32>
    %105 = vector.multi_reduction <maximumf>, %104, %cst_88 [1] : vector<8x8xf32> to vector<8xf32>
    %106 = vector.shape_cast %105 : vector<8xf32> to vector<8x1xf32>
    %107 = vector.broadcast %106 : vector<8x1xf32> to vector<8x8xf32>
    %108 = arith.subf %104, %107 : vector<8x8xf32>
    %109 = math.exp %108 : vector<8x8xf32>
    %cst_89 = arith.constant dense<0.000000e+00> : vector<8xf32>
    %110 = vector.multi_reduction <add>, %109, %cst_89 [1] : vector<8x8xf32> to vector<8xf32>
    %111 = vector.shape_cast %110 : vector<8xf32> to vector<8x1xf32>
    %112 = tpu.reciprocal %111 {approx = true} : vector<8x1xf32> -> vector<8x1xf32>
    %113 = vector.broadcast %112 : vector<8x1xf32> to vector<8x8xf32>
    %114 = arith.mulf %109, %113 : vector<8x8xf32>
    %cst_90 = arith.constant dense<0.000000e+00> : vector<8x16xf32>
    %115 = tpu.matmul %114, %101, %cst_90 {dimension_numbers = #tpu.dot_dimension_numbers<[1], [0], [0], [1], [0, 0, 1, 1], [], []>} : vector<8x8xf32>, vector<8x16xf32>, vector<8x16xf32> -> vector<8x16xf32>
    %c0_91 = arith.constant 0 : index
    %c48_92 = arith.constant 48 : index
    %116 = vector.load %arg42[%c0_91, %c48_92] : memref<16x64xf32, #tpu.memory_space<vmem>>, vector<8x16xf32>
    tpu.vector_store %arg42[%c0_91, %c48_92], %115 {strides = array<i32>} : memref<16x64xf32, #tpu.memory_space<vmem>>, vector<8x16xf32>,
    %c8 = arith.constant 8 : index
    %c0_93 = arith.constant 0 : index
    %117 = vector.load %arg41[%c8, %c0_93] : memref<16x192xf32, #tpu.memory_space<vmem>>, vector<8x16xf32>
    %c8_94 = arith.constant 8 : index
    %c64_95 = arith.constant 64 : index
    %118 = vector.load %arg41[%c8_94, %c64_95] : memref<16x192xf32, #tpu.memory_space<vmem>>, vector<8x16xf32>
    %c8_96 = arith.constant 8 : index
    %c128_97 = arith.constant 128 : index
    %119 = vector.load %arg41[%c8_96, %c128_97] : memref<16x192xf32, #tpu.memory_space<vmem>>, vector<8x16xf32>
    %cst_98 = arith.constant dense<0.000000e+00> : vector<8x8xf32>
    %120 = tpu.matmul %117, %118, %cst_98 {dimension_numbers = #tpu.dot_dimension_numbers<[1], [1], [0], [0], [0, 0, 1, 0], [], []>} : vector<8x16xf32>, vector<8x16xf32>, vector<8x8xf32> -> vector<8x8xf32>
    %cst_99 = arith.constant 2.500000e-01 : f32
    %121 = vector.broadcast %cst_99 : f32 to vector<8x8xf32>
    %122 = arith.mulf %120, %121 : vector<8x8xf32>
    %cst_100 = arith.constant dense<0xFF800000> : vector<8xf32>
    %123 = vector.multi_reduction <maximumf>, %122, %cst_100 [1] : vector<8x8xf32> to vector<8xf32>
    %124 = vector.shape_cast %123 : vector<8xf32> to vector<8x1xf32>
    %125 = vector.broadcast %124 : vector<8x1xf32> to vector<8x8xf32>
    %126 = arith.subf %122, %125 : vector<8x8xf32>
    %127 = math.exp %126 : vector<8x8xf32>
    %cst_101 = arith.constant dense<0.000000e+00> : vector<8xf32>
    %128 = vector.multi_reduction <add>, %127, %cst_101 [1] : vector<8x8xf32> to vector<8xf32>
    %129 = vector.shape_cast %128 : vector<8xf32> to vector<8x1xf32>
    %130 = tpu.reciprocal %129 {approx = true} : vector<8x1xf32> -> vector<8x1xf32>
    %131 = vector.broadcast %130 : vector<8x1xf32> to vector<8x8xf32>
    %132 = arith.mulf %127, %131 : vector<8x8xf32>
    %cst_102 = arith.constant dense<0.000000e+00> : vector<8x16xf32>
    %133 = tpu.matmul %132, %119, %cst_102 {dimension_numbers = #tpu.dot_dimension_numbers<[1], [0], [0], [1], [0, 0, 1, 1], [], []>} : vector<8x8xf32>, vector<8x16xf32>, vector<8x16xf32> -> vector<8x16xf32>
    %c8_103 = arith.constant 8 : index
    %c0_104 = arith.constant 0 : index
    %134 = vector.load %arg42[%c8_103, %c0_104] : memref<16x64xf32, #tpu.memory_space<vmem>>, vector<8x16xf32>
    tpu.vector_store %arg42[%c8_103, %c0_104], %133 {strides = array<i32>} : memref<16x64xf32, #tpu.memory_space<vmem>>, vector<8x16xf32>,
    %c8_105 = arith.constant 8 : index
    %c16_106 = arith.constant 16 : index
    %135 = vector.load %arg41[%c8_105, %c16_106] : memref<16x192xf32, #tpu.memory_space<vmem>>, vector<8x16xf32>
    %c8_107 = arith.constant 8 : index
    %c80_108 = arith.constant 80 : index
    %136 = vector.load %arg41[%c8_107, %c80_108] : memref<16x192xf32, #tpu.memory_space<vmem>>, vector<8x16xf32>
    %c8_109 = arith.constant 8 : index
    %c144_110 = arith.constant 144 : index
    %137 = vector.load %arg41[%c8_109, %c144_110] : memref<16x192xf32, #tpu.memory_space<vmem>>, vector<8x16xf32>
    %cst_111 = arith.constant dense<0.000000e+00> : vector<8x8xf32>
    %138 = tpu.matmul %135, %136, %cst_111 {dimension_numbers = #tpu.dot_dimension_numbers<[1], [1], [0], [0], [0, 0, 1, 0], [], []>} : vector<8x16xf32>, vector<8x16xf32>, vector<8x8xf32> -> vector<8x8xf32>
    %cst_112 = arith.constant 2.500000e-01 : f32
    %139 = vector.broadcast %cst_112 : f32 to vector<8x8xf32>
    %140 = arith.mulf %138, %139 : vector<8x8xf32>
    %cst_113 = arith.constant dense<0xFF800000> : vector<8xf32>
    %141 = vector.multi_reduction <maximumf>, %140, %cst_113 [1] : vector<8x8xf32> to vector<8xf32>
    %142 = vector.shape_cast %141 : vector<8xf32> to vector<8x1xf32>
    %143 = vector.broadcast %142 : vector<8x1xf32> to vector<8x8xf32>
    %144 = arith.subf %140, %143 : vector<8x8xf32>
    %145 = math.exp %144 : vector<8x8xf32>
    %cst_114 = arith.constant dense<0.000000e+00> : vector<8xf32>
    %146 = vector.multi_reduction <add>, %145, %cst_114 [1] : vector<8x8xf32> to vector<8xf32>
    %147 = vector.shape_cast %146 : vector<8xf32> to vector<8x1xf32>
    %148 = tpu.reciprocal %147 {approx = true} : vector<8x1xf32> -> vector<8x1xf32>
    %149 = vector.broadcast %148 : vector<8x1xf32> to vector<8x8xf32>
    %150 = arith.mulf %145, %149 : vector<8x8xf32>
    %cst_115 = arith.constant dense<0.000000e+00> : vector<8x16xf32>
    %151 = tpu.matmul %150, %137, %cst_115 {dimension_numbers = #tpu.dot_dimension_numbers<[1], [0], [0], [1], [0, 0, 1, 1], [], []>} : vector<8x8xf32>, vector<8x16xf32>, vector<8x16xf32> -> vector<8x16xf32>
    %c8_116 = arith.constant 8 : index
    %c16_117 = arith.constant 16 : index
    %152 = vector.load %arg42[%c8_116, %c16_117] : memref<16x64xf32, #tpu.memory_space<vmem>>, vector<8x16xf32>
    tpu.vector_store %arg42[%c8_116, %c16_117], %151 {strides = array<i32>} : memref<16x64xf32, #tpu.memory_space<vmem>>, vector<8x16xf32>,
    %c8_118 = arith.constant 8 : index
    %c32_119 = arith.constant 32 : index
    %153 = vector.load %arg41[%c8_118, %c32_119] : memref<16x192xf32, #tpu.memory_space<vmem>>, vector<8x16xf32>
    %c8_120 = arith.constant 8 : index
    %c96_121 = arith.constant 96 : index
    %154 = vector.load %arg41[%c8_120, %c96_121] : memref<16x192xf32, #tpu.memory_space<vmem>>, vector<8x16xf32>
    %c8_122 = arith.constant 8 : index
    %c160_123 = arith.constant 160 : index
    %155 = vector.load %arg41[%c8_122, %c160_123] : memref<16x192xf32, #tpu.memory_space<vmem>>, vector<8x16xf32>
    %cst_124 = arith.constant dense<0.000000e+00> : vector<8x8xf32>
    %156 = tpu.matmul %153, %154, %cst_124 {dimension_numbers = #tpu.dot_dimension_numbers<[1], [1], [0], [0], [0, 0, 1, 0], [], []>} : vector<8x16xf32>, vector<8x16xf32>, vector<8x8xf32> -> vector<8x8xf32>
    %cst_125 = arith.constant 2.500000e-01 : f32
    %157 = vector.broadcast %cst_125 : f32 to vector<8x8xf32>
    %158 = arith.mulf %156, %157 : vector<8x8xf32>
    %cst_126 = arith.constant dense<0xFF800000> : vector<8xf32>
    %159 = vector.multi_reduction <maximumf>, %158, %cst_126 [1] : vector<8x8xf32> to vector<8xf32>
    %160 = vector.shape_cast %159 : vector<8xf32> to vector<8x1xf32>
    %161 = vector.broadcast %160 : vector<8x1xf32> to vector<8x8xf32>
    %162 = arith.subf %158, %161 : vector<8x8xf32>
    %163 = math.exp %162 : vector<8x8xf32>
    %cst_127 = arith.constant dense<0.000000e+00> : vector<8xf32>
    %164 = vector.multi_reduction <add>, %163, %cst_127 [1] : vector<8x8xf32> to vector<8xf32>
    %165 = vector.shape_cast %164 : vector<8xf32> to vector<8x1xf32>
    %166 = tpu.reciprocal %165 {approx = true} : vector<8x1xf32> -> vector<8x1xf32>
    %167 = vector.broadcast %166 : vector<8x1xf32> to vector<8x8xf32>
    %168 = arith.mulf %163, %167 : vector<8x8xf32>
    %cst_128 = arith.constant dense<0.000000e+00> : vector<8x16xf32>
    %169 = tpu.matmul %168, %155, %cst_128 {dimension_numbers = #tpu.dot_dimension_numbers<[1], [0], [0], [1], [0, 0, 1, 1], [], []>} : vector<8x8xf32>, vector<8x16xf32>, vector<8x16xf32> -> vector<8x16xf32>
    %c8_129 = arith.constant 8 : index
    %c32_130 = arith.constant 32 : index
    %170 = vector.load %arg42[%c8_129, %c32_130] : memref<16x64xf32, #tpu.memory_space<vmem>>, vector<8x16xf32>
    tpu.vector_store %arg42[%c8_129, %c32_130], %169 {strides = array<i32>} : memref<16x64xf32, #tpu.memory_space<vmem>>, vector<8x16xf32>,
    %c8_131 = arith.constant 8 : index
    %c48_132 = arith.constant 48 : index
    %171 = vector.load %arg41[%c8_131, %c48_132] : memref<16x192xf32, #tpu.memory_space<vmem>>, vector<8x16xf32>
    %c8_133 = arith.constant 8 : index
    %c112_134 = arith.constant 112 : index
    %172 = vector.load %arg41[%c8_133, %c112_134] : memref<16x192xf32, #tpu.memory_space<vmem>>, vector<8x16xf32>
    %c8_135 = arith.constant 8 : index
    %c176_136 = arith.constant 176 : index
    %173 = vector.load %arg41[%c8_135, %c176_136] : memref<16x192xf32, #tpu.memory_space<vmem>>, vector<8x16xf32>
    %cst_137 = arith.constant dense<0.000000e+00> : vector<8x8xf32>
    %174 = tpu.matmul %171, %172, %cst_137 {dimension_numbers = #tpu.dot_dimension_numbers<[1], [1], [0], [0], [0, 0, 1, 0], [], []>} : vector<8x16xf32>, vector<8x16xf32>, vector<8x8xf32> -> vector<8x8xf32>
    %cst_138 = arith.constant 2.500000e-01 : f32
    %175 = vector.broadcast %cst_138 : f32 to vector<8x8xf32>
    %176 = arith.mulf %174, %175 : vector<8x8xf32>
    %cst_139 = arith.constant dense<0xFF800000> : vector<8xf32>
    %177 = vector.multi_reduction <maximumf>, %176, %cst_139 [1] : vector<8x8xf32> to vector<8xf32>
    %178 = vector.shape_cast %177 : vector<8xf32> to vector<8x1xf32>
    %179 = vector.broadcast %178 : vector<8x1xf32> to vector<8x8xf32>
    %180 = arith.subf %176, %179 : vector<8x8xf32>
    %181 = math.exp %180 : vector<8x8xf32>
    %cst_140 = arith.constant dense<0.000000e+00> : vector<8xf32>
    %182 = vector.multi_reduction <add>, %181, %cst_140 [1] : vector<8x8xf32> to vector<8xf32>
    %183 = vector.shape_cast %182 : vector<8xf32> to vector<8x1xf32>
    %184 = tpu.reciprocal %183 {approx = true} : vector<8x1xf32> -> vector<8x1xf32>
    %185 = vector.broadcast %184 : vector<8x1xf32> to vector<8x8xf32>
    %186 = arith.mulf %181, %185 : vector<8x8xf32>
    %cst_141 = arith.constant dense<0.000000e+00> : vector<8x16xf32>
    %187 = tpu.matmul %186, %173, %cst_141 {dimension_numbers = #tpu.dot_dimension_numbers<[1], [0], [0], [1], [0, 0, 1, 1], [], []>} : vector<8x8xf32>, vector<8x16xf32>, vector<8x16xf32> -> vector<8x16xf32>
    %c8_142 = arith.constant 8 : index
    %c48_143 = arith.constant 48 : index
    %188 = vector.load %arg42[%c8_142, %c48_143] : memref<16x64xf32, #tpu.memory_space<vmem>>, vector<8x16xf32>
    tpu.vector_store %arg42[%c8_142, %c48_143], %187 {strides = array<i32>} : memref<16x64xf32, #tpu.memory_space<vmem>>, vector<8x16xf32>,
    %c0_144 = arith.constant 0 : index
    %c0_145 = arith.constant 0 : index
    %189 = vector.load %arg42[%c0_144, %c0_145] : memref<16x64xf32, #tpu.memory_space<vmem>>, vector<16x64xf32>
    %cst_146 = arith.constant dense<0.000000e+00> : vector<16x64xf32>
    %190 = tpu.matmul %189, %31, %cst_146 {dimension_numbers = #tpu.dot_dimension_numbers<[1], [0], [0], [1], [0, 0, 1, 1], [], []>} : vector<16x64xf32>, vector<64x64xf32>, vector<16x64xf32> -> vector<16x64xf32>
    %191 = vector.broadcast %32 : vector<1x64xf32> to vector<16x64xf32>
    %192 = arith.addf %190, %191 : vector<16x64xf32>
    %193 = arith.addf %28, %192 : vector<16x64xf32>
    %cst_147 = arith.constant dense<0.000000e+00> : vector<16xf32>
    %194 = vector.multi_reduction <add>, %193, %cst_147 [1] : vector<16x64xf32> to vector<16xf32>
    %195 = vector.shape_cast %194 : vector<16xf32> to vector<16x1xf32>
    %cst_148 = arith.constant 6.400000e+01 : f32
    %196 = vector.broadcast %cst_148 : f32 to vector<16x1xf32>
    %197 = arith.divf %195, %196 : vector<16x1xf32>
    %198 = vector.broadcast %197 : vector<16x1xf32> to vector<16x64xf32>
    %199 = arith.subf %193, %198 : vector<16x64xf32>
    %200 = arith.mulf %199, %199 : vector<16x64xf32>
    %cst_149 = arith.constant dense<0.000000e+00> : vector<16xf32>
    %201 = vector.multi_reduction <add>, %200, %cst_149 [1] : vector<16x64xf32> to vector<16xf32>
    %202 = vector.shape_cast %201 : vector<16xf32> to vector<16x1xf32>
    %cst_150 = arith.constant 6.400000e+01 : f32
    %203 = vector.broadcast %cst_150 : f32 to vector<16x1xf32>
    %204 = arith.divf %202, %203 : vector<16x1xf32>
    %cst_151 = arith.constant 9.99999974E-6 : f32
    %205 = vector.broadcast %cst_151 : f32 to vector<16x1xf32>
    %206 = arith.addf %204, %205 : vector<16x1xf32>
    %207 = math.rsqrt %206 : vector<16x1xf32>
    %208 = vector.broadcast %207 : vector<16x1xf32> to vector<16x64xf32>
    %209 = arith.mulf %199, %208 : vector<16x64xf32>
    %210 = vector.broadcast %37 : vector<1x64xf32> to vector<16x64xf32>
    %211 = arith.mulf %209, %210 : vector<16x64xf32>
    %212 = vector.broadcast %38 : vector<1x64xf32> to vector<16x64xf32>
    %213 = arith.addf %211, %212 : vector<16x64xf32>
    %cst_152 = arith.constant dense<0.000000e+00> : vector<16x128xf32>
    %214 = tpu.matmul %213, %33, %cst_152 {dimension_numbers = #tpu.dot_dimension_numbers<[1], [0], [0], [1], [0, 0, 1, 1], [], []>} : vector<16x64xf32>, vector<64x128xf32>, vector<16x128xf32> -> vector<16x128xf32>
    %215 = vector.broadcast %34 : vector<1x128xf32> to vector<16x128xf32>
    %216 = arith.addf %214, %215 : vector<16x128xf32>
    %cst_153 = arith.constant 0.000000e+00 : f32
    %217 = vector.broadcast %cst_153 : f32 to vector<16x128xf32>
    %218 = arith.maximumf %216, %217 : vector<16x128xf32>
    %cst_154 = arith.constant dense<0.000000e+00> : vector<16x64xf32>
    %219 = tpu.matmul %218, %35, %cst_154 {dimension_numbers = #tpu.dot_dimension_numbers<[1], [0], [0], [1], [0, 0, 1, 1], [], []>} : vector<16x128xf32>, vector<128x64xf32>, vector<16x64xf32> -> vector<16x64xf32>
    %220 = vector.broadcast %36 : vector<1x64xf32> to vector<16x64xf32>
    %221 = arith.addf %219, %220 : vector<16x64xf32>
    %222 = arith.addf %213, %221 : vector<16x64xf32>
    %cst_155 = arith.constant dense<0.000000e+00> : vector<16xf32>
    %223 = vector.multi_reduction <add>, %222, %cst_155 [1] : vector<16x64xf32> to vector<16xf32>
    %224 = vector.shape_cast %223 : vector<16xf32> to vector<16x1xf32>
    %cst_156 = arith.constant 6.400000e+01 : f32
    %225 = vector.broadcast %cst_156 : f32 to vector<16x1xf32>
    %226 = arith.divf %224, %225 : vector<16x1xf32>
    %227 = vector.broadcast %226 : vector<16x1xf32> to vector<16x64xf32>
    %228 = arith.subf %222, %227 : vector<16x64xf32>
    %229 = arith.mulf %228, %228 : vector<16x64xf32>
    %cst_157 = arith.constant dense<0.000000e+00> : vector<16xf32>
    %230 = vector.multi_reduction <add>, %229, %cst_157 [1] : vector<16x64xf32> to vector<16xf32>
    %231 = vector.shape_cast %230 : vector<16xf32> to vector<16x1xf32>
    %cst_158 = arith.constant 6.400000e+01 : f32
    %232 = vector.broadcast %cst_158 : f32 to vector<16x1xf32>
    %233 = arith.divf %231, %232 : vector<16x1xf32>
    %cst_159 = arith.constant 9.99999974E-6 : f32
    %234 = vector.broadcast %cst_159 : f32 to vector<16x1xf32>
    %235 = arith.addf %233, %234 : vector<16x1xf32>
    %236 = math.rsqrt %235 : vector<16x1xf32>
    %237 = vector.broadcast %236 : vector<16x1xf32> to vector<16x64xf32>
    %238 = arith.mulf %228, %237 : vector<16x64xf32>
    %239 = vector.broadcast %39 : vector<1x64xf32> to vector<16x64xf32>
    %240 = arith.mulf %238, %239 : vector<16x64xf32>
    %241 = vector.broadcast %40 : vector<1x64xf32> to vector<16x64xf32>
    %242 = arith.addf %240, %241 : vector<16x64xf32>
    %c0_160 = arith.constant 0 : index
    %c0_161 = arith.constant 0 : index
    %243 = vector.load %arg22[%c0_160, %c0_161] : memref<64x192xf32, #tpu.memory_space<vmem>>, vector<64x192xf32>
    %c0_162 = arith.constant 0 : index
    %c0_163 = arith.constant 0 : index
    %244 = vector.load %arg23[%c0_162, %c0_163] : memref<1x192xf32, #tpu.memory_space<vmem>>, vector<1x192xf32>
    %c0_164 = arith.constant 0 : index
    %c0_165 = arith.constant 0 : index
    %245 = vector.load %arg24[%c0_164, %c0_165] : memref<64x64xf32, #tpu.memory_space<vmem>>, vector<64x64xf32>
    %c0_166 = arith.constant 0 : index
    %c0_167 = arith.constant 0 : index
    %246 = vector.load %arg25[%c0_166, %c0_167] : memref<1x64xf32, #tpu.memory_space<vmem>>, vector<1x64xf32>
    %c0_168 = arith.constant 0 : index
    %c0_169 = arith.constant 0 : index
    %247 = vector.load %arg26[%c0_168, %c0_169] : memref<64x128xf32, #tpu.memory_space<vmem>>, vector<64x128xf32>
    %c0_170 = arith.constant 0 : index
    %c0_171 = arith.constant 0 : index
    %248 = vector.load %arg27[%c0_170, %c0_171] : memref<1x128xf32, #tpu.memory_space<vmem>>, vector<1x128xf32>
    %c0_172 = arith.constant 0 : index
    %c0_173 = arith.constant 0 : index
    %249 = vector.load %arg28[%c0_172, %c0_173] : memref<128x64xf32, #tpu.memory_space<vmem>>, vector<128x64xf32>
    %c0_174 = arith.constant 0 : index
    %c0_175 = arith.constant 0 : index
    %250 = vector.load %arg29[%c0_174, %c0_175] : memref<1x64xf32, #tpu.memory_space<vmem>>, vector<1x64xf32>
    %c0_176 = arith.constant 0 : index
    %c0_177 = arith.constant 0 : index
    %251 = vector.load %arg30[%c0_176, %c0_177] : memref<1x64xf32, #tpu.memory_space<vmem>>, vector<1x64xf32>
    %c0_178 = arith.constant 0 : index
    %c0_179 = arith.constant 0 : index
    %252 = vector.load %arg31[%c0_178, %c0_179] : memref<1x64xf32, #tpu.memory_space<vmem>>, vector<1x64xf32>
    %c0_180 = arith.constant 0 : index
    %c0_181 = arith.constant 0 : index
    %253 = vector.load %arg32[%c0_180, %c0_181] : memref<1x64xf32, #tpu.memory_space<vmem>>, vector<1x64xf32>
    %c0_182 = arith.constant 0 : index
    %c0_183 = arith.constant 0 : index
    %254 = vector.load %arg33[%c0_182, %c0_183] : memref<1x64xf32, #tpu.memory_space<vmem>>, vector<1x64xf32>
    %cst_184 = arith.constant dense<0.000000e+00> : vector<16x192xf32>
    %255 = tpu.matmul %242, %243, %cst_184 {dimension_numbers = #tpu.dot_dimension_numbers<[1], [0], [0], [1], [0, 0, 1, 1], [], []>} : vector<16x64xf32>, vector<64x192xf32>, vector<16x192xf32> -> vector<16x192xf32>
    %256 = vector.broadcast %244 : vector<1x192xf32> to vector<16x192xf32>
    %257 = arith.addf %255, %256 : vector<16x192xf32>
    %c0_185 = arith.constant 0 : index
    %c0_186 = arith.constant 0 : index
    %258 = vector.load %arg41[%c0_185, %c0_186] : memref<16x192xf32, #tpu.memory_space<vmem>>, vector<16x192xf32>
    tpu.vector_store %arg41[%c0_185, %c0_186], %257 {strides = array<i32>} : memref<16x192xf32, #tpu.memory_space<vmem>>, vector<16x192xf32>,
    %c0_187 = arith.constant 0 : index
    %c0_188 = arith.constant 0 : index
    %259 = vector.load %arg41[%c0_187, %c0_188] : memref<16x192xf32, #tpu.memory_space<vmem>>, vector<8x16xf32>
    %c0_189 = arith.constant 0 : index
    %c64_190 = arith.constant 64 : index
    %260 = vector.load %arg41[%c0_189, %c64_190] : memref<16x192xf32, #tpu.memory_space<vmem>>, vector<8x16xf32>
    %c0_191 = arith.constant 0 : index
    %c128_192 = arith.constant 128 : index
    %261 = vector.load %arg41[%c0_191, %c128_192] : memref<16x192xf32, #tpu.memory_space<vmem>>, vector<8x16xf32>
    %cst_193 = arith.constant dense<0.000000e+00> : vector<8x8xf32>
    %262 = tpu.matmul %259, %260, %cst_193 {dimension_numbers = #tpu.dot_dimension_numbers<[1], [1], [0], [0], [0, 0, 1, 0], [], []>} : vector<8x16xf32>, vector<8x16xf32>, vector<8x8xf32> -> vector<8x8xf32>
    %cst_194 = arith.constant 2.500000e-01 : f32
    %263 = vector.broadcast %cst_194 : f32 to vector<8x8xf32>
    %264 = arith.mulf %262, %263 : vector<8x8xf32>
    %cst_195 = arith.constant dense<0xFF800000> : vector<8xf32>
    %265 = vector.multi_reduction <maximumf>, %264, %cst_195 [1] : vector<8x8xf32> to vector<8xf32>
    %266 = vector.shape_cast %265 : vector<8xf32> to vector<8x1xf32>
    %267 = vector.broadcast %266 : vector<8x1xf32> to vector<8x8xf32>
    %268 = arith.subf %264, %267 : vector<8x8xf32>
    %269 = math.exp %268 : vector<8x8xf32>
    %cst_196 = arith.constant dense<0.000000e+00> : vector<8xf32>
    %270 = vector.multi_reduction <add>, %269, %cst_196 [1] : vector<8x8xf32> to vector<8xf32>
    %271 = vector.shape_cast %270 : vector<8xf32> to vector<8x1xf32>
    %272 = tpu.reciprocal %271 {approx = true} : vector<8x1xf32> -> vector<8x1xf32>
    %273 = vector.broadcast %272 : vector<8x1xf32> to vector<8x8xf32>
    %274 = arith.mulf %269, %273 : vector<8x8xf32>
    %cst_197 = arith.constant dense<0.000000e+00> : vector<8x16xf32>
    %275 = tpu.matmul %274, %261, %cst_197 {dimension_numbers = #tpu.dot_dimension_numbers<[1], [0], [0], [1], [0, 0, 1, 1], [], []>} : vector<8x8xf32>, vector<8x16xf32>, vector<8x16xf32> -> vector<8x16xf32>
    %c0_198 = arith.constant 0 : index
    %c0_199 = arith.constant 0 : index
    %276 = vector.load %arg42[%c0_198, %c0_199] : memref<16x64xf32, #tpu.memory_space<vmem>>, vector<8x16xf32>
    tpu.vector_store %arg42[%c0_198, %c0_199], %275 {strides = array<i32>} : memref<16x64xf32, #tpu.memory_space<vmem>>, vector<8x16xf32>,
    %c0_200 = arith.constant 0 : index
    %c16_201 = arith.constant 16 : index
    %277 = vector.load %arg41[%c0_200, %c16_201] : memref<16x192xf32, #tpu.memory_space<vmem>>, vector<8x16xf32>
    %c0_202 = arith.constant 0 : index
    %c80_203 = arith.constant 80 : index
    %278 = vector.load %arg41[%c0_202, %c80_203] : memref<16x192xf32, #tpu.memory_space<vmem>>, vector<8x16xf32>
    %c0_204 = arith.constant 0 : index
    %c144_205 = arith.constant 144 : index
    %279 = vector.load %arg41[%c0_204, %c144_205] : memref<16x192xf32, #tpu.memory_space<vmem>>, vector<8x16xf32>
    %cst_206 = arith.constant dense<0.000000e+00> : vector<8x8xf32>
    %280 = tpu.matmul %277, %278, %cst_206 {dimension_numbers = #tpu.dot_dimension_numbers<[1], [1], [0], [0], [0, 0, 1, 0], [], []>} : vector<8x16xf32>, vector<8x16xf32>, vector<8x8xf32> -> vector<8x8xf32>
    %cst_207 = arith.constant 2.500000e-01 : f32
    %281 = vector.broadcast %cst_207 : f32 to vector<8x8xf32>
    %282 = arith.mulf %280, %281 : vector<8x8xf32>
    %cst_208 = arith.constant dense<0xFF800000> : vector<8xf32>
    %283 = vector.multi_reduction <maximumf>, %282, %cst_208 [1] : vector<8x8xf32> to vector<8xf32>
    %284 = vector.shape_cast %283 : vector<8xf32> to vector<8x1xf32>
    %285 = vector.broadcast %284 : vector<8x1xf32> to vector<8x8xf32>
    %286 = arith.subf %282, %285 : vector<8x8xf32>
    %287 = math.exp %286 : vector<8x8xf32>
    %cst_209 = arith.constant dense<0.000000e+00> : vector<8xf32>
    %288 = vector.multi_reduction <add>, %287, %cst_209 [1] : vector<8x8xf32> to vector<8xf32>
    %289 = vector.shape_cast %288 : vector<8xf32> to vector<8x1xf32>
    %290 = tpu.reciprocal %289 {approx = true} : vector<8x1xf32> -> vector<8x1xf32>
    %291 = vector.broadcast %290 : vector<8x1xf32> to vector<8x8xf32>
    %292 = arith.mulf %287, %291 : vector<8x8xf32>
    %cst_210 = arith.constant dense<0.000000e+00> : vector<8x16xf32>
    %293 = tpu.matmul %292, %279, %cst_210 {dimension_numbers = #tpu.dot_dimension_numbers<[1], [0], [0], [1], [0, 0, 1, 1], [], []>} : vector<8x8xf32>, vector<8x16xf32>, vector<8x16xf32> -> vector<8x16xf32>
    %c0_211 = arith.constant 0 : index
    %c16_212 = arith.constant 16 : index
    %294 = vector.load %arg42[%c0_211, %c16_212] : memref<16x64xf32, #tpu.memory_space<vmem>>, vector<8x16xf32>
    tpu.vector_store %arg42[%c0_211, %c16_212], %293 {strides = array<i32>} : memref<16x64xf32, #tpu.memory_space<vmem>>, vector<8x16xf32>,
    %c0_213 = arith.constant 0 : index
    %c32_214 = arith.constant 32 : index
    %295 = vector.load %arg41[%c0_213, %c32_214] : memref<16x192xf32, #tpu.memory_space<vmem>>, vector<8x16xf32>
    %c0_215 = arith.constant 0 : index
    %c96_216 = arith.constant 96 : index
    %296 = vector.load %arg41[%c0_215, %c96_216] : memref<16x192xf32, #tpu.memory_space<vmem>>, vector<8x16xf32>
    %c0_217 = arith.constant 0 : index
    %c160_218 = arith.constant 160 : index
    %297 = vector.load %arg41[%c0_217, %c160_218] : memref<16x192xf32, #tpu.memory_space<vmem>>, vector<8x16xf32>
    %cst_219 = arith.constant dense<0.000000e+00> : vector<8x8xf32>
    %298 = tpu.matmul %295, %296, %cst_219 {dimension_numbers = #tpu.dot_dimension_numbers<[1], [1], [0], [0], [0, 0, 1, 0], [], []>} : vector<8x16xf32>, vector<8x16xf32>, vector<8x8xf32> -> vector<8x8xf32>
    %cst_220 = arith.constant 2.500000e-01 : f32
    %299 = vector.broadcast %cst_220 : f32 to vector<8x8xf32>
    %300 = arith.mulf %298, %299 : vector<8x8xf32>
    %cst_221 = arith.constant dense<0xFF800000> : vector<8xf32>
    %301 = vector.multi_reduction <maximumf>, %300, %cst_221 [1] : vector<8x8xf32> to vector<8xf32>
    %302 = vector.shape_cast %301 : vector<8xf32> to vector<8x1xf32>
    %303 = vector.broadcast %302 : vector<8x1xf32> to vector<8x8xf32>
    %304 = arith.subf %300, %303 : vector<8x8xf32>
    %305 = math.exp %304 : vector<8x8xf32>
    %cst_222 = arith.constant dense<0.000000e+00> : vector<8xf32>
    %306 = vector.multi_reduction <add>, %305, %cst_222 [1] : vector<8x8xf32> to vector<8xf32>
    %307 = vector.shape_cast %306 : vector<8xf32> to vector<8x1xf32>
    %308 = tpu.reciprocal %307 {approx = true} : vector<8x1xf32> -> vector<8x1xf32>
    %309 = vector.broadcast %308 : vector<8x1xf32> to vector<8x8xf32>
    %310 = arith.mulf %305, %309 : vector<8x8xf32>
    %cst_223 = arith.constant dense<0.000000e+00> : vector<8x16xf32>
    %311 = tpu.matmul %310, %297, %cst_223 {dimension_numbers = #tpu.dot_dimension_numbers<[1], [0], [0], [1], [0, 0, 1, 1], [], []>} : vector<8x8xf32>, vector<8x16xf32>, vector<8x16xf32> -> vector<8x16xf32>
    %c0_224 = arith.constant 0 : index
    %c32_225 = arith.constant 32 : index
    %312 = vector.load %arg42[%c0_224, %c32_225] : memref<16x64xf32, #tpu.memory_space<vmem>>, vector<8x16xf32>
    tpu.vector_store %arg42[%c0_224, %c32_225], %311 {strides = array<i32>} : memref<16x64xf32, #tpu.memory_space<vmem>>, vector<8x16xf32>,
    %c0_226 = arith.constant 0 : index
    %c48_227 = arith.constant 48 : index
    %313 = vector.load %arg41[%c0_226, %c48_227] : memref<16x192xf32, #tpu.memory_space<vmem>>, vector<8x16xf32>
    %c0_228 = arith.constant 0 : index
    %c112_229 = arith.constant 112 : index
    %314 = vector.load %arg41[%c0_228, %c112_229] : memref<16x192xf32, #tpu.memory_space<vmem>>, vector<8x16xf32>
    %c0_230 = arith.constant 0 : index
    %c176_231 = arith.constant 176 : index
    %315 = vector.load %arg41[%c0_230, %c176_231] : memref<16x192xf32, #tpu.memory_space<vmem>>, vector<8x16xf32>
    %cst_232 = arith.constant dense<0.000000e+00> : vector<8x8xf32>
    %316 = tpu.matmul %313, %314, %cst_232 {dimension_numbers = #tpu.dot_dimension_numbers<[1], [1], [0], [0], [0, 0, 1, 0], [], []>} : vector<8x16xf32>, vector<8x16xf32>, vector<8x8xf32> -> vector<8x8xf32>
    %cst_233 = arith.constant 2.500000e-01 : f32
    %317 = vector.broadcast %cst_233 : f32 to vector<8x8xf32>
    %318 = arith.mulf %316, %317 : vector<8x8xf32>
    %cst_234 = arith.constant dense<0xFF800000> : vector<8xf32>
    %319 = vector.multi_reduction <maximumf>, %318, %cst_234 [1] : vector<8x8xf32> to vector<8xf32>
    %320 = vector.shape_cast %319 : vector<8xf32> to vector<8x1xf32>
    %321 = vector.broadcast %320 : vector<8x1xf32> to vector<8x8xf32>
    %322 = arith.subf %318, %321 : vector<8x8xf32>
    %323 = math.exp %322 : vector<8x8xf32>
    %cst_235 = arith.constant dense<0.000000e+00> : vector<8xf32>
    %324 = vector.multi_reduction <add>, %323, %cst_235 [1] : vector<8x8xf32> to vector<8xf32>
    %325 = vector.shape_cast %324 : vector<8xf32> to vector<8x1xf32>
    %326 = tpu.reciprocal %325 {approx = true} : vector<8x1xf32> -> vector<8x1xf32>
    %327 = vector.broadcast %326 : vector<8x1xf32> to vector<8x8xf32>
    %328 = arith.mulf %323, %327 : vector<8x8xf32>
    %cst_236 = arith.constant dense<0.000000e+00> : vector<8x16xf32>
    %329 = tpu.matmul %328, %315, %cst_236 {dimension_numbers = #tpu.dot_dimension_numbers<[1], [0], [0], [1], [0, 0, 1, 1], [], []>} : vector<8x8xf32>, vector<8x16xf32>, vector<8x16xf32> -> vector<8x16xf32>
    %c0_237 = arith.constant 0 : index
    %c48_238 = arith.constant 48 : index
    %330 = vector.load %arg42[%c0_237, %c48_238] : memref<16x64xf32, #tpu.memory_space<vmem>>, vector<8x16xf32>
    tpu.vector_store %arg42[%c0_237, %c48_238], %329 {strides = array<i32>} : memref<16x64xf32, #tpu.memory_space<vmem>>, vector<8x16xf32>,
    %c8_239 = arith.constant 8 : index
    %c0_240 = arith.constant 0 : index
    %331 = vector.load %arg41[%c8_239, %c0_240] : memref<16x192xf32, #tpu.memory_space<vmem>>, vector<8x16xf32>
    %c8_241 = arith.constant 8 : index
    %c64_242 = arith.constant 64 : index
    %332 = vector.load %arg41[%c8_241, %c64_242] : memref<16x192xf32, #tpu.memory_space<vmem>>, vector<8x16xf32>
    %c8_243 = arith.constant 8 : index
    %c128_244 = arith.constant 128 : index
    %333 = vector.load %arg41[%c8_243, %c128_244] : memref<16x192xf32, #tpu.memory_space<vmem>>, vector<8x16xf32>
    %cst_245 = arith.constant dense<0.000000e+00> : vector<8x8xf32>
    %334 = tpu.matmul %331, %332, %cst_245 {dimension_numbers = #tpu.dot_dimension_numbers<[1], [1], [0], [0], [0, 0, 1, 0], [], []>} : vector<8x16xf32>, vector<8x16xf32>, vector<8x8xf32> -> vector<8x8xf32>
    %cst_246 = arith.constant 2.500000e-01 : f32
    %335 = vector.broadcast %cst_246 : f32 to vector<8x8xf32>
    %336 = arith.mulf %334, %335 : vector<8x8xf32>
    %cst_247 = arith.constant dense<0xFF800000> : vector<8xf32>
    %337 = vector.multi_reduction <maximumf>, %336, %cst_247 [1] : vector<8x8xf32> to vector<8xf32>
    %338 = vector.shape_cast %337 : vector<8xf32> to vector<8x1xf32>
    %339 = vector.broadcast %338 : vector<8x1xf32> to vector<8x8xf32>
    %340 = arith.subf %336, %339 : vector<8x8xf32>
    %341 = math.exp %340 : vector<8x8xf32>
    %cst_248 = arith.constant dense<0.000000e+00> : vector<8xf32>
    %342 = vector.multi_reduction <add>, %341, %cst_248 [1] : vector<8x8xf32> to vector<8xf32>
    %343 = vector.shape_cast %342 : vector<8xf32> to vector<8x1xf32>
    %344 = tpu.reciprocal %343 {approx = true} : vector<8x1xf32> -> vector<8x1xf32>
    %345 = vector.broadcast %344 : vector<8x1xf32> to vector<8x8xf32>
    %346 = arith.mulf %341, %345 : vector<8x8xf32>
    %cst_249 = arith.constant dense<0.000000e+00> : vector<8x16xf32>
    %347 = tpu.matmul %346, %333, %cst_249 {dimension_numbers = #tpu.dot_dimension_numbers<[1], [0], [0], [1], [0, 0, 1, 1], [], []>} : vector<8x8xf32>, vector<8x16xf32>, vector<8x16xf32> -> vector<8x16xf32>
    %c8_250 = arith.constant 8 : index
    %c0_251 = arith.constant 0 : index
    %348 = vector.load %arg42[%c8_250, %c0_251] : memref<16x64xf32, #tpu.memory_space<vmem>>, vector<8x16xf32>
    tpu.vector_store %arg42[%c8_250, %c0_251], %347 {strides = array<i32>} : memref<16x64xf32, #tpu.memory_space<vmem>>, vector<8x16xf32>,
    %c8_252 = arith.constant 8 : index
    %c16_253 = arith.constant 16 : index
    %349 = vector.load %arg41[%c8_252, %c16_253] : memref<16x192xf32, #tpu.memory_space<vmem>>, vector<8x16xf32>
    %c8_254 = arith.constant 8 : index
    %c80_255 = arith.constant 80 : index
    %350 = vector.load %arg41[%c8_254, %c80_255] : memref<16x192xf32, #tpu.memory_space<vmem>>, vector<8x16xf32>
    %c8_256 = arith.constant 8 : index
    %c144_257 = arith.constant 144 : index
    %351 = vector.load %arg41[%c8_256, %c144_257] : memref<16x192xf32, #tpu.memory_space<vmem>>, vector<8x16xf32>
    %cst_258 = arith.constant dense<0.000000e+00> : vector<8x8xf32>
    %352 = tpu.matmul %349, %350, %cst_258 {dimension_numbers = #tpu.dot_dimension_numbers<[1], [1], [0], [0], [0, 0, 1, 0], [], []>} : vector<8x16xf32>, vector<8x16xf32>, vector<8x8xf32> -> vector<8x8xf32>
    %cst_259 = arith.constant 2.500000e-01 : f32
    %353 = vector.broadcast %cst_259 : f32 to vector<8x8xf32>
    %354 = arith.mulf %352, %353 : vector<8x8xf32>
    %cst_260 = arith.constant dense<0xFF800000> : vector<8xf32>
    %355 = vector.multi_reduction <maximumf>, %354, %cst_260 [1] : vector<8x8xf32> to vector<8xf32>
    %356 = vector.shape_cast %355 : vector<8xf32> to vector<8x1xf32>
    %357 = vector.broadcast %356 : vector<8x1xf32> to vector<8x8xf32>
    %358 = arith.subf %354, %357 : vector<8x8xf32>
    %359 = math.exp %358 : vector<8x8xf32>
    %cst_261 = arith.constant dense<0.000000e+00> : vector<8xf32>
    %360 = vector.multi_reduction <add>, %359, %cst_261 [1] : vector<8x8xf32> to vector<8xf32>
    %361 = vector.shape_cast %360 : vector<8xf32> to vector<8x1xf32>
    %362 = tpu.reciprocal %361 {approx = true} : vector<8x1xf32> -> vector<8x1xf32>
    %363 = vector.broadcast %362 : vector<8x1xf32> to vector<8x8xf32>
    %364 = arith.mulf %359, %363 : vector<8x8xf32>
    %cst_262 = arith.constant dense<0.000000e+00> : vector<8x16xf32>
    %365 = tpu.matmul %364, %351, %cst_262 {dimension_numbers = #tpu.dot_dimension_numbers<[1], [0], [0], [1], [0, 0, 1, 1], [], []>} : vector<8x8xf32>, vector<8x16xf32>, vector<8x16xf32> -> vector<8x16xf32>
    %c8_263 = arith.constant 8 : index
    %c16_264 = arith.constant 16 : index
    %366 = vector.load %arg42[%c8_263, %c16_264] : memref<16x64xf32, #tpu.memory_space<vmem>>, vector<8x16xf32>
    tpu.vector_store %arg42[%c8_263, %c16_264], %365 {strides = array<i32>} : memref<16x64xf32, #tpu.memory_space<vmem>>, vector<8x16xf32>,
    %c8_265 = arith.constant 8 : index
    %c32_266 = arith.constant 32 : index
    %367 = vector.load %arg41[%c8_265, %c32_266] : memref<16x192xf32, #tpu.memory_space<vmem>>, vector<8x16xf32>
    %c8_267 = arith.constant 8 : index
    %c96_268 = arith.constant 96 : index
    %368 = vector.load %arg41[%c8_267, %c96_268] : memref<16x192xf32, #tpu.memory_space<vmem>>, vector<8x16xf32>
    %c8_269 = arith.constant 8 : index
    %c160_270 = arith.constant 160 : index
    %369 = vector.load %arg41[%c8_269, %c160_270] : memref<16x192xf32, #tpu.memory_space<vmem>>, vector<8x16xf32>
    %cst_271 = arith.constant dense<0.000000e+00> : vector<8x8xf32>
    %370 = tpu.matmul %367, %368, %cst_271 {dimension_numbers = #tpu.dot_dimension_numbers<[1], [1], [0], [0], [0, 0, 1, 0], [], []>} : vector<8x16xf32>, vector<8x16xf32>, vector<8x8xf32> -> vector<8x8xf32>
    %cst_272 = arith.constant 2.500000e-01 : f32
    %371 = vector.broadcast %cst_272 : f32 to vector<8x8xf32>
    %372 = arith.mulf %370, %371 : vector<8x8xf32>
    %cst_273 = arith.constant dense<0xFF800000> : vector<8xf32>
    %373 = vector.multi_reduction <maximumf>, %372, %cst_273 [1] : vector<8x8xf32> to vector<8xf32>
    %374 = vector.shape_cast %373 : vector<8xf32> to vector<8x1xf32>
    %375 = vector.broadcast %374 : vector<8x1xf32> to vector<8x8xf32>
    %376 = arith.subf %372, %375 : vector<8x8xf32>
    %377 = math.exp %376 : vector<8x8xf32>
    %cst_274 = arith.constant dense<0.000000e+00> : vector<8xf32>
    %378 = vector.multi_reduction <add>, %377, %cst_274 [1] : vector<8x8xf32> to vector<8xf32>
    %379 = vector.shape_cast %378 : vector<8xf32> to vector<8x1xf32>
    %380 = tpu.reciprocal %379 {approx = true} : vector<8x1xf32> -> vector<8x1xf32>
    %381 = vector.broadcast %380 : vector<8x1xf32> to vector<8x8xf32>
    %382 = arith.mulf %377, %381 : vector<8x8xf32>
    %cst_275 = arith.constant dense<0.000000e+00> : vector<8x16xf32>
    %383 = tpu.matmul %382, %369, %cst_275 {dimension_numbers = #tpu.dot_dimension_numbers<[1], [0], [0], [1], [0, 0, 1, 1], [], []>} : vector<8x8xf32>, vector<8x16xf32>, vector<8x16xf32> -> vector<8x16xf32>
    %c8_276 = arith.constant 8 : index
    %c32_277 = arith.constant 32 : index
    %384 = vector.load %arg42[%c8_276, %c32_277] : memref<16x64xf32, #tpu.memory_space<vmem>>, vector<8x16xf32>
    tpu.vector_store %arg42[%c8_276, %c32_277], %383 {strides = array<i32>} : memref<16x64xf32, #tpu.memory_space<vmem>>, vector<8x16xf32>,
    %c8_278 = arith.constant 8 : index
    %c48_279 = arith.constant 48 : index
    %385 = vector.load %arg41[%c8_278, %c48_279] : memref<16x192xf32, #tpu.memory_space<vmem>>, vector<8x16xf32>
    %c8_280 = arith.constant 8 : index
    %c112_281 = arith.constant 112 : index
    %386 = vector.load %arg41[%c8_280, %c112_281] : memref<16x192xf32, #tpu.memory_space<vmem>>, vector<8x16xf32>
    %c8_282 = arith.constant 8 : index
    %c176_283 = arith.constant 176 : index
    %387 = vector.load %arg41[%c8_282, %c176_283] : memref<16x192xf32, #tpu.memory_space<vmem>>, vector<8x16xf32>
    %cst_284 = arith.constant dense<0.000000e+00> : vector<8x8xf32>
    %388 = tpu.matmul %385, %386, %cst_284 {dimension_numbers = #tpu.dot_dimension_numbers<[1], [1], [0], [0], [0, 0, 1, 0], [], []>} : vector<8x16xf32>, vector<8x16xf32>, vector<8x8xf32> -> vector<8x8xf32>
    %cst_285 = arith.constant 2.500000e-01 : f32
    %389 = vector.broadcast %cst_285 : f32 to vector<8x8xf32>
    %390 = arith.mulf %388, %389 : vector<8x8xf32>
    %cst_286 = arith.constant dense<0xFF800000> : vector<8xf32>
    %391 = vector.multi_reduction <maximumf>, %390, %cst_286 [1] : vector<8x8xf32> to vector<8xf32>
    %392 = vector.shape_cast %391 : vector<8xf32> to vector<8x1xf32>
    %393 = vector.broadcast %392 : vector<8x1xf32> to vector<8x8xf32>
    %394 = arith.subf %390, %393 : vector<8x8xf32>
    %395 = math.exp %394 : vector<8x8xf32>
    %cst_287 = arith.constant dense<0.000000e+00> : vector<8xf32>
    %396 = vector.multi_reduction <add>, %395, %cst_287 [1] : vector<8x8xf32> to vector<8xf32>
    %397 = vector.shape_cast %396 : vector<8xf32> to vector<8x1xf32>
    %398 = tpu.reciprocal %397 {approx = true} : vector<8x1xf32> -> vector<8x1xf32>
    %399 = vector.broadcast %398 : vector<8x1xf32> to vector<8x8xf32>
    %400 = arith.mulf %395, %399 : vector<8x8xf32>
    %cst_288 = arith.constant dense<0.000000e+00> : vector<8x16xf32>
    %401 = tpu.matmul %400, %387, %cst_288 {dimension_numbers = #tpu.dot_dimension_numbers<[1], [0], [0], [1], [0, 0, 1, 1], [], []>} : vector<8x8xf32>, vector<8x16xf32>, vector<8x16xf32> -> vector<8x16xf32>
    %c8_289 = arith.constant 8 : index
    %c48_290 = arith.constant 48 : index
    %402 = vector.load %arg42[%c8_289, %c48_290] : memref<16x64xf32, #tpu.memory_space<vmem>>, vector<8x16xf32>
    tpu.vector_store %arg42[%c8_289, %c48_290], %401 {strides = array<i32>} : memref<16x64xf32, #tpu.memory_space<vmem>>, vector<8x16xf32>,
    %c0_291 = arith.constant 0 : index
    %c0_292 = arith.constant 0 : index
    %403 = vector.load %arg42[%c0_291, %c0_292] : memref<16x64xf32, #tpu.memory_space<vmem>>, vector<16x64xf32>
    %cst_293 = arith.constant dense<0.000000e+00> : vector<16x64xf32>
    %404 = tpu.matmul %403, %245, %cst_293 {dimension_numbers = #tpu.dot_dimension_numbers<[1], [0], [0], [1], [0, 0, 1, 1], [], []>} : vector<16x64xf32>, vector<64x64xf32>, vector<16x64xf32> -> vector<16x64xf32>
    %405 = vector.broadcast %246 : vector<1x64xf32> to vector<16x64xf32>
    %406 = arith.addf %404, %405 : vector<16x64xf32>
    %407 = arith.addf %242, %406 : vector<16x64xf32>
    %cst_294 = arith.constant dense<0.000000e+00> : vector<16xf32>
    %408 = vector.multi_reduction <add>, %407, %cst_294 [1] : vector<16x64xf32> to vector<16xf32>
    %409 = vector.shape_cast %408 : vector<16xf32> to vector<16x1xf32>
    %cst_295 = arith.constant 6.400000e+01 : f32
    %410 = vector.broadcast %cst_295 : f32 to vector<16x1xf32>
    %411 = arith.divf %409, %410 : vector<16x1xf32>
    %412 = vector.broadcast %411 : vector<16x1xf32> to vector<16x64xf32>
    %413 = arith.subf %407, %412 : vector<16x64xf32>
    %414 = arith.mulf %413, %413 : vector<16x64xf32>
    %cst_296 = arith.constant dense<0.000000e+00> : vector<16xf32>
    %415 = vector.multi_reduction <add>, %414, %cst_296 [1] : vector<16x64xf32> to vector<16xf32>
    %416 = vector.shape_cast %415 : vector<16xf32> to vector<16x1xf32>
    %cst_297 = arith.constant 6.400000e+01 : f32
    %417 = vector.broadcast %cst_297 : f32 to vector<16x1xf32>
    %418 = arith.divf %416, %417 : vector<16x1xf32>
    %cst_298 = arith.constant 9.99999974E-6 : f32
    %419 = vector.broadcast %cst_298 : f32 to vector<16x1xf32>
    %420 = arith.addf %418, %419 : vector<16x1xf32>
    %421 = math.rsqrt %420 : vector<16x1xf32>
    %422 = vector.broadcast %421 : vector<16x1xf32> to vector<16x64xf32>
    %423 = arith.mulf %413, %422 : vector<16x64xf32>
    %424 = vector.broadcast %251 : vector<1x64xf32> to vector<16x64xf32>
    %425 = arith.mulf %423, %424 : vector<16x64xf32>
    %426 = vector.broadcast %252 : vector<1x64xf32> to vector<16x64xf32>
    %427 = arith.addf %425, %426 : vector<16x64xf32>
    %cst_299 = arith.constant dense<0.000000e+00> : vector<16x128xf32>
    %428 = tpu.matmul %427, %247, %cst_299 {dimension_numbers = #tpu.dot_dimension_numbers<[1], [0], [0], [1], [0, 0, 1, 1], [], []>} : vector<16x64xf32>, vector<64x128xf32>, vector<16x128xf32> -> vector<16x128xf32>
    %429 = vector.broadcast %248 : vector<1x128xf32> to vector<16x128xf32>
    %430 = arith.addf %428, %429 : vector<16x128xf32>
    %cst_300 = arith.constant 0.000000e+00 : f32
    %431 = vector.broadcast %cst_300 : f32 to vector<16x128xf32>
    %432 = arith.maximumf %430, %431 : vector<16x128xf32>
    %cst_301 = arith.constant dense<0.000000e+00> : vector<16x64xf32>
    %433 = tpu.matmul %432, %249, %cst_301 {dimension_numbers = #tpu.dot_dimension_numbers<[1], [0], [0], [1], [0, 0, 1, 1], [], []>} : vector<16x128xf32>, vector<128x64xf32>, vector<16x64xf32> -> vector<16x64xf32>
    %434 = vector.broadcast %250 : vector<1x64xf32> to vector<16x64xf32>
    %435 = arith.addf %433, %434 : vector<16x64xf32>
    %436 = arith.addf %427, %435 : vector<16x64xf32>
    %cst_302 = arith.constant dense<0.000000e+00> : vector<16xf32>
    %437 = vector.multi_reduction <add>, %436, %cst_302 [1] : vector<16x64xf32> to vector<16xf32>
    %438 = vector.shape_cast %437 : vector<16xf32> to vector<16x1xf32>
    %cst_303 = arith.constant 6.400000e+01 : f32
    %439 = vector.broadcast %cst_303 : f32 to vector<16x1xf32>
    %440 = arith.divf %438, %439 : vector<16x1xf32>
    %441 = vector.broadcast %440 : vector<16x1xf32> to vector<16x64xf32>
    %442 = arith.subf %436, %441 : vector<16x64xf32>
    %443 = arith.mulf %442, %442 : vector<16x64xf32>
    %cst_304 = arith.constant dense<0.000000e+00> : vector<16xf32>
    %444 = vector.multi_reduction <add>, %443, %cst_304 [1] : vector<16x64xf32> to vector<16xf32>
    %445 = vector.shape_cast %444 : vector<16xf32> to vector<16x1xf32>
    %cst_305 = arith.constant 6.400000e+01 : f32
    %446 = vector.broadcast %cst_305 : f32 to vector<16x1xf32>
    %447 = arith.divf %445, %446 : vector<16x1xf32>
    %cst_306 = arith.constant 9.99999974E-6 : f32
    %448 = vector.broadcast %cst_306 : f32 to vector<16x1xf32>
    %449 = arith.addf %447, %448 : vector<16x1xf32>
    %450 = math.rsqrt %449 : vector<16x1xf32>
    %451 = vector.broadcast %450 : vector<16x1xf32> to vector<16x64xf32>
    %452 = arith.mulf %442, %451 : vector<16x64xf32>
    %453 = vector.broadcast %253 : vector<1x64xf32> to vector<16x64xf32>
    %454 = arith.mulf %452, %453 : vector<16x64xf32>
    %455 = vector.broadcast %254 : vector<1x64xf32> to vector<16x64xf32>
    %456 = arith.addf %454, %455 : vector<16x64xf32>
    %c0_307 = arith.constant 0 : index
    %c0_308 = arith.constant 0 : index
    %457 = vector.load %arg34[%c0_307, %c0_308] : memref<64x32xf32, #tpu.memory_space<vmem>>, vector<64x32xf32>
    %c0_309 = arith.constant 0 : index
    %c0_310 = arith.constant 0 : index
    %458 = vector.load %arg35[%c0_309, %c0_310] : memref<1x32xf32, #tpu.memory_space<vmem>>, vector<1x32xf32>
    %c0_311 = arith.constant 0 : index
    %c0_312 = arith.constant 0 : index
    %459 = vector.load %arg36[%c0_311, %c0_312] : memref<1x32xf32, #tpu.memory_space<vmem>>, vector<1x32xf32>
    %c0_313 = arith.constant 0 : index
    %c0_314 = arith.constant 0 : index
    %460 = vector.load %arg37[%c0_313, %c0_314] : memref<1x32xf32, #tpu.memory_space<vmem>>, vector<1x32xf32>
    %c0_315 = arith.constant 0 : index
    %c0_316 = arith.constant 0 : index
    %461 = vector.load %arg38[%c0_315, %c0_316] : memref<32x3xf32, #tpu.memory_space<vmem>>, vector<32x3xf32>
    %c0_317 = arith.constant 0 : index
    %c0_318 = arith.constant 0 : index
    %462 = vector.load %arg39[%c0_317, %c0_318] : memref<1x3xf32, #tpu.memory_space<vmem>>, vector<1x3xf32>
    %cst_319 = arith.constant dense<0.000000e+00> : vector<16x32xf32>
    %463 = tpu.matmul %456, %457, %cst_319 {dimension_numbers = #tpu.dot_dimension_numbers<[1], [0], [0], [1], [0, 0, 1, 1], [], []>} : vector<16x64xf32>, vector<64x32xf32>, vector<16x32xf32> -> vector<16x32xf32>
    %464 = vector.broadcast %458 : vector<1x32xf32> to vector<16x32xf32>
    %465 = arith.addf %463, %464 : vector<16x32xf32>
    %cst_320 = arith.constant dense<0.000000e+00> : vector<16xf32>
    %466 = vector.multi_reduction <add>, %465, %cst_320 [1] : vector<16x32xf32> to vector<16xf32>
    %467 = vector.shape_cast %466 : vector<16xf32> to vector<16x1xf32>
    %cst_321 = arith.constant 3.200000e+01 : f32
    %468 = vector.broadcast %cst_321 : f32 to vector<16x1xf32>
    %469 = arith.divf %467, %468 : vector<16x1xf32>
    %470 = vector.broadcast %469 : vector<16x1xf32> to vector<16x32xf32>
    %471 = arith.subf %465, %470 : vector<16x32xf32>
    %472 = arith.mulf %471, %471 : vector<16x32xf32>
    %cst_322 = arith.constant dense<0.000000e+00> : vector<16xf32>
    %473 = vector.multi_reduction <add>, %472, %cst_322 [1] : vector<16x32xf32> to vector<16xf32>
    %474 = vector.shape_cast %473 : vector<16xf32> to vector<16x1xf32>
    %cst_323 = arith.constant 3.200000e+01 : f32
    %475 = vector.broadcast %cst_323 : f32 to vector<16x1xf32>
    %476 = arith.divf %474, %475 : vector<16x1xf32>
    %cst_324 = arith.constant 9.99999974E-6 : f32
    %477 = vector.broadcast %cst_324 : f32 to vector<16x1xf32>
    %478 = arith.addf %476, %477 : vector<16x1xf32>
    %479 = math.rsqrt %478 : vector<16x1xf32>
    %480 = vector.broadcast %479 : vector<16x1xf32> to vector<16x32xf32>
    %481 = arith.mulf %471, %480 : vector<16x32xf32>
    %482 = vector.broadcast %459 : vector<1x32xf32> to vector<16x32xf32>
    %483 = arith.mulf %481, %482 : vector<16x32xf32>
    %484 = vector.broadcast %460 : vector<1x32xf32> to vector<16x32xf32>
    %485 = arith.addf %483, %484 : vector<16x32xf32>
    %cst_325 = arith.constant 0.000000e+00 : f32
    %486 = vector.broadcast %cst_325 : f32 to vector<16x32xf32>
    %487 = arith.maximumf %485, %486 : vector<16x32xf32>
    %cst_326 = arith.constant dense<0.000000e+00> : vector<16x3xf32>
    %488 = tpu.matmul %487, %461, %cst_326 {dimension_numbers = #tpu.dot_dimension_numbers<[1], [0], [0], [1], [0, 0, 1, 1], [], []>} : vector<16x32xf32>, vector<32x3xf32>, vector<16x3xf32> -> vector<16x3xf32>
    %489 = vector.broadcast %462 : vector<1x3xf32> to vector<16x3xf32>
    %490 = arith.addf %488, %489 : vector<16x3xf32>
    %c0_327 = arith.constant 0 : index
    %c0_328 = arith.constant 0 : index
    %491 = vector.load %arg40[%c0_327, %c0_328] : memref<16x3xf32, #tpu.memory_space<vmem>>, vector<16x3xf32>
    tpu.vector_store %arg40[%c0_327, %c0_328], %490 {strides = array<i32>} : memref<16x3xf32, #tpu.memory_space<vmem>>, vector<16x3xf32>,
    return
  }
}

</mosaic_0001>

<llo_original>
// kernel: denoiser_bev_forward.1
$region0: #{denoiser_bev_forward.1}
  #allocation0 [shape = 'u32[]', space=smem, size = 0x4, offset = 0x4, fixed_abs, tag = 'smem constant byte address 0x4 - core index']
  #allocation1 [shape = 'u32[144,128]{1,0:T(1,128)}', space=vmem, size = 0x12000, scoped, tag = 'internal scratch']
  #allocation2 [shape = 'f32[16,192]{1,0:T(8,128)}', space=vmem, size = 0x4000, scoped, tag = 'scratch operand']
  #allocation3 [shape = 'f32[16,64]{1,0:T(8,128)}', space=vmem, size = 0x2000, scoped, tag = 'scratch operand']
  %s0 = inlined_call_operand.smem [shape: u32[41], index: -1, kind: input, shape index: {}]
  %s1 = sld [smem:[%s0]]
  %s2 = scalar_lea.smem %s0, 1
  %s3 = sld [smem:[%s2]]
  %s4 = scalar_lea.smem %s0, 2
  %s5 = sld [smem:[%s4]]
  %s6 = scalar_lea.smem %s0, 3
  %s7 = sld [smem:[%s6]]
  %s8 = scalar_lea.smem %s0, 4
  %s9 = sld [smem:[%s8]]
  %s10 = scalar_lea.smem %s0, 5
  %s11 = sld [smem:[%s10]]
  %s12 = scalar_lea.smem %s0, 6
  %s13 = sld [smem:[%s12]]
  %s14 = scalar_lea.smem %s0, 7
  %s15 = sld [smem:[%s14]]
  %s16 = scalar_lea.smem %s0, 8
  %s17 = sld [smem:[%s16]]
  %s18 = scalar_lea.smem %s0, 9
  %s19 = sld [smem:[%s18]]
  %s20 = scalar_lea.smem %s0, 10
  %s21 = sld [smem:[%s20]]
  %s22 = scalar_lea.smem %s0, 11
  %s23 = sld [smem:[%s22]]
  %s24 = scalar_lea.smem %s0, 12
  %s25 = sld [smem:[%s24]]
  %s26 = scalar_lea.smem %s0, 13
  %s27 = sld [smem:[%s26]]
  %s28 = scalar_lea.smem %s0, 14
  %s29 = sld [smem:[%s28]]
  %s30 = scalar_lea.smem %s0, 15
  %s31 = sld [smem:[%s30]]
  %s32 = scalar_lea.smem %s0, 16
  %s33 = sld [smem:[%s32]]
  %s34 = scalar_lea.smem %s0, 17
  %s35 = sld [smem:[%s34]]
  %s36 = scalar_lea.smem %s0, 18
  %s37 = sld [smem:[%s36]]
  %s38 = scalar_lea.smem %s0, 19
  %s39 = sld [smem:[%s38]]
  %s40 = scalar_lea.smem %s0, 20
  %s41 = sld [smem:[%s40]]
  %s42 = scalar_lea.smem %s0, 21
  %s43 = sld [smem:[%s42]]
  %s44 = scalar_lea.smem %s0, 22
  %s45 = sld [smem:[%s44]]
  %s46 = scalar_lea.smem %s0, 23
  %s47 = sld [smem:[%s46]]
  %s48 = scalar_lea.smem %s0, 24
  %s49 = sld [smem:[%s48]]
  %s50 = scalar_lea.smem %s0, 25
  %s51 = sld [smem:[%s50]]
  %s52 = scalar_lea.smem %s0, 26
  %s53 = sld [smem:[%s52]]
  %s54 = scalar_lea.smem %s0, 27
  %s55 = sld [smem:[%s54]]
  %s56 = scalar_lea.smem %s0, 28
  %s57 = sld [smem:[%s56]]
  %s58 = scalar_lea.smem %s0, 29
  %s59 = sld [smem:[%s58]]
  %s60 = scalar_lea.smem %s0, 30
  %s61 = sld [smem:[%s60]]
  %s62 = scalar_lea.smem %s0, 31
  %s63 = sld [smem:[%s62]]
  %s64 = scalar_lea.smem %s0, 32
  %s65 = sld [smem:[%s64]]
  %s66 = scalar_lea.smem %s0, 33
  %s67 = sld [smem:[%s66]]
  %s68 = scalar_lea.smem %s0, 34
  %s69 = sld [smem:[%s68]]
  %s70 = scalar_lea.smem %s0, 35
  %s71 = sld [smem:[%s70]]
  %s72 = scalar_lea.smem %s0, 36
  %s73 = sld [smem:[%s72]]
  %s74 = scalar_lea.smem %s0, 37
  %s75 = sld [smem:[%s74]]
  %s76 = scalar_lea.smem %s0, 38
  %s77 = sld [smem:[%s76]]
  %s78 = scalar_lea.smem %s0, 39
  %s79 = sld [smem:[%s78]]
  %s80 = scalar_lea.smem %s0, 40
  %s81 = sld [smem:[%s80]]
  %s82 = sld [smem:[#allocation0]]
  $region170: #{denoiser_bev_forward.1} parent=0
    _
  %s84 = ssub.s32 1, %s82
  %s85 = scalar_select 0, %s84, %s82
  // Predicated region
  $region2: #{denoiser_bev_forward.1} parent=0 // pred_check
    _
  $region3: #{denoiser_bev_forward.1} parent=0 // pred_check_branch
    %87 = sbr.rel (0) target = $region5
  $region4: #{denoiser_bev_forward.1} parent=0 // pred_region
    _
  $region5: #{denoiser_bev_forward.1} parent=0 // pred_fallthru
    _
  // Predicated region
  $region6: #{denoiser_bev_forward.1} parent=0 // pred_check
    _
  $region7: #{denoiser_bev_forward.1} parent=0 // pred_check_branch
    %89 = sbr.rel (0) target = $region9
  $region8: #{denoiser_bev_forward.1} parent=0 // pred_region
    _
  $region9: #{denoiser_bev_forward.1} parent=0 // pred_fallthru
    _
  // Predicated region
  $region10: #{denoiser_bev_forward.1} parent=0 // pred_check
    _
  $region11: #{denoiser_bev_forward.1} parent=0 // pred_check_branch
    %91 = sbr.rel (0) target = $region13
  $region12: #{denoiser_bev_forward.1} parent=0 // pred_region
    _
  $region13: #{denoiser_bev_forward.1} parent=0 // pred_fallthru
    _
  // Predicated region
  $region14: #{denoiser_bev_forward.1} parent=0 // pred_check
    _
  $region15: #{denoiser_bev_forward.1} parent=0 // pred_check_branch
    %93 = sbr.rel (0) target = $region17
  $region16: #{denoiser_bev_forward.1} parent=0 // pred_region
    _
  $region17: #{denoiser_bev_forward.1} parent=0 // pred_fallthru
    _
  // Predicated region
  $region18: #{denoiser_bev_forward.1} parent=0 // pred_check
    _
  $region19: #{denoiser_bev_forward.1} parent=0 // pred_check_branch
    %95 = sbr.rel (0) target = $region21
  $region20: #{denoiser_bev_forward.1} parent=0 // pred_region
    _
  $region21: #{denoiser_bev_forward.1} parent=0 // pred_fallthru
    _
  // Predicated region
  $region22: #{denoiser_bev_forward.1} parent=0 // pred_check
    _
  $region23: #{denoiser_bev_forward.1} parent=0 // pred_check_branch
    %97 = sbr.rel (0) target = $region25
  $region24: #{denoiser_bev_forward.1} parent=0 // pred_region
    _
  $region25: #{denoiser_bev_forward.1} parent=0 // pred_fallthru
    _
  // Predicated region
  $region26: #{denoiser_bev_forward.1} parent=0 // pred_check
    _
  $region27: #{denoiser_bev_forward.1} parent=0 // pred_check_branch
    %99 = sbr.rel (0) target = $region29
  $region28: #{denoiser_bev_forward.1} parent=0 // pred_region
    _
  $region29: #{denoiser_bev_forward.1} parent=0 // pred_fallthru
    _
  // Predicated region
  $region30: #{denoiser_bev_forward.1} parent=0 // pred_check
    _
  $region31: #{denoiser_bev_forward.1} parent=0 // pred_check_branch
    %101 = sbr.rel (0) target = $region33
  $region32: #{denoiser_bev_forward.1} parent=0 // pred_region
    _
  $region33: #{denoiser_bev_forward.1} parent=0 // pred_fallthru
    _
  // Predicated region
  $region34: #{denoiser_bev_forward.1} parent=0 // pred_check
    _
  $region35: #{denoiser_bev_forward.1} parent=0 // pred_check_branch
    %103 = sbr.rel (0) target = $region37
  $region36: #{denoiser_bev_forward.1} parent=0 // pred_region
    _
  $region37: #{denoiser_bev_forward.1} parent=0 // pred_fallthru
    _
  // Predicated region
  $region38: #{denoiser_bev_forward.1} parent=0 // pred_check
    _
  $region39: #{denoiser_bev_forward.1} parent=0 // pred_check_branch
    %105 = sbr.rel (0) target = $region41
  $region40: #{denoiser_bev_forward.1} parent=0 // pred_region
    _
  $region41: #{denoiser_bev_forward.1} parent=0 // pred_fallthru
    _
  // Predicated region
  $region42: #{denoiser_bev_forward.1} parent=0 // pred_check
    _
  $region43: #{denoiser_bev_forward.1} parent=0 // pred_check_branch
    %107 = sbr.rel (0) target = $region45
  $region44: #{denoiser_bev_forward.1} parent=0 // pred_region
    _
  $region45: #{denoiser_bev_forward.1} parent=0 // pred_fallthru
    _
  // Predicated region
  $region46: #{denoiser_bev_forward.1} parent=0 // pred_check
    _
  $region47: #{denoiser_bev_forward.1} parent=0 // pred_check_branch
    %109 = sbr.rel (0) target = $region49
  $region48: #{denoiser_bev_forward.1} parent=0 // pred_region
    _
  $region49: #{denoiser_bev_forward.1} parent=0 // pred_fallthru
    _
  // Predicated region
  $region50: #{denoiser_bev_forward.1} parent=0 // pred_check
    _
  $region51: #{denoiser_bev_forward.1} parent=0 // pred_check_branch
    %111 = sbr.rel (0) target = $region53
  $region52: #{denoiser_bev_forward.1} parent=0 // pred_region
    _
  $region53: #{denoiser_bev_forward.1} parent=0 // pred_fallthru
    _
  // Predicated region
  $region54: #{denoiser_bev_forward.1} parent=0 // pred_check
    _
  $region55: #{denoiser_bev_forward.1} parent=0 // pred_check_branch
    %113 = sbr.rel (0) target = $region57
  $region56: #{denoiser_bev_forward.1} parent=0 // pred_region
    _
  $region57: #{denoiser_bev_forward.1} parent=0 // pred_fallthru
    _
  // Predicated region
  $region58: #{denoiser_bev_forward.1} parent=0 // pred_check
    _
  $region59: #{denoiser_bev_forward.1} parent=0 // pred_check_branch
    %115 = sbr.rel (0) target = $region61
  $region60: #{denoiser_bev_forward.1} parent=0 // pred_region
    _
  $region61: #{denoiser_bev_forward.1} parent=0 // pred_fallthru
    _
  // Predicated region
  $region62: #{denoiser_bev_forward.1} parent=0 // pred_check
    _
  $region63: #{denoiser_bev_forward.1} parent=0 // pred_check_branch
    %117 = sbr.rel (0) target = $region65
  $region64: #{denoiser_bev_forward.1} parent=0 // pred_region
    _
  $region65: #{denoiser_bev_forward.1} parent=0 // pred_fallthru
    _
  // Predicated region
  $region66: #{denoiser_bev_forward.1} parent=0 // pred_check
    _
  $region67: #{denoiser_bev_forward.1} parent=0 // pred_check_branch
    %119 = sbr.rel (0) target = $region69
  $region68: #{denoiser_bev_forward.1} parent=0 // pred_region
    _
  $region69: #{denoiser_bev_forward.1} parent=0 // pred_fallthru
    _
  // Predicated region
  $region70: #{denoiser_bev_forward.1} parent=0 // pred_check
    _
  $region71: #{denoiser_bev_forward.1} parent=0 // pred_check_branch
    %121 = sbr.rel (0) target = $region73
  $region72: #{denoiser_bev_forward.1} parent=0 // pred_region
    _
  $region73: #{denoiser_bev_forward.1} parent=0 // pred_fallthru
    _
  // Predicated region
  $region74: #{denoiser_bev_forward.1} parent=0 // pred_check
    _
  $region75: #{denoiser_bev_forward.1} parent=0 // pred_check_branch
    %123 = sbr.rel (0) target = $region77
  $region76: #{denoiser_bev_forward.1} parent=0 // pred_region
    _
  $region77: #{denoiser_bev_forward.1} parent=0 // pred_fallthru
    _
  // Predicated region
  $region78: #{denoiser_bev_forward.1} parent=0 // pred_check
    _
  $region79: #{denoiser_bev_forward.1} parent=0 // pred_check_branch
    %125 = sbr.rel (0) target = $region81
  $region80: #{denoiser_bev_forward.1} parent=0 // pred_region
    _
  $region81: #{denoiser_bev_forward.1} parent=0 // pred_fallthru
    _
  // Predicated region
  $region82: #{denoiser_bev_forward.1} parent=0 // pred_check
    _
  $region83: #{denoiser_bev_forward.1} parent=0 // pred_check_branch
    %127 = sbr.rel (0) target = $region85
  $region84: #{denoiser_bev_forward.1} parent=0 // pred_region
    _
  $region85: #{denoiser_bev_forward.1} parent=0 // pred_fallthru
    _
  // Predicated region
  $region86: #{denoiser_bev_forward.1} parent=0 // pred_check
    _
  $region87: #{denoiser_bev_forward.1} parent=0 // pred_check_branch
    %129 = sbr.rel (0) target = $region89
  $region88: #{denoiser_bev_forward.1} parent=0 // pred_region
    _
  $region89: #{denoiser_bev_forward.1} parent=0 // pred_fallthru
    _
  // Predicated region
  $region90: #{denoiser_bev_forward.1} parent=0 // pred_check
    _
  $region91: #{denoiser_bev_forward.1} parent=0 // pred_check_branch
    %131 = sbr.rel (0) target = $region93
  $region92: #{denoiser_bev_forward.1} parent=0 // pred_region
    _
  $region93: #{denoiser_bev_forward.1} parent=0 // pred_fallthru
    _
  // Predicated region
  $region94: #{denoiser_bev_forward.1} parent=0 // pred_check
    _
  $region95: #{denoiser_bev_forward.1} parent=0 // pred_check_branch
    %133 = sbr.rel (0) target = $region97
  $region96: #{denoiser_bev_forward.1} parent=0 // pred_region
    _
  $region97: #{denoiser_bev_forward.1} parent=0 // pred_fallthru
    _
  // Predicated region
  $region98: #{denoiser_bev_forward.1} parent=0 // pred_check
    _
  $region99: #{denoiser_bev_forward.1} parent=0 // pred_check_branch
    %135 = sbr.rel (0) target = $region101
  $region100: #{denoiser_bev_forward.1} parent=0 // pred_region
    _
  $region101: #{denoiser_bev_forward.1} parent=0 // pred_fallthru
    _
  // Predicated region
  $region102: #{denoiser_bev_forward.1} parent=0 // pred_check
    _
  $region103: #{denoiser_bev_forward.1} parent=0 // pred_check_branch
    %137 = sbr.rel (0) target = $region105
  $region104: #{denoiser_bev_forward.1} parent=0 // pred_region
    _
  $region105: #{denoiser_bev_forward.1} parent=0 // pred_fallthru
    _
  // Predicated region
  $region106: #{denoiser_bev_forward.1} parent=0 // pred_check
    _
  $region107: #{denoiser_bev_forward.1} parent=0 // pred_check_branch
    %139 = sbr.rel (0) target = $region109
  $region108: #{denoiser_bev_forward.1} parent=0 // pred_region
    _
  $region109: #{denoiser_bev_forward.1} parent=0 // pred_fallthru
    _
  // Predicated region
  $region110: #{denoiser_bev_forward.1} parent=0 // pred_check
    _
  $region111: #{denoiser_bev_forward.1} parent=0 // pred_check_branch
    %141 = sbr.rel (0) target = $region113
  $region112: #{denoiser_bev_forward.1} parent=0 // pred_region
    _
  $region113: #{denoiser_bev_forward.1} parent=0 // pred_fallthru
    _
  // Predicated region
  $region114: #{denoiser_bev_forward.1} parent=0 // pred_check
    _
  $region115: #{denoiser_bev_forward.1} parent=0 // pred_check_branch
    %143 = sbr.rel (0) target = $region117
  $region116: #{denoiser_bev_forward.1} parent=0 // pred_region
    _
  $region117: #{denoiser_bev_forward.1} parent=0 // pred_fallthru
    _
  // Predicated region
  $region118: #{denoiser_bev_forward.1} parent=0 // pred_check
    _
  $region119: #{denoiser_bev_forward.1} parent=0 // pred_check_branch
    %145 = sbr.rel (0) target = $region121
  $region120: #{denoiser_bev_forward.1} parent=0 // pred_region
    _
  $region121: #{denoiser_bev_forward.1} parent=0 // pred_fallthru
    _
  // Predicated region
  $region122: #{denoiser_bev_forward.1} parent=0 // pred_check
    _
  $region123: #{denoiser_bev_forward.1} parent=0 // pred_check_branch
    %147 = sbr.rel (0) target = $region125
  $region124: #{denoiser_bev_forward.1} parent=0 // pred_region
    _
  $region125: #{denoiser_bev_forward.1} parent=0 // pred_fallthru
    _
  // Predicated region
  $region126: #{denoiser_bev_forward.1} parent=0 // pred_check
    _
  $region127: #{denoiser_bev_forward.1} parent=0 // pred_check_branch
    %149 = sbr.rel (0) target = $region129
  $region128: #{denoiser_bev_forward.1} parent=0 // pred_region
    _
  $region129: #{denoiser_bev_forward.1} parent=0 // pred_fallthru
    _
  // Predicated region
  $region130: #{denoiser_bev_forward.1} parent=0 // pred_check
    _
  $region131: #{denoiser_bev_forward.1} parent=0 // pred_check_branch
    %151 = sbr.rel (0) target = $region133
  $region132: #{denoiser_bev_forward.1} parent=0 // pred_region
    _
  $region133: #{denoiser_bev_forward.1} parent=0 // pred_fallthru
    _
  // Predicated region
  $region134: #{denoiser_bev_forward.1} parent=0 // pred_check
    _
  $region135: #{denoiser_bev_forward.1} parent=0 // pred_check_branch
    %153 = sbr.rel (0) target = $region137
  $region136: #{denoiser_bev_forward.1} parent=0 // pred_region
    _
  $region137: #{denoiser_bev_forward.1} parent=0 // pred_fallthru
    _
  // Predicated region
  $region138: #{denoiser_bev_forward.1} parent=0 // pred_check
    _
  $region139: #{denoiser_bev_forward.1} parent=0 // pred_check_branch
    %155 = sbr.rel (0) target = $region141
  $region140: #{denoiser_bev_forward.1} parent=0 // pred_region
    _
  $region141: #{denoiser_bev_forward.1} parent=0 // pred_fallthru
    _
  // Predicated region
  $region142: #{denoiser_bev_forward.1} parent=0 // pred_check
    _
  $region143: #{denoiser_bev_forward.1} parent=0 // pred_check_branch
    %157 = sbr.rel (0) target = $region145
  $region144: #{denoiser_bev_forward.1} parent=0 // pred_region
    _
  $region145: #{denoiser_bev_forward.1} parent=0 // pred_fallthru
    _
  // Predicated region
  $region146: #{denoiser_bev_forward.1} parent=0 // pred_check
    _
  $region147: #{denoiser_bev_forward.1} parent=0 // pred_check_branch
    %159 = sbr.rel (0) target = $region149
  $region148: #{denoiser_bev_forward.1} parent=0 // pred_region
    _
  $region149: #{denoiser_bev_forward.1} parent=0 // pred_fallthru
    _
  // Predicated region
  $region150: #{denoiser_bev_forward.1} parent=0 // pred_check
    _
  $region151: #{denoiser_bev_forward.1} parent=0 // pred_check_branch
    %161 = sbr.rel (0) target = $region153
  $region152: #{denoiser_bev_forward.1} parent=0 // pred_region
    _
  $region153: #{denoiser_bev_forward.1} parent=0 // pred_fallthru
    _
  // Predicated region
  $region154: #{denoiser_bev_forward.1} parent=0 // pred_check
    _
  $region155: #{denoiser_bev_forward.1} parent=0 // pred_check_branch
    %163 = sbr.rel (0) target = $region157
  $region156: #{denoiser_bev_forward.1} parent=0 // pred_region
    _
  $region157: #{denoiser_bev_forward.1} parent=0 // pred_fallthru
    _
  // Predicated region
  $region158: #{denoiser_bev_forward.1} parent=0 // pred_check
    _
  $region159: #{denoiser_bev_forward.1} parent=0 // pred_check_branch
    %165 = sbr.rel (0) target = $region161
  $region160: #{denoiser_bev_forward.1} parent=0 // pred_region
    _
  $region161: #{denoiser_bev_forward.1} parent=0 // pred_fallthru
    _
  %v166 = vld [vmem:[%s1] sm:$0xff]
  %v167 = vld [vmem:[%s1 + $0x8] sm:$0xff]
  %v168 = vld [vmem:[%s3] sm:$0xff]
  %v169 = vld [vmem:[%s3 + $0x8] sm:$0xff]
  %v170 = vld [vmem:[%s5] sm:$0x3]
  %v171 = vld [vmem:[%s7] sm:$0xff]
  %v172 = vld [vmem:[%s7 + $0x8] sm:$0xff]
  %v173 = vld [vmem:[%s7 + $0x10] sm:$0xff]
  %v174 = vld [vmem:[%s7 + $0x18] sm:$0xff]
  %v175 = vld [vmem:[%s9] sm:$0x1]
  %v176 = vld [vmem:[%s11] sm:$0xff]
  %v177 = vld [vmem:[%s11 + $0x8] sm:$0xff]
  %v178 = vld [vmem:[%s13] sm:$0x1]
  %v179 = vld [vmem:[%s15] sm:$0xff]
  %v180 = vld [vmem:[%s15 + $0x8] sm:$0xff]
  %v181 = vld [vmem:[%s15 + $0x10] sm:$0xff]
  %v182 = vld [vmem:[%s15 + $0x18] sm:$0xff]
  %v183 = vld [vmem:[%s15 + $0x20] sm:$0xff]
  %v184 = vld [vmem:[%s15 + $0x28] sm:$0xff]
  %v185 = vld [vmem:[%s15 + $0x30] sm:$0xff]
  %v186 = vld [vmem:[%s15 + $0x38] sm:$0xf]
  %v187 = vld [vmem:[%s17] sm:$0xff]
  %v188 = vld [vmem:[%s17 + $0x8] sm:$0xff]
  %v189 = vld [vmem:[%s19] sm:$0x1]
  %v191 = vlaneseq
  %v192 = vshrl.u32 %v191, 7
  %v193 = vsub.s32 0, %v192
  %v194 = vrot.slane %v175, %v193
  %vm196 = vcmask 261120
  %v198 = vsel %vm196, %v170, 0
  %200 = vmatprep.subr.mxu0 0.0
  %201 = vmatpush1.msra.mxu0 %v171
  %202 = vmatprep.subr.mxu0 0.0
  %203 = vmatpush1.msra.mxu0 %v172
  %204 = vmatprep.subr.mxu0 0.0
  %205 = vmatpush1.msra.mxu0 %v173
  %206 = vmatprep.subr.mxu0 0.0
  %207 = vmatpush1.msra.mxu0 %v174
  %208 = vmatprep.subr.mxu0 0.0
  %209 = vmatpush1.msra.mxu0 0.0
  %210 = vmatprep.subr.mxu0 0.0
  %211 = vmatpush1.msra.mxu0 0.0
  %212 = vmatprep.subr.mxu0 0.0
  %213 = vmatpush1.msra.mxu0 0.0
  %214 = vmatprep.subr.mxu0 0.0
  %215 = vmatpush1.msra.mxu0 0.0
  %216 = vmatprep.subr.mxu0 0.0
  %217 = vmatpush1.msra.mxu0 0.0
  %218 = vmatprep.subr.mxu0 0.0
  %219 = vmatpush1.msra.mxu0 0.0
  %220 = vmatprep.subr.mxu0 0.0
  %221 = vmatpush1.msra.mxu0 0.0
  %222 = vmatprep.subr.mxu0 0.0
  %223 = vmatpush1.msra.mxu0 0.0
  %224 = vmatprep.subr.mxu0 0.0
  %225 = vmatpush1.msra.mxu0 0.0
  %226 = vmatprep.subr.mxu0 0.0
  %227 = vmatpush1.msra.mxu0 0.0
  %228 = vmatprep.subr.mxu0 0.0
  %229 = vmatpush1.msra.mxu0 0.0
  %230 = vmatprep.subr.mxu0 0.0
  %231 = vmatpush1.msra.mxu0 0.0
  %232 = vmatprep.subr.mxu0 0.0
  %233 = vmatpush1.msra.mxu0 0.0
  %234 = vmatprep.subr.mxu0 0.0
  %235 = vmatpush1.msra.mxu0 0.0
  %236 = vmatprep.subr.mxu0 0.0
  %237 = vmatpush1.msra.mxu0 0.0
  %238 = vmatprep.subr.mxu0 0.0
  %239 = vmatpush1.msra.mxu0 0.0
  %240 = vmatprep.subr.mxu0 0.0
  %241 = vmatpush1.msra.mxu0 0.0
  %242 = vmatprep.subr.mxu0 0.0
  %243 = vmatpush1.msra.mxu0 0.0
  %244 = vmatprep.subr.mxu0 0.0
  %245 = vmatpush1.msra.mxu0 0.0
  %246 = vmatprep.subr.mxu0 0.0
  %247 = vmatpush1.msra.mxu0 0.0
  %248 = vmatprep.subr.mxu0 0.0
  %249 = vmatpush1.msra.mxu0 0.0
  %250 = vmatprep.subr.mxu0 0.0
  %251 = vmatpush1.msra.mxu0 0.0
  %252 = vmatprep.subr.mxu0 0.0
  %253 = vmatpush1.msra.mxu0 0.0
  %254 = vmatprep.subr.mxu0 0.0
  %255 = vmatpush1.msra.mxu0 0.0
  %256 = vmatprep.subr.mxu0 0.0
  %257 = vmatpush1.msra.mxu0 0.0
  %258 = vmatprep.subr.mxu0 0.0
  %259 = vmatpush1.msra.mxu0 0.0
  %260 = vmatprep.subr.mxu0 0.0
  %261 = vmatpush1.msra.mxu0 0.0
  %262 = vmatprep.subr.mxu0 0.0
  %263 = vmatpush1.msra.mxu0 0.0
  %264 = vmatprep.mubr.f32.mxu0 0.0
  %265 = vmatmul.mubr.f32.gmra.mrb[0].mxu0 %v198
  %v266 = vpop.f32.mrb[0].mxu0
  %v267 = vadd.f32 %v194, %v266
  %v268 = vpop.f32.mrb[0].mxu0
  %269 = vdwg.mxu0
  %v270 = vsub.f32 0.0, %v267
  %v271 = vmul.f32 %v270, 1.442695
  %v272 = vpow.pop %v271
  %v273 = vadd.f32 %v272, 1.0
  %v274 = vrcp.pop %v273
  %v275 = vmul.f32 %v267, %v274
  %v277 = vlaneseq
  %v278 = vshrl.u32 %v277, 7
  %v279 = vsub.s32 0, %v278
  %v280 = vrot.slane %v178, %v279
  %vm282 = vcmask 130048
  %v284 = vsel %vm282, %v275, 0
  %286 = vmatprep.subr.mxu0 0.0
  %287 = vmatpush1.msra.mxu0 %v176
  %288 = vmatprep.subr.mxu0 0.0
  %289 = vmatpush1.msra.mxu0 %v177
  %290 = vmatprep.subr.mxu0 0.0
  %291 = vmatpush1.msra.mxu0 0.0
  %292 = vmatprep.subr.mxu0 0.0
  %293 = vmatpush1.msra.mxu0 0.0
  %294 = vmatprep.subr.mxu0 0.0
  %295 = vmatpush1.msra.mxu0 0.0
  %296 = vmatprep.subr.mxu0 0.0
  %297 = vmatpush1.msra.mxu0 0.0
  %298 = vmatprep.subr.mxu0 0.0
  %299 = vmatpush1.msra.mxu0 0.0
  %300 = vmatprep.subr.mxu0 0.0
  %301 = vmatpush1.msra.mxu0 0.0
  %302 = vmatprep.subr.mxu0 0.0
  %303 = vmatpush1.msra.mxu0 0.0
  %304 = vmatprep.subr.mxu0 0.0
  %305 = vmatpush1.msra.mxu0 0.0
  %306 = vmatprep.subr.mxu0 0.0
  %307 = vmatpush1.msra.mxu0 0.0
  %308 = vmatprep.subr.mxu0 0.0
  %309 = vmatpush1.msra.mxu0 0.0
  %310 = vmatprep.subr.mxu0 0.0
  %311 = vmatpush1.msra.mxu0 0.0
  %312 = vmatprep.subr.mxu0 0.0
  %313 = vmatpush1.msra.mxu0 0.0
  %314 = vmatprep.subr.mxu0 0.0
  %315 = vmatpush1.msra.mxu0 0.0
  %316 = vmatprep.subr.mxu0 0.0
  %317 = vmatpush1.msra.mxu0 0.0
  %318 = vmatprep.subr.mxu0 0.0
  %319 = vmatpush1.msra.mxu0 0.0
  %320 = vmatprep.subr.mxu0 0.0
  %321 = vmatpush1.msra.mxu0 0.0
  %322 = vmatprep.subr.mxu0 0.0
  %323 = vmatpush1.msra.mxu0 0.0
  %324 = vmatprep.subr.mxu0 0.0
  %325 = vmatpush1.msra.mxu0 0.0
  %326 = vmatprep.subr.mxu0 0.0
  %327 = vmatpush1.msra.mxu0 0.0
  %328 = vmatprep.subr.mxu0 0.0
  %329 = vmatpush1.msra.mxu0 0.0
  %330 = vmatprep.subr.mxu0 0.0
  %331 = vmatpush1.msra.mxu0 0.0
  %332 = vmatprep.subr.mxu0 0.0
  %333 = vmatpush1.msra.mxu0 0.0
  %334 = vmatprep.subr.mxu0 0.0
  %335 = vmatpush1.msra.mxu0 0.0
  %336 = vmatprep.subr.mxu0 0.0
  %337 = vmatpush1.msra.mxu0 0.0
  %338 = vmatprep.subr.mxu0 0.0
  %339 = vmatpush1.msra.mxu0 0.0
  %340 = vmatprep.subr.mxu0 0.0
  %341 = vmatpush1.msra.mxu0 0.0
  %342 = vmatprep.subr.mxu0 0.0
  %343 = vmatpush1.msra.mxu0 0.0
  %344 = vmatprep.subr.mxu0 0.0
  %345 = vmatpush1.msra.mxu0 0.0
  %346 = vmatprep.subr.mxu0 0.0
  %347 = vmatpush1.msra.mxu0 0.0
  %348 = vmatprep.subr.mxu0 0.0
  %349 = vmatpush1.msra.mxu0 0.0
  %350 = vmatprep.mubr.f32.mxu0 0.0
  %351 = vmatmul.mubr.f32.gmra.mrb[0].mxu0 %v284
  %v352 = vpop.f32.mrb[0].mxu0
  %v353 = vadd.f32 %v280, %v352
  %v354 = vpop.f32.mrb[0].mxu0
  %355 = vdwg.mxu0
  %v357 = vsel %vm282, %v353, 0
  %359 = vmatprep.subr.mxu0 0.0
  %360 = vmatpush1.msra.mxu0 %v187
  %361 = vmatprep.subr.mxu0 0.0
  %362 = vmatpush1.msra.mxu0 %v188
  %363 = vmatprep.subr.mxu0 0.0
  %364 = vmatpush1.msra.mxu0 0.0
  %365 = vmatprep.subr.mxu0 0.0
  %366 = vmatpush1.msra.mxu0 0.0
  %367 = vmatprep.subr.mxu0 0.0
  %368 = vmatpush1.msra.mxu0 0.0
  %369 = vmatprep.subr.mxu0 0.0
  %370 = vmatpush1.msra.mxu0 0.0
  %371 = vmatprep.subr.mxu0 0.0
  %372 = vmatpush1.msra.mxu0 0.0
  %373 = vmatprep.subr.mxu0 0.0
  %374 = vmatpush1.msra.mxu0 0.0
  %375 = vmatprep.subr.mxu0 0.0
  %376 = vmatpush1.msra.mxu0 0.0
  %377 = vmatprep.subr.mxu0 0.0
  %378 = vmatpush1.msra.mxu0 0.0
  %379 = vmatprep.subr.mxu0 0.0
  %380 = vmatpush1.msra.mxu0 0.0
  %381 = vmatprep.subr.mxu0 0.0
  %382 = vmatpush1.msra.mxu0 0.0
  %383 = vmatprep.subr.mxu0 0.0
  %384 = vmatpush1.msra.mxu0 0.0
  %385 = vmatprep.subr.mxu0 0.0
  %386 = vmatpush1.msra.mxu0 0.0
  %387 = vmatprep.subr.mxu0 0.0
  %388 = vmatpush1.msra.mxu0 0.0
  %389 = vmatprep.subr.mxu0 0.0
  %390 = vmatpush1.msra.mxu0 0.0
  %391 = vmatprep.subr.mxu0 0.0
  %392 = vmatpush1.msra.mxu0 0.0
  %393 = vmatprep.subr.mxu0 0.0
  %394 = vmatpush1.msra.mxu0 0.0
  %395 = vmatprep.subr.mxu0 0.0
  %396 = vmatpush1.msra.mxu0 0.0
  %397 = vmatprep.subr.mxu0 0.0
  %398 = vmatpush1.msra.mxu0 0.0
  %399 = vmatprep.subr.mxu0 0.0
  %400 = vmatpush1.msra.mxu0 0.0
  %401 = vmatprep.subr.mxu0 0.0
  %402 = vmatpush1.msra.mxu0 0.0
  %403 = vmatprep.subr.mxu0 0.0
  %404 = vmatpush1.msra.mxu0 0.0
  %405 = vmatprep.subr.mxu0 0.0
  %406 = vmatpush1.msra.mxu0 0.0
  %407 = vmatprep.subr.mxu0 0.0
  %408 = vmatpush1.msra.mxu0 0.0
  %409 = vmatprep.subr.mxu0 0.0
  %410 = vmatpush1.msra.mxu0 0.0
  %411 = vmatprep.subr.mxu0 0.0
  %412 = vmatpush1.msra.mxu0 0.0
  %413 = vmatprep.subr.mxu0 0.0
  %414 = vmatpush1.msra.mxu0 0.0
  %415 = vmatprep.subr.mxu0 0.0
  %416 = vmatpush1.msra.mxu0 0.0
  %417 = vmatprep.subr.mxu0 0.0
  %418 = vmatpush1.msra.mxu0 0.0
  %419 = vmatprep.subr.mxu0 0.0
  %420 = vmatpush1.msra.mxu0 0.0
  %421 = vmatprep.subr.mxu0 0.0
  %422 = vmatpush1.msra.mxu0 0.0
  %423 = vmatprep.mubr.f32.mxu0 0.0
  %424 = vmatmul.mubr.f32.gmra.mrb[0].mxu0 %v357
  %v425 = vpop.f32.mrb[0].mxu0
  %v426 = vadd.f32 0.0, %v425
  %v427 = vpop.f32.mrb[0].mxu0
  %428 = vdwg.mxu0
  %vm429 = vcmask 15360
  %v431 = vsel %vm429, %v168, 0
  %v434 = vsel %vm429, %v169, 0
  %vm436 = vcmask 1041408
  %v438 = vsel %vm436, %v426, 0
  %440 = vmatprep.subr.mxu0 0.0
  %441 = vmatpush1.msra.mxu0 %v438
  %442 = vmatprep.subr.mxu0 0.0
  %443 = vmatpush1.msra.mxu0 0.0
  %444 = vmatprep.subr.mxu0 0.0
  %445 = vmatpush1.msra.mxu0 0.0
  %446 = vmatprep.subr.mxu0 0.0
  %447 = vmatpush1.msra.mxu0 0.0
  %448 = vmatprep.subr.mxu0 0.0
  %449 = vmatpush1.msra.mxu0 0.0
  %450 = vmatprep.subr.mxu0 0.0
  %451 = vmatpush1.msra.mxu0 0.0
  %452 = vmatprep.subr.mxu0 0.0
  %453 = vmatpush1.msra.mxu0 0.0
  %454 = vmatprep.subr.mxu0 0.0
  %455 = vmatpush1.msra.mxu0 0.0
  %456 = vmatprep.subr.mxu0 0.0
  %457 = vmatpush1.msra.mxu0 0.0
  %458 = vmatprep.subr.mxu0 0.0
  %459 = vmatpush1.msra.mxu0 0.0
  %460 = vmatprep.subr.mxu0 0.0
  %461 = vmatpush1.msra.mxu0 0.0
  %462 = vmatprep.subr.mxu0 0.0
  %463 = vmatpush1.msra.mxu0 0.0
  %464 = vmatprep.subr.mxu0 0.0
  %465 = vmatpush1.msra.mxu0 0.0
  %466 = vmatprep.subr.mxu0 0.0
  %467 = vmatpush1.msra.mxu0 0.0
  %468 = vmatprep.subr.mxu0 0.0
  %469 = vmatpush1.msra.mxu0 0.0
  %470 = vmatprep.subr.mxu0 0.0
  %471 = vmatpush1.msra.mxu0 0.0
  %472 = vmatprep.subr.mxu0 0.0
  %473 = vmatpush1.msra.mxu0 0.0
  %474 = vmatprep.subr.mxu0 0.0
  %475 = vmatpush1.msra.mxu0 0.0
  %476 = vmatprep.subr.mxu0 0.0
  %477 = vmatpush1.msra.mxu0 0.0
  %478 = vmatprep.subr.mxu0 0.0
  %479 = vmatpush1.msra.mxu0 0.0
  %480 = vmatprep.subr.mxu0 0.0
  %481 = vmatpush1.msra.mxu0 0.0
  %482 = vmatprep.subr.mxu0 0.0
  %483 = vmatpush1.msra.mxu0 0.0
  %484 = vmatprep.subr.mxu0 0.0
  %485 = vmatpush1.msra.mxu0 0.0
  %486 = vmatprep.subr.mxu0 0.0
  %487 = vmatpush1.msra.mxu0 0.0
  %488 = vmatprep.subr.mxu0 0.0
  %489 = vmatpush1.msra.mxu0 0.0
  %490 = vmatprep.subr.mxu0 0.0
  %491 = vmatpush1.msra.mxu0 0.0
  %492 = vmatprep.subr.mxu0 0.0
  %493 = vmatpush1.msra.mxu0 0.0
  %494 = vmatprep.subr.mxu0 0.0
  %495 = vmatpush1.msra.mxu0 0.0
  %496 = vmatprep.subr.mxu0 0.0
  %497 = vmatpush1.msra.mxu0 0.0
  %498 = vmatprep.subr.mxu0 0.0
  %499 = vmatpush1.msra.mxu0 0.0
  %500 = vmatprep.subr.mxu0 0.0
  %501 = vmatpush1.msra.mxu0 0.0
  %502 = vmatprep.subr.mxu0 0.0
  %503 = vmatpush1.msra.mxu0 0.0
  %504 = vmatprep.mubr.f32.mxu0 0.0
  %505 = vmatmul.mubr.f32.gmra.mrb[0].mxu0 %v431
  %v506 = vpop.f32.mrb[0].mxu0
  %v507 = vadd.f32 0.0, %v506
  %v508 = vpop.f32.mrb[0].mxu0
  %509 = vmatprep.mubr.f32.mxu0 0.0
  %510 = vmatmul.mubr.f32.gmra.mrb[0].mxu0 %v434
  %v511 = vpop.f32.mrb[0].mxu0
  %v512 = vadd.f32 0.0, %v511
  %v513 = vpop.f32.mrb[0].mxu0
  %514 = vdwg.mxu0
  %vm515 = vcmask 490496
  %v517 = vsel %vm515, %v166, 0
  %v520 = vsel %vm515, %v167, 0
  %vm522 = vcmask 1043456
  %v524 = vsel %vm522, %v186, 0
  %526 = vmatprep.subr.mxu0 0.0
  %527 = vmatpush1.msra.mxu0 %v179
  %528 = vmatprep.subr.mxu0 0.0
  %529 = vmatpush1.msra.mxu0 %v180
  %530 = vmatprep.subr.mxu0 0.0
  %531 = vmatpush1.msra.mxu0 %v181
  %532 = vmatprep.subr.mxu0 0.0
  %533 = vmatpush1.msra.mxu0 %v182
  %534 = vmatprep.subr.mxu0 0.0
  %535 = vmatpush1.msra.mxu0 %v183
  %536 = vmatprep.subr.mxu0 0.0
  %537 = vmatpush1.msra.mxu0 %v184
  %538 = vmatprep.subr.mxu0 0.0
  %539 = vmatpush1.msra.mxu0 %v185
  %540 = vmatprep.subr.mxu0 0.0
  %541 = vmatpush1.msra.mxu0 %v524
  %542 = vmatprep.subr.mxu0 0.0
  %543 = vmatpush1.msra.mxu0 0.0
  %544 = vmatprep.subr.mxu0 0.0
  %545 = vmatpush1.msra.mxu0 0.0
  %546 = vmatprep.subr.mxu0 0.0
  %547 = vmatpush1.msra.mxu0 0.0
  %548 = vmatprep.subr.mxu0 0.0
  %549 = vmatpush1.msra.mxu0 0.0
  %550 = vmatprep.subr.mxu0 0.0
  %551 = vmatpush1.msra.mxu0 0.0
  %552 = vmatprep.subr.mxu0 0.0
  %553 = vmatpush1.msra.mxu0 0.0
  %554 = vmatprep.subr.mxu0 0.0
  %555 = vmatpush1.msra.mxu0 0.0
  %556 = vmatprep.subr.mxu0 0.0
  %557 = vmatpush1.msra.mxu0 0.0
  %558 = vmatprep.subr.mxu0 0.0
  %559 = vmatpush1.msra.mxu0 0.0
  %560 = vmatprep.subr.mxu0 0.0
  %561 = vmatpush1.msra.mxu0 0.0
  %562 = vmatprep.subr.mxu0 0.0
  %563 = vmatpush1.msra.mxu0 0.0
  %564 = vmatprep.subr.mxu0 0.0
  %565 = vmatpush1.msra.mxu0 0.0
  %566 = vmatprep.subr.mxu0 0.0
  %567 = vmatpush1.msra.mxu0 0.0
  %568 = vmatprep.subr.mxu0 0.0
  %569 = vmatpush1.msra.mxu0 0.0
  %570 = vmatprep.subr.mxu0 0.0
  %571 = vmatpush1.msra.mxu0 0.0
  %572 = vmatprep.subr.mxu0 0.0
  %573 = vmatpush1.msra.mxu0 0.0
  %574 = vmatprep.subr.mxu0 0.0
  %575 = vmatpush1.msra.mxu0 0.0
  %576 = vmatprep.subr.mxu0 0.0
  %577 = vmatpush1.msra.mxu0 0.0
  %578 = vmatprep.subr.mxu0 0.0
  %579 = vmatpush1.msra.mxu0 0.0
  %580 = vmatprep.subr.mxu0 0.0
  %581 = vmatpush1.msra.mxu0 0.0
  %582 = vmatprep.subr.mxu0 0.0
  %583 = vmatpush1.msra.mxu0 0.0
  %584 = vmatprep.subr.mxu0 0.0
  %585 = vmatpush1.msra.mxu0 0.0
  %586 = vmatprep.subr.mxu0 0.0
  %587 = vmatpush1.msra.mxu0 0.0
  %588 = vmatprep.subr.mxu0 0.0
  %589 = vmatpush1.msra.mxu0 0.0
  %590 = vmatprep.mubr.f32.mxu0 0.0
  %591 = vmatmul.mubr.f32.gmra.mrb[0].mxu0 %v517
  %v592 = vpop.f32.mrb[0].mxu0
  %v593 = vadd.f32 %v507, %v592
  %v594 = vpop.f32.mrb[0].mxu0
  %595 = vmatprep.mubr.f32.mxu0 0.0
  %596 = vmatmul.mubr.f32.gmra.mrb[0].mxu0 %v520
  %v597 = vpop.f32.mrb[0].mxu0
  %v598 = vadd.f32 %v512, %v597
  %v599 = vpop.f32.mrb[0].mxu0
  %600 = vdwg.mxu0
  %v602 = vlaneseq
  %v603 = vshrl.u32 %v602, 7
  %v604 = vsub.s32 0, %v603
  %v605 = vrot.slane %v189, %v604
  %v607 = vadd.f32 %v593, %v605
  %v608 = vadd.f32 %v598, %v605
  %v609 = vld [vmem:[%s21] sm:$0xff]
  %v610 = vld [vmem:[%s21 + $0x8] sm:$0xff]
  %v611 = vld [vmem:[%s21 + $0x10] sm:$0xff]
  %v612 = vld [vmem:[%s21 + $0x18] sm:$0xff]
  %v613 = vld [vmem:[%s21 + $0x20] sm:$0xff]
  %v614 = vld [vmem:[%s21 + $0x28] sm:$0xff]
  %v615 = vld [vmem:[%s21 + $0x30] sm:$0xff]
  %v616 = vld [vmem:[%s21 + $0x38] sm:$0xff]
  %v617 = vld [vmem:[%s21 + $0x40] sm:$0xff]
  %v618 = vld [vmem:[%s21 + $0x48] sm:$0xff]
  %v619 = vld [vmem:[%s21 + $0x50] sm:$0xff]
  %v620 = vld [vmem:[%s21 + $0x58] sm:$0xff]
  %v621 = vld [vmem:[%s21 + $0x60] sm:$0xff]
  %v622 = vld [vmem:[%s21 + $0x68] sm:$0xff]
  %v623 = vld [vmem:[%s21 + $0x70] sm:$0xff]
  %v624 = vld [vmem:[%s21 + $0x78] sm:$0xff]
  %v625 = vld [vmem:[%s23] sm:$0x3]
  %v626 = vld [vmem:[%s25] sm:$0xff]
  %v627 = vld [vmem:[%s25 + $0x8] sm:$0xff]
  %v628 = vld [vmem:[%s25 + $0x10] sm:$0xff]
  %v629 = vld [vmem:[%s25 + $0x18] sm:$0xff]
  %v630 = vld [vmem:[%s25 + $0x20] sm:$0xff]
  %v631 = vld [vmem:[%s25 + $0x28] sm:$0xff]
  %v632 = vld [vmem:[%s25 + $0x30] sm:$0xff]
  %v633 = vld [vmem:[%s25 + $0x38] sm:$0xff]
  %v634 = vld [vmem:[%s27] sm:$0x1]
  %v635 = vld [vmem:[%s29] sm:$0xff]
  %v636 = vld [vmem:[%s29 + $0x8] sm:$0xff]
  %v637 = vld [vmem:[%s29 + $0x10] sm:$0xff]
  %v638 = vld [vmem:[%s29 + $0x18] sm:$0xff]
  %v639 = vld [vmem:[%s29 + $0x20] sm:$0xff]
  %v640 = vld [vmem:[%s29 + $0x28] sm:$0xff]
  %v641 = vld [vmem:[%s29 + $0x30] sm:$0xff]
  %v642 = vld [vmem:[%s29 + $0x38] sm:$0xff]
  %v643 = vld [vmem:[%s31] sm:$0x1]
  %v644 = vld [vmem:[%s33] sm:$0xff]
  %v645 = vld [vmem:[%s33 + $0x8] sm:$0xff]
  %v646 = vld [vmem:[%s33 + $0x10] sm:$0xff]
  %v647 = vld [vmem:[%s33 + $0x18] sm:$0xff]
  %v648 = vld [vmem:[%s33 + $0x20] sm:$0xff]
  %v649 = vld [vmem:[%s33 + $0x28] sm:$0xff]
  %v650 = vld [vmem:[%s33 + $0x30] sm:$0xff]
  %v651 = vld [vmem:[%s33 + $0x38] sm:$0xff]
  %v652 = vld [vmem:[%s33 + $0x40] sm:$0xff]
  %v653 = vld [vmem:[%s33 + $0x48] sm:$0xff]
  %v654 = vld [vmem:[%s33 + $0x50] sm:$0xff]
  %v655 = vld [vmem:[%s33 + $0x58] sm:$0xff]
  %v656 = vld [vmem:[%s33 + $0x60] sm:$0xff]
  %v657 = vld [vmem:[%s33 + $0x68] sm:$0xff]
  %v658 = vld [vmem:[%s33 + $0x70] sm:$0xff]
  %v659 = vld [vmem:[%s33 + $0x78] sm:$0xff]
  %v660 = vld [vmem:[%s35] sm:$0x1]
  %v661 = vld [vmem:[%s37] sm:$0x1]
  %v662 = vld [vmem:[%s39] sm:$0x1]
  %v663 = vld [vmem:[%s41] sm:$0x1]
  %v664 = vld [vmem:[%s43] sm:$0x1]
  %v666 = vlaneseq
  %v667 = vshrl.u32 %v666, 7
  %v668 = vsub.s32 0, %v667
  %v669 = vrot.slane %v625, %v668
  %v670 = vlaneseq
  %v671 = vshrl.u32 %v670, 7
  %v672 = vsub.s32 1, %v671
  %v673 = vrot.slane %v625, %v672
  %vm676 = vcmask 523264
  %v678 = vsel %vm676, %v607, 0
  %v681 = vsel %vm676, %v608, 0
  %683 = vmatprep.subr.mxu0 %v610
  %684 = vmatpush1.msra.mxu0 %v609
  %685 = vmatprep.subr.mxu0 %v612
  %686 = vmatpush1.msra.mxu0 %v611
  %687 = vmatprep.subr.mxu0 %v614
  %688 = vmatpush1.msra.mxu0 %v613
  %689 = vmatprep.subr.mxu0 %v616
  %690 = vmatpush1.msra.mxu0 %v615
  %691 = vmatprep.subr.mxu0 %v618
  %692 = vmatpush1.msra.mxu0 %v617
  %693 = vmatprep.subr.mxu0 %v620
  %694 = vmatpush1.msra.mxu0 %v619
  %695 = vmatprep.subr.mxu0 %v622
  %696 = vmatpush1.msra.mxu0 %v621
  %697 = vmatprep.subr.mxu0 %v624
  %698 = vmatpush1.msra.mxu0 %v623
  %699 = vmatprep.subr.mxu0 0.0
  %700 = vmatpush1.msra.mxu0 0.0
  %701 = vmatprep.subr.mxu0 0.0
  %702 = vmatpush1.msra.mxu0 0.0
  %703 = vmatprep.subr.mxu0 0.0
  %704 = vmatpush1.msra.mxu0 0.0
  %705 = vmatprep.subr.mxu0 0.0
  %706 = vmatpush1.msra.mxu0 0.0
  %707 = vmatprep.subr.mxu0 0.0
  %708 = vmatpush1.msra.mxu0 0.0
  %709 = vmatprep.subr.mxu0 0.0
  %710 = vmatpush1.msra.mxu0 0.0
  %711 = vmatprep.subr.mxu0 0.0
  %712 = vmatpush1.msra.mxu0 0.0
  %713 = vmatprep.subr.mxu0 0.0
  %714 = vmatpush1.msra.mxu0 0.0
  %715 = vmatprep.subr.mxu0 0.0
  %716 = vmatpush1.msra.mxu0 0.0
  %717 = vmatprep.subr.mxu0 0.0
  %718 = vmatpush1.msra.mxu0 0.0
  %719 = vmatprep.subr.mxu0 0.0
  %720 = vmatpush1.msra.mxu0 0.0
  %721 = vmatprep.subr.mxu0 0.0
  %722 = vmatpush1.msra.mxu0 0.0
  %723 = vmatprep.subr.mxu0 0.0
  %724 = vmatpush1.msra.mxu0 0.0
  %725 = vmatprep.subr.mxu0 0.0
  %726 = vmatpush1.msra.mxu0 0.0
  %727 = vmatprep.subr.mxu0 0.0
  %728 = vmatpush1.msra.mxu0 0.0
  %729 = vmatprep.subr.mxu0 0.0
  %730 = vmatpush1.msra.mxu0 0.0
  %731 = vmatprep.subr.mxu0 0.0
  %732 = vmatpush1.msra.mxu0 0.0
  %733 = vmatprep.subr.mxu0 0.0
  %734 = vmatpush1.msra.mxu0 0.0
  %735 = vmatprep.subr.mxu0 0.0
  %736 = vmatpush1.msra.mxu0 0.0
  %737 = vmatprep.subr.mxu0 0.0
  %738 = vmatpush1.msra.mxu0 0.0
  %739 = vmatprep.subr.mxu0 0.0
  %740 = vmatpush1.msra.mxu0 0.0
  %741 = vmatprep.subr.mxu0 0.0
  %742 = vmatpush1.msra.mxu0 0.0
  %743 = vmatprep.subr.mxu0 0.0
  %744 = vmatpush1.msra.mxu0 0.0
  %745 = vmatprep.subr.mxu0 0.0
  %746 = vmatpush1.msra.mxu0 0.0
  %747 = vmatprep.mubr.f32.mxu0 0.0
  %748 = vmatmul.mubr.f32.gmra.mrb[0].mxu0 %v678
  %v749 = vpop.f32.mrb[0].mxu0
  %v750 = vadd.f32 %v669, %v749
  %v751 = vpop.f32.mrb[0].mxu0
  %v752 = vadd.f32 %v673, %v751
  %753 = vmatprep.mubr.f32.mxu0 0.0
  %754 = vmatmul.mubr.f32.gmra.mrb[0].mxu0 %v681
  %v755 = vpop.f32.mrb[0].mxu0
  %v756 = vadd.f32 %v669, %v755
  %v757 = vpop.f32.mrb[0].mxu0
  %v758 = vadd.f32 %v673, %v757
  %759 = vdwg.mxu0
  %760 = vst [vmem:[#allocation2] sm:$0xff] %v750
  %761 = vst.msk [vmem:[#allocation2 + $0x8] sm:$0xff] %vm676, %v752
  %762 = vst [vmem:[#allocation2 + $0x10] sm:$0xff] %v756
  %763 = vst.msk [vmem:[#allocation2 + $0x18] sm:$0xff] %vm676, %v758
  %v764 = vld [vmem:[#allocation2] sm:$0xff]
  %v765 = vld [vmem:[#allocation2 + $0x8] sm:$0xff]
  %767 = vrot.lane.b32.xlu0 %v764, 64
  %v768 = vpop.permute.xlu0 %767
  %v769 = vsel %vm282, %v764, 0
  %v771 = vsel %vm282, %v768, 0
  %773 = vmatprep.subr.mxu0 0.0
  %774 = vmatpush1.xpose.msra.mxu0 %v771
  %775 = vmatprep.subr.mxu0 0.0
  %776 = vmatpush1.xpose.msra.mxu0 0.0
  %777 = vmatprep.subr.mxu0 0.0
  %778 = vmatpush1.xpose.msra.mxu0 0.0
  %779 = vmatprep.subr.mxu0 0.0
  %780 = vmatpush1.xpose.msra.mxu0 0.0
  %781 = vmatprep.subr.mxu0 0.0
  %782 = vmatpush1.xpose.msra.mxu0 0.0
  %783 = vmatprep.subr.mxu0 0.0
  %784 = vmatpush1.xpose.msra.mxu0 0.0
  %785 = vmatprep.subr.mxu0 0.0
  %786 = vmatpush1.xpose.msra.mxu0 0.0
  %787 = vmatprep.subr.mxu0 0.0
  %788 = vmatpush1.xpose.msra.mxu0 0.0
  %789 = vmatprep.subr.mxu0 0.0
  %790 = vmatpush1.xpose.msra.mxu0 0.0
  %791 = vmatprep.subr.mxu0 0.0
  %792 = vmatpush1.xpose.msra.mxu0 0.0
  %793 = vmatprep.subr.mxu0 0.0
  %794 = vmatpush1.xpose.msra.mxu0 0.0
  %795 = vmatprep.subr.mxu0 0.0
  %796 = vmatpush1.xpose.msra.mxu0 0.0
  %797 = vmatprep.subr.mxu0 0.0
  %798 = vmatpush1.xpose.msra.mxu0 0.0
  %799 = vmatprep.subr.mxu0 0.0
  %800 = vmatpush1.xpose.msra.mxu0 0.0
  %801 = vmatprep.subr.mxu0 0.0
  %802 = vmatpush1.xpose.msra.mxu0 0.0
  %803 = vmatprep.subr.mxu0 0.0
  %804 = vmatpush1.xpose.msra.mxu0 0.0
  %805 = vmatprep.subr.mxu0 0.0
  %806 = vmatpush1.xpose.msra.mxu0 0.0
  %807 = vmatprep.subr.mxu0 0.0
  %808 = vmatpush1.xpose.msra.mxu0 0.0
  %809 = vmatprep.subr.mxu0 0.0
  %810 = vmatpush1.xpose.msra.mxu0 0.0
  %811 = vmatprep.subr.mxu0 0.0
  %812 = vmatpush1.xpose.msra.mxu0 0.0
  %813 = vmatprep.subr.mxu0 0.0
  %814 = vmatpush1.xpose.msra.mxu0 0.0
  %815 = vmatprep.subr.mxu0 0.0
  %816 = vmatpush1.xpose.msra.mxu0 0.0
  %817 = vmatprep.subr.mxu0 0.0
  %818 = vmatpush1.xpose.msra.mxu0 0.0
  %819 = vmatprep.subr.mxu0 0.0
  %820 = vmatpush1.xpose.msra.mxu0 0.0
  %821 = vmatprep.subr.mxu0 0.0
  %822 = vmatpush1.xpose.msra.mxu0 0.0
  %823 = vmatprep.subr.mxu0 0.0
  %824 = vmatpush1.xpose.msra.mxu0 0.0
  %825 = vmatprep.subr.mxu0 0.0
  %826 = vmatpush1.xpose.msra.mxu0 0.0
  %827 = vmatprep.subr.mxu0 0.0
  %828 = vmatpush1.xpose.msra.mxu0 0.0
  %829 = vmatprep.subr.mxu0 0.0
  %830 = vmatpush1.xpose.msra.mxu0 0.0
  %831 = vmatprep.subr.mxu0 0.0
  %832 = vmatpush1.xpose.msra.mxu0 0.0
  %833 = vmatprep.subr.mxu0 0.0
  %834 = vmatpush1.xpose.msra.mxu0 0.0
  %835 = vmatprep.subr.mxu0 0.0
  %836 = vmatpush1.xpose.msra.mxu0 0.0
  %837 = vmatprep.mubr.f32.mxu0 0.0
  %838 = vmatmul.mubr.f32.gmra.mrb[0].mxu0 %v769
  %v839 = vpop.f32.mrb[0].mxu0
  %v840 = vadd.f32 0.0, %v839
  %v841 = vpop.f32.mrb[0].mxu0
  %842 = vdwg.mxu0
  %v843 = vmul.f32 %v840, 0.25
  %vm844 = vcmask 64512
  %v845 = vsel %vm844, %v843, -inf
  %846 = vmax.xlane.f32.xlu0 %v845
  %v847 = vpop.xlane.xlu0 %846
  %v848 = vsub.f32 %v843, %v847
  %v849 = vmul.f32 %v848, 1.442695
  %v850 = vpow.pop %v849
  %v851 = vsel %vm844, %v850, 0.0
  %852 = vadd.xlane.f32.xlu0 %v851
  %v853 = vpop.xlane.xlu0 %852
  %v854 = vrcp.pop %v853
  %v855 = vmul.f32 %v850, %v854
  %v857 = vsel %vm844, %v855, 0
  %859 = vmatprep.subr.mxu0 0.0
  %860 = vmatpush1.msra.mxu0 %v765
  %861 = vmatprep.subr.mxu0 0.0
  %862 = vmatpush1.msra.mxu0 0.0
  %863 = vmatprep.subr.mxu0 0.0
  %864 = vmatpush1.msra.mxu0 0.0
  %865 = vmatprep.subr.mxu0 0.0
  %866 = vmatpush1.msra.mxu0 0.0
  %867 = vmatprep.subr.mxu0 0.0
  %868 = vmatpush1.msra.mxu0 0.0
  %869 = vmatprep.subr.mxu0 0.0
  %870 = vmatpush1.msra.mxu0 0.0
  %871 = vmatprep.subr.mxu0 0.0
  %872 = vmatpush1.msra.mxu0 0.0
  %873 = vmatprep.subr.mxu0 0.0
  %874 = vmatpush1.msra.mxu0 0.0
  %875 = vmatprep.subr.mxu0 0.0
  %876 = vmatpush1.msra.mxu0 0.0
  %877 = vmatprep.subr.mxu0 0.0
  %878 = vmatpush1.msra.mxu0 0.0
  %879 = vmatprep.subr.mxu0 0.0
  %880 = vmatpush1.msra.mxu0 0.0
  %881 = vmatprep.subr.mxu0 0.0
  %882 = vmatpush1.msra.mxu0 0.0
  %883 = vmatprep.subr.mxu0 0.0
  %884 = vmatpush1.msra.mxu0 0.0
  %885 = vmatprep.subr.mxu0 0.0
  %886 = vmatpush1.msra.mxu0 0.0
  %887 = vmatprep.subr.mxu0 0.0
  %888 = vmatpush1.msra.mxu0 0.0
  %889 = vmatprep.subr.mxu0 0.0
  %890 = vmatpush1.msra.mxu0 0.0
  %891 = vmatprep.subr.mxu0 0.0
  %892 = vmatpush1.msra.mxu0 0.0
  %893 = vmatprep.subr.mxu0 0.0
  %894 = vmatpush1.msra.mxu0 0.0
  %895 = vmatprep.subr.mxu0 0.0
  %896 = vmatpush1.msra.mxu0 0.0
  %897 = vmatprep.subr.mxu0 0.0
  %898 = vmatpush1.msra.mxu0 0.0
  %899 = vmatprep.subr.mxu0 0.0
  %900 = vmatpush1.msra.mxu0 0.0
  %901 = vmatprep.subr.mxu0 0.0
  %902 = vmatpush1.msra.mxu0 0.0
  %903 = vmatprep.subr.mxu0 0.0
  %904 = vmatpush1.msra.mxu0 0.0
  %905 = vmatprep.subr.mxu0 0.0
  %906 = vmatpush1.msra.mxu0 0.0
  %907 = vmatprep.subr.mxu0 0.0
  %908 = vmatpush1.msra.mxu0 0.0
  %909 = vmatprep.subr.mxu0 0.0
  %910 = vmatpush1.msra.mxu0 0.0
  %911 = vmatprep.subr.mxu0 0.0
  %912 = vmatpush1.msra.mxu0 0.0
  %913 = vmatprep.subr.mxu0 0.0
  %914 = vmatpush1.msra.mxu0 0.0
  %915 = vmatprep.subr.mxu0 0.0
  %916 = vmatpush1.msra.mxu0 0.0
  %917 = vmatprep.subr.mxu0 0.0
  %918 = vmatpush1.msra.mxu0 0.0
  %919 = vmatprep.subr.mxu0 0.0
  %920 = vmatpush1.msra.mxu0 0.0
  %921 = vmatprep.subr.mxu0 0.0
  %922 = vmatpush1.msra.mxu0 0.0
  %923 = vmatprep.mubr.f32.mxu0 0.0
  %924 = vmatmul.mubr.f32.gmra.mrb[0].mxu0 %v857
  %v925 = vpop.f32.mrb[0].mxu0
  %v926 = vadd.f32 0.0, %v925
  %v927 = vpop.f32.mrb[0].mxu0
  %928 = vdwg.mxu0
  %929 = vst.msk [vmem:[#allocation3] sm:$0xff] %vm282, %v926
  %v930 = vld [vmem:[#allocation2] sm:$0xff]
  %v931 = vld [vmem:[#allocation2 + $0x8] sm:$0xff]
  %933 = vrot.lane.b32.xlu0 %v930, 112
  %v934 = vpop.permute.xlu0 %933
  %935 = vrot.lane.b32.xlu0 %v930, 48
  %v936 = vpop.permute.xlu0 %935
  %v937 = vsel %vm282, %v934, 0
  %v939 = vsel %vm282, %v936, 0
  %941 = vmatprep.subr.mxu0 0.0
  %942 = vmatpush1.xpose.msra.mxu0 %v939
  %943 = vmatprep.subr.mxu0 0.0
  %944 = vmatpush1.xpose.msra.mxu0 0.0
  %945 = vmatprep.subr.mxu0 0.0
  %946 = vmatpush1.xpose.msra.mxu0 0.0
  %947 = vmatprep.subr.mxu0 0.0
  %948 = vmatpush1.xpose.msra.mxu0 0.0
  %949 = vmatprep.subr.mxu0 0.0
  %950 = vmatpush1.xpose.msra.mxu0 0.0
  %951 = vmatprep.subr.mxu0 0.0
  %952 = vmatpush1.xpose.msra.mxu0 0.0
  %953 = vmatprep.subr.mxu0 0.0
  %954 = vmatpush1.xpose.msra.mxu0 0.0
  %955 = vmatprep.subr.mxu0 0.0
  %956 = vmatpush1.xpose.msra.mxu0 0.0
  %957 = vmatprep.subr.mxu0 0.0
  %958 = vmatpush1.xpose.msra.mxu0 0.0
  %959 = vmatprep.subr.mxu0 0.0
  %960 = vmatpush1.xpose.msra.mxu0 0.0
  %961 = vmatprep.subr.mxu0 0.0
  %962 = vmatpush1.xpose.msra.mxu0 0.0
  %963 = vmatprep.subr.mxu0 0.0
  %964 = vmatpush1.xpose.msra.mxu0 0.0
  %965 = vmatprep.subr.mxu0 0.0
  %966 = vmatpush1.xpose.msra.mxu0 0.0
  %967 = vmatprep.subr.mxu0 0.0
  %968 = vmatpush1.xpose.msra.mxu0 0.0
  %969 = vmatprep.subr.mxu0 0.0
  %970 = vmatpush1.xpose.msra.mxu0 0.0
  %971 = vmatprep.subr.mxu0 0.0
  %972 = vmatpush1.xpose.msra.mxu0 0.0
  %973 = vmatprep.subr.mxu0 0.0
  %974 = vmatpush1.xpose.msra.mxu0 0.0
  %975 = vmatprep.subr.mxu0 0.0
  %976 = vmatpush1.xpose.msra.mxu0 0.0
  %977 = vmatprep.subr.mxu0 0.0
  %978 = vmatpush1.xpose.msra.mxu0 0.0
  %979 = vmatprep.subr.mxu0 0.0
  %980 = vmatpush1.xpose.msra.mxu0 0.0
  %981 = vmatprep.subr.mxu0 0.0
  %982 = vmatpush1.xpose.msra.mxu0 0.0
  %983 = vmatprep.subr.mxu0 0.0
  %984 = vmatpush1.xpose.msra.mxu0 0.0
  %985 = vmatprep.subr.mxu0 0.0
  %986 = vmatpush1.xpose.msra.mxu0 0.0
  %987 = vmatprep.subr.mxu0 0.0
  %988 = vmatpush1.xpose.msra.mxu0 0.0
  %989 = vmatprep.subr.mxu0 0.0
  %990 = vmatpush1.xpose.msra.mxu0 0.0
  %991 = vmatprep.subr.mxu0 0.0
  %992 = vmatpush1.xpose.msra.mxu0 0.0
  %993 = vmatprep.subr.mxu0 0.0
  %994 = vmatpush1.xpose.msra.mxu0 0.0
  %995 = vmatprep.subr.mxu0 0.0
  %996 = vmatpush1.xpose.msra.mxu0 0.0
  %997 = vmatprep.subr.mxu0 0.0
  %998 = vmatpush1.xpose.msra.mxu0 0.0
  %999 = vmatprep.subr.mxu0 0.0
  %1000 = vmatpush1.xpose.msra.mxu0 0.0
  %1001 = vmatprep.subr.mxu0 0.0
  %1002 = vmatpush1.xpose.msra.mxu0 0.0
  %1003 = vmatprep.subr.mxu0 0.0
  %1004 = vmatpush1.xpose.msra.mxu0 0.0
  %1005 = vmatprep.mubr.f32.mxu0 0.0
  %1006 = vmatmul.mubr.f32.gmra.mrb[0].mxu0 %v937
  %v1007 = vpop.f32.mrb[0].mxu0
  %v1008 = vadd.f32 0.0, %v1007
  %v1009 = vpop.f32.mrb[0].mxu0
  %1010 = vdwg.mxu0
  %v1011 = vmul.f32 %v1008, 0.25
  %v1012 = vsel %vm844, %v1011, -inf
  %1013 = vmax.xlane.f32.xlu0 %v1012
  %v1014 = vpop.xlane.xlu0 %1013
  %v1015 = vsub.f32 %v1011, %v1014
  %v1016 = vmul.f32 %v1015, 1.442695
  %v1017 = vpow.pop %v1016
  %v1018 = vsel %vm844, %v1017, 0.0
  %1019 = vadd.xlane.f32.xlu0 %v1018
  %v1020 = vpop.xlane.xlu0 %1019
  %v1021 = vrcp.pop %v1020
  %v1022 = vmul.f32 %v1017, %v1021
  %1024 = vrot.lane.b32.xlu0 %v931, 112
  %v1025 = vpop.permute.xlu0 %1024
  %v1028 = vsel %vm844, %v1022, 0
  %1030 = vmatprep.subr.mxu0 0.0
  %1031 = vmatpush1.msra.mxu0 %v1025
  %1032 = vmatprep.subr.mxu0 0.0
  %1033 = vmatpush1.msra.mxu0 0.0
  %1034 = vmatprep.subr.mxu0 0.0
  %1035 = vmatpush1.msra.mxu0 0.0
  %1036 = vmatprep.subr.mxu0 0.0
  %1037 = vmatpush1.msra.mxu0 0.0
  %1038 = vmatprep.subr.mxu0 0.0
  %1039 = vmatpush1.msra.mxu0 0.0
  %1040 = vmatprep.subr.mxu0 0.0
  %1041 = vmatpush1.msra.mxu0 0.0
  %1042 = vmatprep.subr.mxu0 0.0
  %1043 = vmatpush1.msra.mxu0 0.0
  %1044 = vmatprep.subr.mxu0 0.0
  %1045 = vmatpush1.msra.mxu0 0.0
  %1046 = vmatprep.subr.mxu0 0.0
  %1047 = vmatpush1.msra.mxu0 0.0
  %1048 = vmatprep.subr.mxu0 0.0
  %1049 = vmatpush1.msra.mxu0 0.0
  %1050 = vmatprep.subr.mxu0 0.0
  %1051 = vmatpush1.msra.mxu0 0.0
  %1052 = vmatprep.subr.mxu0 0.0
  %1053 = vmatpush1.msra.mxu0 0.0
  %1054 = vmatprep.subr.mxu0 0.0
  %1055 = vmatpush1.msra.mxu0 0.0
  %1056 = vmatprep.subr.mxu0 0.0
  %1057 = vmatpush1.msra.mxu0 0.0
  %1058 = vmatprep.subr.mxu0 0.0
  %1059 = vmatpush1.msra.mxu0 0.0
  %1060 = vmatprep.subr.mxu0 0.0
  %1061 = vmatpush1.msra.mxu0 0.0
  %1062 = vmatprep.subr.mxu0 0.0
  %1063 = vmatpush1.msra.mxu0 0.0
  %1064 = vmatprep.subr.mxu0 0.0
  %1065 = vmatpush1.msra.mxu0 0.0
  %1066 = vmatprep.subr.mxu0 0.0
  %1067 = vmatpush1.msra.mxu0 0.0
  %1068 = vmatprep.subr.mxu0 0.0
  %1069 = vmatpush1.msra.mxu0 0.0
  %1070 = vmatprep.subr.mxu0 0.0
  %1071 = vmatpush1.msra.mxu0 0.0
  %1072 = vmatprep.subr.mxu0 0.0
  %1073 = vmatpush1.msra.mxu0 0.0
  %1074 = vmatprep.subr.mxu0 0.0
  %1075 = vmatpush1.msra.mxu0 0.0
  %1076 = vmatprep.subr.mxu0 0.0
  %1077 = vmatpush1.msra.mxu0 0.0
  %1078 = vmatprep.subr.mxu0 0.0
  %1079 = vmatpush1.msra.mxu0 0.0
  %1080 = vmatprep.subr.mxu0 0.0
  %1081 = vmatpush1.msra.mxu0 0.0
  %1082 = vmatprep.subr.mxu0 0.0
  %1083 = vmatpush1.msra.mxu0 0.0
  %1084 = vmatprep.subr.mxu0 0.0
  %1085 = vmatpush1.msra.mxu0 0.0
  %1086 = vmatprep.subr.mxu0 0.0
  %1087 = vmatpush1.msra.mxu0 0.0
  %1088 = vmatprep.subr.mxu0 0.0
  %1089 = vmatpush1.msra.mxu0 0.0
  %1090 = vmatprep.subr.mxu0 0.0
  %1091 = vmatpush1.msra.mxu0 0.0
  %1092 = vmatprep.subr.mxu0 0.0
  %1093 = vmatpush1.msra.mxu0 0.0
  %1094 = vmatprep.mubr.f32.mxu0 0.0
  %1095 = vmatmul.mubr.f32.gmra.mrb[0].mxu0 %v1028
  %v1096 = vpop.f32.mrb[0].mxu0
  %v1097 = vadd.f32 0.0, %v1096
  %v1098 = vpop.f32.mrb[0].mxu0
  %1099 = vdwg.mxu0
  %1101 = vrot.lane.b32.xlu0 %v1097, 16
  %v1102 = vpop.permute.xlu0 %1101
  %vm1104 = vcmask 261248
  %1105 = vst.msk [vmem:[#allocation3] sm:$0xff] %vm1104, %v1102
  %v1106 = vld [vmem:[#allocation2] sm:$0xff]
  %v1107 = vld [vmem:[#allocation2 + $0x8] sm:$0xff]
  %1109 = vrot.lane.b32.xlu0 %v1106, 96
  %v1110 = vpop.permute.xlu0 %1109
  %1111 = vrot.lane.b32.xlu0 %v1106, 32
  %v1112 = vpop.permute.xlu0 %1111
  %v1113 = vsel %vm282, %v1110, 0
  %v1115 = vsel %vm282, %v1112, 0
  %1117 = vmatprep.subr.mxu0 0.0
  %1118 = vmatpush1.xpose.msra.mxu0 %v1115
  %1119 = vmatprep.subr.mxu0 0.0
  %1120 = vmatpush1.xpose.msra.mxu0 0.0
  %1121 = vmatprep.subr.mxu0 0.0
  %1122 = vmatpush1.xpose.msra.mxu0 0.0
  %1123 = vmatprep.subr.mxu0 0.0
  %1124 = vmatpush1.xpose.msra.mxu0 0.0
  %1125 = vmatprep.subr.mxu0 0.0
  %1126 = vmatpush1.xpose.msra.mxu0 0.0
  %1127 = vmatprep.subr.mxu0 0.0
  %1128 = vmatpush1.xpose.msra.mxu0 0.0
  %1129 = vmatprep.subr.mxu0 0.0
  %1130 = vmatpush1.xpose.msra.mxu0 0.0
  %1131 = vmatprep.subr.mxu0 0.0
  %1132 = vmatpush1.xpose.msra.mxu0 0.0
  %1133 = vmatprep.subr.mxu0 0.0
  %1134 = vmatpush1.xpose.msra.mxu0 0.0
  %1135 = vmatprep.subr.mxu0 0.0
  %1136 = vmatpush1.xpose.msra.mxu0 0.0
  %1137 = vmatprep.subr.mxu0 0.0
  %1138 = vmatpush1.xpose.msra.mxu0 0.0
  %1139 = vmatprep.subr.mxu0 0.0
  %1140 = vmatpush1.xpose.msra.mxu0 0.0
  %1141 = vmatprep.subr.mxu0 0.0
  %1142 = vmatpush1.xpose.msra.mxu0 0.0
  %1143 = vmatprep.subr.mxu0 0.0
  %1144 = vmatpush1.xpose.msra.mxu0 0.0
  %1145 = vmatprep.subr.mxu0 0.0
  %1146 = vmatpush1.xpose.msra.mxu0 0.0
  %1147 = vmatprep.subr.mxu0 0.0
  %1148 = vmatpush1.xpose.msra.mxu0 0.0
  %1149 = vmatprep.subr.mxu0 0.0
  %1150 = vmatpush1.xpose.msra.mxu0 0.0
  %1151 = vmatprep.subr.mxu0 0.0
  %1152 = vmatpush1.xpose.msra.mxu0 0.0
  %1153 = vmatprep.subr.mxu0 0.0
  %1154 = vmatpush1.xpose.msra.mxu0 0.0
  %1155 = vmatprep.subr.mxu0 0.0
  %1156 = vmatpush1.xpose.msra.mxu0 0.0
  %1157 = vmatprep.subr.mxu0 0.0
  %1158 = vmatpush1.xpose.msra.mxu0 0.0
  %1159 = vmatprep.subr.mxu0 0.0
  %1160 = vmatpush1.xpose.msra.mxu0 0.0
  %1161 = vmatprep.subr.mxu0 0.0
  %1162 = vmatpush1.xpose.msra.mxu0 0.0
  %1163 = vmatprep.subr.mxu0 0.0
  %1164 = vmatpush1.xpose.msra.mxu0 0.0
  %1165 = vmatprep.subr.mxu0 0.0
  %1166 = vmatpush1.xpose.msra.mxu0 0.0
  %1167 = vmatprep.subr.mxu0 0.0
  %1168 = vmatpush1.xpose.msra.mxu0 0.0
  %1169 = vmatprep.subr.mxu0 0.0
  %1170 = vmatpush1.xpose.msra.mxu0 0.0
  %1171 = vmatprep.subr.mxu0 0.0
  %1172 = vmatpush1.xpose.msra.mxu0 0.0
  %1173 = vmatprep.subr.mxu0 0.0
  %1174 = vmatpush1.xpose.msra.mxu0 0.0
  %1175 = vmatprep.subr.mxu0 0.0
  %1176 = vmatpush1.xpose.msra.mxu0 0.0
  %1177 = vmatprep.subr.mxu0 0.0
  %1178 = vmatpush1.xpose.msra.mxu0 0.0
  %1179 = vmatprep.subr.mxu0 0.0
  %1180 = vmatpush1.xpose.msra.mxu0 0.0
  %1181 = vmatprep.mubr.f32.mxu0 0.0
  %1182 = vmatmul.mubr.f32.gmra.mrb[0].mxu0 %v1113
  %v1183 = vpop.f32.mrb[0].mxu0
  %v1184 = vadd.f32 0.0, %v1183
  %v1185 = vpop.f32.mrb[0].mxu0
  %1186 = vdwg.mxu0
  %v1187 = vmul.f32 %v1184, 0.25
  %v1188 = vsel %vm844, %v1187, -inf
  %1189 = vmax.xlane.f32.xlu0 %v1188
  %v1190 = vpop.xlane.xlu0 %1189
  %v1191 = vsub.f32 %v1187, %v1190
  %v1192 = vmul.f32 %v1191, 1.442695
  %v1193 = vpow.pop %v1192
  %v1194 = vsel %vm844, %v1193, 0.0
  %1195 = vadd.xlane.f32.xlu0 %v1194
  %v1196 = vpop.xlane.xlu0 %1195
  %v1197 = vrcp.pop %v1196
  %v1198 = vmul.f32 %v1193, %v1197
  %1200 = vrot.lane.b32.xlu0 %v1107, 96
  %v1201 = vpop.permute.xlu0 %1200
  %v1204 = vsel %vm844, %v1198, 0
  %1206 = vmatprep.subr.mxu0 0.0
  %1207 = vmatpush1.msra.mxu0 %v1201
  %1208 = vmatprep.subr.mxu0 0.0
  %1209 = vmatpush1.msra.mxu0 0.0
  %1210 = vmatprep.subr.mxu0 0.0
  %1211 = vmatpush1.msra.mxu0 0.0
  %1212 = vmatprep.subr.mxu0 0.0
  %1213 = vmatpush1.msra.mxu0 0.0
  %1214 = vmatprep.subr.mxu0 0.0
  %1215 = vmatpush1.msra.mxu0 0.0
  %1216 = vmatprep.subr.mxu0 0.0
  %1217 = vmatpush1.msra.mxu0 0.0
  %1218 = vmatprep.subr.mxu0 0.0
  %1219 = vmatpush1.msra.mxu0 0.0
  %1220 = vmatprep.subr.mxu0 0.0
  %1221 = vmatpush1.msra.mxu0 0.0
  %1222 = vmatprep.subr.mxu0 0.0
  %1223 = vmatpush1.msra.mxu0 0.0
  %1224 = vmatprep.subr.mxu0 0.0
  %1225 = vmatpush1.msra.mxu0 0.0
  %1226 = vmatprep.subr.mxu0 0.0
  %1227 = vmatpush1.msra.mxu0 0.0
  %1228 = vmatprep.subr.mxu0 0.0
  %1229 = vmatpush1.msra.mxu0 0.0
  %1230 = vmatprep.subr.mxu0 0.0
  %1231 = vmatpush1.msra.mxu0 0.0
  %1232 = vmatprep.subr.mxu0 0.0
  %1233 = vmatpush1.msra.mxu0 0.0
  %1234 = vmatprep.subr.mxu0 0.0
  %1235 = vmatpush1.msra.mxu0 0.0
  %1236 = vmatprep.subr.mxu0 0.0
  %1237 = vmatpush1.msra.mxu0 0.0
  %1238 = vmatprep.subr.mxu0 0.0
  %1239 = vmatpush1.msra.mxu0 0.0
  %1240 = vmatprep.subr.mxu0 0.0
  %1241 = vmatpush1.msra.mxu0 0.0
  %1242 = vmatprep.subr.mxu0 0.0
  %1243 = vmatpush1.msra.mxu0 0.0
  %1244 = vmatprep.subr.mxu0 0.0
  %1245 = vmatpush1.msra.mxu0 0.0
  %1246 = vmatprep.subr.mxu0 0.0
  %1247 = vmatpush1.msra.mxu0 0.0
  %1248 = vmatprep.subr.mxu0 0.0
  %1249 = vmatpush1.msra.mxu0 0.0
  %1250 = vmatprep.subr.mxu0 0.0
  %1251 = vmatpush1.msra.mxu0 0.0
  %1252 = vmatprep.subr.mxu0 0.0
  %1253 = vmatpush1.msra.mxu0 0.0
  %1254 = vmatprep.subr.mxu0 0.0
  %1255 = vmatpush1.msra.mxu0 0.0
  %1256 = vmatprep.subr.mxu0 0.0
  %1257 = vmatpush1.msra.mxu0 0.0
  %1258 = vmatprep.subr.mxu0 0.0
  %1259 = vmatpush1.msra.mxu0 0.0
  %1260 = vmatprep.subr.mxu0 0.0
  %1261 = vmatpush1.msra.mxu0 0.0
  %1262 = vmatprep.subr.mxu0 0.0
  %1263 = vmatpush1.msra.mxu0 0.0
  %1264 = vmatprep.subr.mxu0 0.0
  %1265 = vmatpush1.msra.mxu0 0.0
  %1266 = vmatprep.subr.mxu0 0.0
  %1267 = vmatpush1.msra.mxu0 0.0
  %1268 = vmatprep.subr.mxu0 0.0
  %1269 = vmatpush1.msra.mxu0 0.0
  %1270 = vmatprep.mubr.f32.mxu0 0.0
  %1271 = vmatmul.mubr.f32.gmra.mrb[0].mxu0 %v1204
  %v1272 = vpop.f32.mrb[0].mxu0
  %v1273 = vadd.f32 0.0, %v1272
  %v1274 = vpop.f32.mrb[0].mxu0
  %1275 = vdwg.mxu0
  %1277 = vrot.lane.b32.xlu0 %v1273, 32
  %v1278 = vpop.permute.xlu0 %1277
  %vm1280 = vcmask 392448
  %1281 = vst.msk [vmem:[#allocation3] sm:$0xff] %vm1280, %v1278
  %v1282 = vld [vmem:[#allocation2] sm:$0xff]
  %v1283 = vld [vmem:[#allocation2 + $0x8] sm:$0xff]
  %1285 = vrot.lane.b32.xlu0 %v1282, 80
  %v1286 = vpop.permute.xlu0 %1285
  %1287 = vrot.lane.b32.xlu0 %v1282, 16
  %v1288 = vpop.permute.xlu0 %1287
  %v1289 = vsel %vm282, %v1286, 0
  %v1291 = vsel %vm282, %v1288, 0
  %1293 = vmatprep.subr.mxu0 0.0
  %1294 = vmatpush1.xpose.msra.mxu0 %v1291
  %1295 = vmatprep.subr.mxu0 0.0
  %1296 = vmatpush1.xpose.msra.mxu0 0.0
  %1297 = vmatprep.subr.mxu0 0.0
  %1298 = vmatpush1.xpose.msra.mxu0 0.0
  %1299 = vmatprep.subr.mxu0 0.0
  %1300 = vmatpush1.xpose.msra.mxu0 0.0
  %1301 = vmatprep.subr.mxu0 0.0
  %1302 = vmatpush1.xpose.msra.mxu0 0.0
  %1303 = vmatprep.subr.mxu0 0.0
  %1304 = vmatpush1.xpose.msra.mxu0 0.0
  %1305 = vmatprep.subr.mxu0 0.0
  %1306 = vmatpush1.xpose.msra.mxu0 0.0
  %1307 = vmatprep.subr.mxu0 0.0
  %1308 = vmatpush1.xpose.msra.mxu0 0.0
  %1309 = vmatprep.subr.mxu0 0.0
  %1310 = vmatpush1.xpose.msra.mxu0 0.0
  %1311 = vmatprep.subr.mxu0 0.0
  %1312 = vmatpush1.xpose.msra.mxu0 0.0
  %1313 = vmatprep.subr.mxu0 0.0
  %1314 = vmatpush1.xpose.msra.mxu0 0.0
  %1315 = vmatprep.subr.mxu0 0.0
  %1316 = vmatpush1.xpose.msra.mxu0 0.0
  %1317 = vmatprep.subr.mxu0 0.0
  %1318 = vmatpush1.xpose.msra.mxu0 0.0
  %1319 = vmatprep.subr.mxu0 0.0
  %1320 = vmatpush1.xpose.msra.mxu0 0.0
  %1321 = vmatprep.subr.mxu0 0.0
  %1322 = vmatpush1.xpose.msra.mxu0 0.0
  %1323 = vmatprep.subr.mxu0 0.0
  %1324 = vmatpush1.xpose.msra.mxu0 0.0
  %1325 = vmatprep.subr.mxu0 0.0
  %1326 = vmatpush1.xpose.msra.mxu0 0.0
  %1327 = vmatprep.subr.mxu0 0.0
  %1328 = vmatpush1.xpose.msra.mxu0 0.0
  %1329 = vmatprep.subr.mxu0 0.0
  %1330 = vmatpush1.xpose.msra.mxu0 0.0
  %1331 = vmatprep.subr.mxu0 0.0
  %1332 = vmatpush1.xpose.msra.mxu0 0.0
  %1333 = vmatprep.subr.mxu0 0.0
  %1334 = vmatpush1.xpose.msra.mxu0 0.0
  %1335 = vmatprep.subr.mxu0 0.0
  %1336 = vmatpush1.xpose.msra.mxu0 0.0
  %1337 = vmatprep.subr.mxu0 0.0
  %1338 = vmatpush1.xpose.msra.mxu0 0.0
  %1339 = vmatprep.subr.mxu0 0.0
  %1340 = vmatpush1.xpose.msra.mxu0 0.0
  %1341 = vmatprep.subr.mxu0 0.0
  %1342 = vmatpush1.xpose.msra.mxu0 0.0
  %1343 = vmatprep.subr.mxu0 0.0
  %1344 = vmatpush1.xpose.msra.mxu0 0.0
  %1345 = vmatprep.subr.mxu0 0.0
  %1346 = vmatpush1.xpose.msra.mxu0 0.0
  %1347 = vmatprep.subr.mxu0 0.0
  %1348 = vmatpush1.xpose.msra.mxu0 0.0
  %1349 = vmatprep.subr.mxu0 0.0
  %1350 = vmatpush1.xpose.msra.mxu0 0.0
  %1351 = vmatprep.subr.mxu0 0.0
  %1352 = vmatpush1.xpose.msra.mxu0 0.0
  %1353 = vmatprep.subr.mxu0 0.0
  %1354 = vmatpush1.xpose.msra.mxu0 0.0
  %1355 = vmatprep.subr.mxu0 0.0
  %1356 = vmatpush1.xpose.msra.mxu0 0.0
  %1357 = vmatprep.mubr.f32.mxu0 0.0
  %1358 = vmatmul.mubr.f32.gmra.mrb[0].mxu0 %v1289
  %v1359 = vpop.f32.mrb[0].mxu0
  %v1360 = vadd.f32 0.0, %v1359
  %v1361 = vpop.f32.mrb[0].mxu0
  %1362 = vdwg.mxu0
  %v1363 = vmul.f32 %v1360, 0.25
  %v1364 = vsel %vm844, %v1363, -inf
  %1365 = vmax.xlane.f32.xlu0 %v1364
  %v1366 = vpop.xlane.xlu0 %1365
  %v1367 = vsub.f32 %v1363, %v1366
  %v1368 = vmul.f32 %v1367, 1.442695
  %v1369 = vpow.pop %v1368
  %v1370 = vsel %vm844, %v1369, 0.0
  %1371 = vadd.xlane.f32.xlu0 %v1370
  %v1372 = vpop.xlane.xlu0 %1371
  %v1373 = vrcp.pop %v1372
  %v1374 = vmul.f32 %v1369, %v1373
  %1376 = vrot.lane.b32.xlu0 %v1283, 80
  %v1377 = vpop.permute.xlu0 %1376
  %v1380 = vsel %vm844, %v1374, 0
  %1382 = vmatprep.subr.mxu0 0.0
  %1383 = vmatpush1.msra.mxu0 %v1377
  %1384 = vmatprep.subr.mxu0 0.0
  %1385 = vmatpush1.msra.mxu0 0.0
  %1386 = vmatprep.subr.mxu0 0.0
  %1387 = vmatpush1.msra.mxu0 0.0
  %1388 = vmatprep.subr.mxu0 0.0
  %1389 = vmatpush1.msra.mxu0 0.0
  %1390 = vmatprep.subr.mxu0 0.0
  %1391 = vmatpush1.msra.mxu0 0.0
  %1392 = vmatprep.subr.mxu0 0.0
  %1393 = vmatpush1.msra.mxu0 0.0
  %1394 = vmatprep.subr.mxu0 0.0
  %1395 = vmatpush1.msra.mxu0 0.0
  %1396 = vmatprep.subr.mxu0 0.0
  %1397 = vmatpush1.msra.mxu0 0.0
  %1398 = vmatprep.subr.mxu0 0.0
  %1399 = vmatpush1.msra.mxu0 0.0
  %1400 = vmatprep.subr.mxu0 0.0
  %1401 = vmatpush1.msra.mxu0 0.0
  %1402 = vmatprep.subr.mxu0 0.0
  %1403 = vmatpush1.msra.mxu0 0.0
  %1404 = vmatprep.subr.mxu0 0.0
  %1405 = vmatpush1.msra.mxu0 0.0
  %1406 = vmatprep.subr.mxu0 0.0
  %1407 = vmatpush1.msra.mxu0 0.0
  %1408 = vmatprep.subr.mxu0 0.0
  %1409 = vmatpush1.msra.mxu0 0.0
  %1410 = vmatprep.subr.mxu0 0.0
  %1411 = vmatpush1.msra.mxu0 0.0
  %1412 = vmatprep.subr.mxu0 0.0
  %1413 = vmatpush1.msra.mxu0 0.0
  %1414 = vmatprep.subr.mxu0 0.0
  %1415 = vmatpush1.msra.mxu0 0.0
  %1416 = vmatprep.subr.mxu0 0.0
  %1417 = vmatpush1.msra.mxu0 0.0
  %1418 = vmatprep.subr.mxu0 0.0
  %1419 = vmatpush1.msra.mxu0 0.0
  %1420 = vmatprep.subr.mxu0 0.0
  %1421 = vmatpush1.msra.mxu0 0.0
  %1422 = vmatprep.subr.mxu0 0.0
  %1423 = vmatpush1.msra.mxu0 0.0
  %1424 = vmatprep.subr.mxu0 0.0
  %1425 = vmatpush1.msra.mxu0 0.0
  %1426 = vmatprep.subr.mxu0 0.0
  %1427 = vmatpush1.msra.mxu0 0.0
  %1428 = vmatprep.subr.mxu0 0.0
  %1429 = vmatpush1.msra.mxu0 0.0
  %1430 = vmatprep.subr.mxu0 0.0
  %1431 = vmatpush1.msra.mxu0 0.0
  %1432 = vmatprep.subr.mxu0 0.0
  %1433 = vmatpush1.msra.mxu0 0.0
  %1434 = vmatprep.subr.mxu0 0.0
  %1435 = vmatpush1.msra.mxu0 0.0
  %1436 = vmatprep.subr.mxu0 0.0
  %1437 = vmatpush1.msra.mxu0 0.0
  %1438 = vmatprep.subr.mxu0 0.0
  %1439 = vmatpush1.msra.mxu0 0.0
  %1440 = vmatprep.subr.mxu0 0.0
  %1441 = vmatpush1.msra.mxu0 0.0
  %1442 = vmatprep.subr.mxu0 0.0
  %1443 = vmatpush1.msra.mxu0 0.0
  %1444 = vmatprep.subr.mxu0 0.0
  %1445 = vmatpush1.msra.mxu0 0.0
  %1446 = vmatprep.mubr.f32.mxu0 0.0
  %1447 = vmatmul.mubr.f32.gmra.mrb[0].mxu0 %v1380
  %v1448 = vpop.f32.mrb[0].mxu0
  %v1449 = vadd.f32 0.0, %v1448
  %v1450 = vpop.f32.mrb[0].mxu0
  %1451 = vdwg.mxu0
  %1453 = vrot.lane.b32.xlu0 %v1449, 48
  %v1454 = vpop.permute.xlu0 %1453
  %vm1456 = vcmask 523648
  %1457 = vst.msk [vmem:[#allocation3] sm:$0xff] %vm1456, %v1454
  %v1458 = vld [vmem:[#allocation2 + $0x10] sm:$0xff]
  %v1459 = vld [vmem:[#allocation2 + $0x18] sm:$0xff]
  %1461 = vrot.lane.b32.xlu0 %v1458, 64
  %v1462 = vpop.permute.xlu0 %1461
  %v1463 = vsel %vm282, %v1458, 0
  %v1465 = vsel %vm282, %v1462, 0
  %1467 = vmatprep.subr.mxu0 0.0
  %1468 = vmatpush1.xpose.msra.mxu0 %v1465
  %1469 = vmatprep.subr.mxu0 0.0
  %1470 = vmatpush1.xpose.msra.mxu0 0.0
  %1471 = vmatprep.subr.mxu0 0.0
  %1472 = vmatpush1.xpose.msra.mxu0 0.0
  %1473 = vmatprep.subr.mxu0 0.0
  %1474 = vmatpush1.xpose.msra.mxu0 0.0
  %1475 = vmatprep.subr.mxu0 0.0
  %1476 = vmatpush1.xpose.msra.mxu0 0.0
  %1477 = vmatprep.subr.mxu0 0.0
  %1478 = vmatpush1.xpose.msra.mxu0 0.0
  %1479 = vmatprep.subr.mxu0 0.0
  %1480 = vmatpush1.xpose.msra.mxu0 0.0
  %1481 = vmatprep.subr.mxu0 0.0
  %1482 = vmatpush1.xpose.msra.mxu0 0.0
  %1483 = vmatprep.subr.mxu0 0.0
  %1484 = vmatpush1.xpose.msra.mxu0 0.0
  %1485 = vmatprep.subr.mxu0 0.0
  %1486 = vmatpush1.xpose.msra.mxu0 0.0
  %1487 = vmatprep.subr.mxu0 0.0
  %1488 = vmatpush1.xpose.msra.mxu0 0.0
  %1489 = vmatprep.subr.mxu0 0.0
  %1490 = vmatpush1.xpose.msra.mxu0 0.0
  %1491 = vmatprep.subr.mxu0 0.0
  %1492 = vmatpush1.xpose.msra.mxu0 0.0
  %1493 = vmatprep.subr.mxu0 0.0
  %1494 = vmatpush1.xpose.msra.mxu0 0.0
  %1495 = vmatprep.subr.mxu0 0.0
  %1496 = vmatpush1.xpose.msra.mxu0 0.0
  %1497 = vmatprep.subr.mxu0 0.0
  %1498 = vmatpush1.xpose.msra.mxu0 0.0
  %1499 = vmatprep.subr.mxu0 0.0
  %1500 = vmatpush1.xpose.msra.mxu0 0.0
  %1501 = vmatprep.subr.mxu0 0.0
  %1502 = vmatpush1.xpose.msra.mxu0 0.0
  %1503 = vmatprep.subr.mxu0 0.0
  %1504 = vmatpush1.xpose.msra.mxu0 0.0
  %1505 = vmatprep.subr.mxu0 0.0
  %1506 = vmatpush1.xpose.msra.mxu0 0.0
  %1507 = vmatprep.subr.mxu0 0.0
  %1508 = vmatpush1.xpose.msra.mxu0 0.0
  %1509 = vmatprep.subr.mxu0 0.0
  %1510 = vmatpush1.xpose.msra.mxu0 0.0
  %1511 = vmatprep.subr.mxu0 0.0
  %1512 = vmatpush1.xpose.msra.mxu0 0.0
  %1513 = vmatprep.subr.mxu0 0.0
  %1514 = vmatpush1.xpose.msra.mxu0 0.0
  %1515 = vmatprep.subr.mxu0 0.0
  %1516 = vmatpush1.xpose.msra.mxu0 0.0
  %1517 = vmatprep.subr.mxu0 0.0
  %1518 = vmatpush1.xpose.msra.mxu0 0.0
  %1519 = vmatprep.subr.mxu0 0.0
  %1520 = vmatpush1.xpose.msra.mxu0 0.0
  %1521 = vmatprep.subr.mxu0 0.0
  %1522 = vmatpush1.xpose.msra.mxu0 0.0
  %1523 = vmatprep.subr.mxu0 0.0
  %1524 = vmatpush1.xpose.msra.mxu0 0.0
  %1525 = vmatprep.subr.mxu0 0.0
  %1526 = vmatpush1.xpose.msra.mxu0 0.0
  %1527 = vmatprep.subr.mxu0 0.0
  %1528 = vmatpush1.xpose.msra.mxu0 0.0
  %1529 = vmatprep.subr.mxu0 0.0
  %1530 = vmatpush1.xpose.msra.mxu0 0.0
  %1531 = vmatprep.mubr.f32.mxu0 0.0
  %1532 = vmatmul.mubr.f32.gmra.mrb[0].mxu0 %v1463
  %v1533 = vpop.f32.mrb[0].mxu0
  %v1534 = vadd.f32 0.0, %v1533
  %v1535 = vpop.f32.mrb[0].mxu0
  %1536 = vdwg.mxu0
  %v1537 = vmul.f32 %v1534, 0.25
  %v1538 = vsel %vm844, %v1537, -inf
  %1539 = vmax.xlane.f32.xlu0 %v1538
  %v1540 = vpop.xlane.xlu0 %1539
  %v1541 = vsub.f32 %v1537, %v1540
  %v1542 = vmul.f32 %v1541, 1.442695
  %v1543 = vpow.pop %v1542
  %v1544 = vsel %vm844, %v1543, 0.0
  %1545 = vadd.xlane.f32.xlu0 %v1544
  %v1546 = vpop.xlane.xlu0 %1545
  %v1547 = vrcp.pop %v1546
  %v1548 = vmul.f32 %v1543, %v1547
  %v1550 = vsel %vm844, %v1548, 0
  %1552 = vmatprep.subr.mxu0 0.0
  %1553 = vmatpush1.msra.mxu0 %v1459
  %1554 = vmatprep.subr.mxu0 0.0
  %1555 = vmatpush1.msra.mxu0 0.0
  %1556 = vmatprep.subr.mxu0 0.0
  %1557 = vmatpush1.msra.mxu0 0.0
  %1558 = vmatprep.subr.mxu0 0.0
  %1559 = vmatpush1.msra.mxu0 0.0
  %1560 = vmatprep.subr.mxu0 0.0
  %1561 = vmatpush1.msra.mxu0 0.0
  %1562 = vmatprep.subr.mxu0 0.0
  %1563 = vmatpush1.msra.mxu0 0.0
  %1564 = vmatprep.subr.mxu0 0.0
  %1565 = vmatpush1.msra.mxu0 0.0
  %1566 = vmatprep.subr.mxu0 0.0
  %1567 = vmatpush1.msra.mxu0 0.0
  %1568 = vmatprep.subr.mxu0 0.0
  %1569 = vmatpush1.msra.mxu0 0.0
  %1570 = vmatprep.subr.mxu0 0.0
  %1571 = vmatpush1.msra.mxu0 0.0
  %1572 = vmatprep.subr.mxu0 0.0
  %1573 = vmatpush1.msra.mxu0 0.0
  %1574 = vmatprep.subr.mxu0 0.0
  %1575 = vmatpush1.msra.mxu0 0.0
  %1576 = vmatprep.subr.mxu0 0.0
  %1577 = vmatpush1.msra.mxu0 0.0
  %1578 = vmatprep.subr.mxu0 0.0
  %1579 = vmatpush1.msra.mxu0 0.0
  %1580 = vmatprep.subr.mxu0 0.0
  %1581 = vmatpush1.msra.mxu0 0.0
  %1582 = vmatprep.subr.mxu0 0.0
  %1583 = vmatpush1.msra.mxu0 0.0
  %1584 = vmatprep.subr.mxu0 0.0
  %1585 = vmatpush1.msra.mxu0 0.0
  %1586 = vmatprep.subr.mxu0 0.0
  %1587 = vmatpush1.msra.mxu0 0.0
  %1588 = vmatprep.subr.mxu0 0.0
  %1589 = vmatpush1.msra.mxu0 0.0
  %1590 = vmatprep.subr.mxu0 0.0
  %1591 = vmatpush1.msra.mxu0 0.0
  %1592 = vmatprep.subr.mxu0 0.0
  %1593 = vmatpush1.msra.mxu0 0.0
  %1594 = vmatprep.subr.mxu0 0.0
  %1595 = vmatpush1.msra.mxu0 0.0
  %1596 = vmatprep.subr.mxu0 0.0
  %1597 = vmatpush1.msra.mxu0 0.0
  %1598 = vmatprep.subr.mxu0 0.0
  %1599 = vmatpush1.msra.mxu0 0.0
  %1600 = vmatprep.subr.mxu0 0.0
  %1601 = vmatpush1.msra.mxu0 0.0
  %1602 = vmatprep.subr.mxu0 0.0
  %1603 = vmatpush1.msra.mxu0 0.0
  %1604 = vmatprep.subr.mxu0 0.0
  %1605 = vmatpush1.msra.mxu0 0.0
  %1606 = vmatprep.subr.mxu0 0.0
  %1607 = vmatpush1.msra.mxu0 0.0
  %1608 = vmatprep.subr.mxu0 0.0
  %1609 = vmatpush1.msra.mxu0 0.0
  %1610 = vmatprep.subr.mxu0 0.0
  %1611 = vmatpush1.msra.mxu0 0.0
  %1612 = vmatprep.subr.mxu0 0.0
  %1613 = vmatpush1.msra.mxu0 0.0
  %1614 = vmatprep.subr.mxu0 0.0
  %1615 = vmatpush1.msra.mxu0 0.0
  %1616 = vmatprep.mubr.f32.mxu0 0.0
  %1617 = vmatmul.mubr.f32.gmra.mrb[0].mxu0 %v1550
  %v1618 = vpop.f32.mrb[0].mxu0
  %v1619 = vadd.f32 0.0, %v1618
  %v1620 = vpop.f32.mrb[0].mxu0
  %1621 = vdwg.mxu0
  %1622 = vst.msk [vmem:[#allocation3 + $0x8] sm:$0xff] %vm282, %v1619
  %v1623 = vld [vmem:[#allocation2 + $0x10] sm:$0xff]
  %v1624 = vld [vmem:[#allocation2 + $0x18] sm:$0xff]
  %1626 = vrot.lane.b32.xlu0 %v1623, 112
  %v1627 = vpop.permute.xlu0 %1626
  %1628 = vrot.lane.b32.xlu0 %v1623, 48
  %v1629 = vpop.permute.xlu0 %1628
  %v1630 = vsel %vm282, %v1627, 0
  %v1632 = vsel %vm282, %v1629, 0
  %1634 = vmatprep.subr.mxu0 0.0
  %1635 = vmatpush1.xpose.msra.mxu0 %v1632
  %1636 = vmatprep.subr.mxu0 0.0
  %1637 = vmatpush1.xpose.msra.mxu0 0.0
  %1638 = vmatprep.subr.mxu0 0.0
  %1639 = vmatpush1.xpose.msra.mxu0 0.0
  %1640 = vmatprep.subr.mxu0 0.0
  %1641 = vmatpush1.xpose.msra.mxu0 0.0
  %1642 = vmatprep.subr.mxu0 0.0
  %1643 = vmatpush1.xpose.msra.mxu0 0.0
  %1644 = vmatprep.subr.mxu0 0.0
  %1645 = vmatpush1.xpose.msra.mxu0 0.0
  %1646 = vmatprep.subr.mxu0 0.0
  %1647 = vmatpush1.xpose.msra.mxu0 0.0
  %1648 = vmatprep.subr.mxu0 0.0
  %1649 = vmatpush1.xpose.msra.mxu0 0.0
  %1650 = vmatprep.subr.mxu0 0.0
  %1651 = vmatpush1.xpose.msra.mxu0 0.0
  %1652 = vmatprep.subr.mxu0 0.0
  %1653 = vmatpush1.xpose.msra.mxu0 0.0
  %1654 = vmatprep.subr.mxu0 0.0
  %1655 = vmatpush1.xpose.msra.mxu0 0.0
  %1656 = vmatprep.subr.mxu0 0.0
  %1657 = vmatpush1.xpose.msra.mxu0 0.0
  %1658 = vmatprep.subr.mxu0 0.0
  %1659 = vmatpush1.xpose.msra.mxu0 0.0
  %1660 = vmatprep.subr.mxu0 0.0
  %1661 = vmatpush1.xpose.msra.mxu0 0.0
  %1662 = vmatprep.subr.mxu0 0.0
  %1663 = vmatpush1.xpose.msra.mxu0 0.0
  %1664 = vmatprep.subr.mxu0 0.0
  %1665 = vmatpush1.xpose.msra.mxu0 0.0
  %1666 = vmatprep.subr.mxu0 0.0
  %1667 = vmatpush1.xpose.msra.mxu0 0.0
  %1668 = vmatprep.subr.mxu0 0.0
  %1669 = vmatpush1.xpose.msra.mxu0 0.0
  %1670 = vmatprep.subr.mxu0 0.0
  %1671 = vmatpush1.xpose.msra.mxu0 0.0
  %1672 = vmatprep.subr.mxu0 0.0
  %1673 = vmatpush1.xpose.msra.mxu0 0.0
  %1674 = vmatprep.subr.mxu0 0.0
  %1675 = vmatpush1.xpose.msra.mxu0 0.0
  %1676 = vmatprep.subr.mxu0 0.0
  %1677 = vmatpush1.xpose.msra.mxu0 0.0
  %1678 = vmatprep.subr.mxu0 0.0
  %1679 = vmatpush1.xpose.msra.mxu0 0.0
  %1680 = vmatprep.subr.mxu0 0.0
  %1681 = vmatpush1.xpose.msra.mxu0 0.0
  %1682 = vmatprep.subr.mxu0 0.0
  %1683 = vmatpush1.xpose.msra.mxu0 0.0
  %1684 = vmatprep.subr.mxu0 0.0
  %1685 = vmatpush1.xpose.msra.mxu0 0.0
  %1686 = vmatprep.subr.mxu0 0.0
  %1687 = vmatpush1.xpose.msra.mxu0 0.0
  %1688 = vmatprep.subr.mxu0 0.0
  %1689 = vmatpush1.xpose.msra.mxu0 0.0
  %1690 = vmatprep.subr.mxu0 0.0
  %1691 = vmatpush1.xpose.msra.mxu0 0.0
  %1692 = vmatprep.subr.mxu0 0.0
  %1693 = vmatpush1.xpose.msra.mxu0 0.0
  %1694 = vmatprep.subr.mxu0 0.0
  %1695 = vmatpush1.xpose.msra.mxu0 0.0
  %1696 = vmatprep.subr.mxu0 0.0
  %1697 = vmatpush1.xpose.msra.mxu0 0.0
  %1698 = vmatprep.mubr.f32.mxu0 0.0
  %1699 = vmatmul.mubr.f32.gmra.mrb[0].mxu0 %v1630
  %v1700 = vpop.f32.mrb[0].mxu0
  %v1701 = vadd.f32 0.0, %v1700
  %v1702 = vpop.f32.mrb[0].mxu0
  %1703 = vdwg.mxu0
  %v1704 = vmul.f32 %v1701, 0.25
  %v1705 = vsel %vm844, %v1704, -inf
  %1706 = vmax.xlane.f32.xlu0 %v1705
  %v1707 = vpop.xlane.xlu0 %1706
  %v1708 = vsub.f32 %v1704, %v1707
  %v1709 = vmul.f32 %v1708, 1.442695
  %v1710 = vpow.pop %v1709
  %v1711 = vsel %vm844, %v1710, 0.0
  %1712 = vadd.xlane.f32.xlu0 %v1711
  %v1713 = vpop.xlane.xlu0 %1712
  %v1714 = vrcp.pop %v1713
  %v1715 = vmul.f32 %v1710, %v1714
  %1717 = vrot.lane.b32.xlu0 %v1624, 112
  %v1718 = vpop.permute.xlu0 %1717
  %v1721 = vsel %vm844, %v1715, 0
  %1723 = vmatprep.subr.mxu0 0.0
  %1724 = vmatpush1.msra.mxu0 %v1718
  %1725 = vmatprep.subr.mxu0 0.0
  %1726 = vmatpush1.msra.mxu0 0.0
  %1727 = vmatprep.subr.mxu0 0.0
  %1728 = vmatpush1.msra.mxu0 0.0
  %1729 = vmatprep.subr.mxu0 0.0
  %1730 = vmatpush1.msra.mxu0 0.0
  %1731 = vmatprep.subr.mxu0 0.0
  %1732 = vmatpush1.msra.mxu0 0.0
  %1733 = vmatprep.subr.mxu0 0.0
  %1734 = vmatpush1.msra.mxu0 0.0
  %1735 = vmatprep.subr.mxu0 0.0
  %1736 = vmatpush1.msra.mxu0 0.0
  %1737 = vmatprep.subr.mxu0 0.0
  %1738 = vmatpush1.msra.mxu0 0.0
  %1739 = vmatprep.subr.mxu0 0.0
  %1740 = vmatpush1.msra.mxu0 0.0
  %1741 = vmatprep.subr.mxu0 0.0
  %1742 = vmatpush1.msra.mxu0 0.0
  %1743 = vmatprep.subr.mxu0 0.0
  %1744 = vmatpush1.msra.mxu0 0.0
  %1745 = vmatprep.subr.mxu0 0.0
  %1746 = vmatpush1.msra.mxu0 0.0
  %1747 = vmatprep.subr.mxu0 0.0
  %1748 = vmatpush1.msra.mxu0 0.0
  %1749 = vmatprep.subr.mxu0 0.0
  %1750 = vmatpush1.msra.mxu0 0.0
  %1751 = vmatprep.subr.mxu0 0.0
  %1752 = vmatpush1.msra.mxu0 0.0
  %1753 = vmatprep.subr.mxu0 0.0
  %1754 = vmatpush1.msra.mxu0 0.0
  %1755 = vmatprep.subr.mxu0 0.0
  %1756 = vmatpush1.msra.mxu0 0.0
  %1757 = vmatprep.subr.mxu0 0.0
  %1758 = vmatpush1.msra.mxu0 0.0
  %1759 = vmatprep.subr.mxu0 0.0
  %1760 = vmatpush1.msra.mxu0 0.0
  %1761 = vmatprep.subr.mxu0 0.0
  %1762 = vmatpush1.msra.mxu0 0.0
  %1763 = vmatprep.subr.mxu0 0.0
  %1764 = vmatpush1.msra.mxu0 0.0
  %1765 = vmatprep.subr.mxu0 0.0
  %1766 = vmatpush1.msra.mxu0 0.0
  %1767 = vmatprep.subr.mxu0 0.0
  %1768 = vmatpush1.msra.mxu0 0.0
  %1769 = vmatprep.subr.mxu0 0.0
  %1770 = vmatpush1.msra.mxu0 0.0
  %1771 = vmatprep.subr.mxu0 0.0
  %1772 = vmatpush1.msra.mxu0 0.0
  %1773 = vmatprep.subr.mxu0 0.0
  %1774 = vmatpush1.msra.mxu0 0.0
  %1775 = vmatprep.subr.mxu0 0.0
  %1776 = vmatpush1.msra.mxu0 0.0
  %1777 = vmatprep.subr.mxu0 0.0
  %1778 = vmatpush1.msra.mxu0 0.0
  %1779 = vmatprep.subr.mxu0 0.0
  %1780 = vmatpush1.msra.mxu0 0.0
  %1781 = vmatprep.subr.mxu0 0.0
  %1782 = vmatpush1.msra.mxu0 0.0
  %1783 = vmatprep.subr.mxu0 0.0
  %1784 = vmatpush1.msra.mxu0 0.0
  %1785 = vmatprep.subr.mxu0 0.0
  %1786 = vmatpush1.msra.mxu0 0.0
  %1787 = vmatprep.mubr.f32.mxu0 0.0
  %1788 = vmatmul.mubr.f32.gmra.mrb[0].mxu0 %v1721
  %v1789 = vpop.f32.mrb[0].mxu0
  %v1790 = vadd.f32 0.0, %v1789
  %v1791 = vpop.f32.mrb[0].mxu0
  %1792 = vdwg.mxu0
  %1794 = vrot.lane.b32.xlu0 %v1790, 16
  %v1795 = vpop.permute.xlu0 %1794
  %1797 = vst.msk [vmem:[#allocation3 + $0x8] sm:$0xff] %vm1104, %v1795
  %v1798 = vld [vmem:[#allocation2 + $0x10] sm:$0xff]
  %v1799 = vld [vmem:[#allocation2 + $0x18] sm:$0xff]
  %1801 = vrot.lane.b32.xlu0 %v1798, 96
  %v1802 = vpop.permute.xlu0 %1801
  %1803 = vrot.lane.b32.xlu0 %v1798, 32
  %v1804 = vpop.permute.xlu0 %1803
  %v1805 = vsel %vm282, %v1802, 0
  %v1807 = vsel %vm282, %v1804, 0
  %1809 = vmatprep.subr.mxu0 0.0
  %1810 = vmatpush1.xpose.msra.mxu0 %v1807
  %1811 = vmatprep.subr.mxu0 0.0
  %1812 = vmatpush1.xpose.msra.mxu0 0.0
  %1813 = vmatprep.subr.mxu0 0.0
  %1814 = vmatpush1.xpose.msra.mxu0 0.0
  %1815 = vmatprep.subr.mxu0 0.0
  %1816 = vmatpush1.xpose.msra.mxu0 0.0
  %1817 = vmatprep.subr.mxu0 0.0
  %1818 = vmatpush1.xpose.msra.mxu0 0.0
  %1819 = vmatprep.subr.mxu0 0.0
  %1820 = vmatpush1.xpose.msra.mxu0 0.0
  %1821 = vmatprep.subr.mxu0 0.0
  %1822 = vmatpush1.xpose.msra.mxu0 0.0
  %1823 = vmatprep.subr.mxu0 0.0
  %1824 = vmatpush1.xpose.msra.mxu0 0.0
  %1825 = vmatprep.subr.mxu0 0.0
  %1826 = vmatpush1.xpose.msra.mxu0 0.0
  %1827 = vmatprep.subr.mxu0 0.0
  %1828 = vmatpush1.xpose.msra.mxu0 0.0
  %1829 = vmatprep.subr.mxu0 0.0
  %1830 = vmatpush1.xpose.msra.mxu0 0.0
  %1831 = vmatprep.subr.mxu0 0.0
  %1832 = vmatpush1.xpose.msra.mxu0 0.0
  %1833 = vmatprep.subr.mxu0 0.0
  %1834 = vmatpush1.xpose.msra.mxu0 0.0
  %1835 = vmatprep.subr.mxu0 0.0
  %1836 = vmatpush1.xpose.msra.mxu0 0.0
  %1837 = vmatprep.subr.mxu0 0.0
  %1838 = vmatpush1.xpose.msra.mxu0 0.0
  %1839 = vmatprep.subr.mxu0 0.0
  %1840 = vmatpush1.xpose.msra.mxu0 0.0
  %1841 = vmatprep.subr.mxu0 0.0
  %1842 = vmatpush1.xpose.msra.mxu0 0.0
  %1843 = vmatprep.subr.mxu0 0.0
  %1844 = vmatpush1.xpose.msra.mxu0 0.0
  %1845 = vmatprep.subr.mxu0 0.0
  %1846 = vmatpush1.xpose.msra.mxu0 0.0
  %1847 = vmatprep.subr.mxu0 0.0
  %1848 = vmatpush1.xpose.msra.mxu0 0.0
  %1849 = vmatprep.subr.mxu0 0.0
  %1850 = vmatpush1.xpose.msra.mxu0 0.0
  %1851 = vmatprep.subr.mxu0 0.0
  %1852 = vmatpush1.xpose.msra.mxu0 0.0
  %1853 = vmatprep.subr.mxu0 0.0
  %1854 = vmatpush1.xpose.msra.mxu0 0.0
  %1855 = vmatprep.subr.mxu0 0.0
  %1856 = vmatpush1.xpose.msra.mxu0 0.0
  %1857 = vmatprep.subr.mxu0 0.0
  %1858 = vmatpush1.xpose.msra.mxu0 0.0
  %1859 = vmatprep.subr.mxu0 0.0
  %1860 = vmatpush1.xpose.msra.mxu0 0.0
  %1861 = vmatprep.subr.mxu0 0.0
  %1862 = vmatpush1.xpose.msra.mxu0 0.0
  %1863 = vmatprep.subr.mxu0 0.0
  %1864 = vmatpush1.xpose.msra.mxu0 0.0
  %1865 = vmatprep.subr.mxu0 0.0
  %1866 = vmatpush1.xpose.msra.mxu0 0.0
  %1867 = vmatprep.subr.mxu0 0.0
  %1868 = vmatpush1.xpose.msra.mxu0 0.0
  %1869 = vmatprep.subr.mxu0 0.0
  %1870 = vmatpush1.xpose.msra.mxu0 0.0
  %1871 = vmatprep.subr.mxu0 0.0
  %1872 = vmatpush1.xpose.msra.mxu0 0.0
  %1873 = vmatprep.mubr.f32.mxu0 0.0
  %1874 = vmatmul.mubr.f32.gmra.mrb[0].mxu0 %v1805
  %v1875 = vpop.f32.mrb[0].mxu0
  %v1876 = vadd.f32 0.0, %v1875
  %v1877 = vpop.f32.mrb[0].mxu0
  %1878 = vdwg.mxu0
  %v1879 = vmul.f32 %v1876, 0.25
  %v1880 = vsel %vm844, %v1879, -inf
  %1881 = vmax.xlane.f32.xlu0 %v1880
  %v1882 = vpop.xlane.xlu0 %1881
  %v1883 = vsub.f32 %v1879, %v1882
  %v1884 = vmul.f32 %v1883, 1.442695
  %v1885 = vpow.pop %v1884
  %v1886 = vsel %vm844, %v1885, 0.0
  %1887 = vadd.xlane.f32.xlu0 %v1886
  %v1888 = vpop.xlane.xlu0 %1887
  %v1889 = vrcp.pop %v1888
  %v1890 = vmul.f32 %v1885, %v1889
  %1892 = vrot.lane.b32.xlu0 %v1799, 96
  %v1893 = vpop.permute.xlu0 %1892
  %v1896 = vsel %vm844, %v1890, 0
  %1898 = vmatprep.subr.mxu0 0.0
  %1899 = vmatpush1.msra.mxu0 %v1893
  %1900 = vmatprep.subr.mxu0 0.0
  %1901 = vmatpush1.msra.mxu0 0.0
  %1902 = vmatprep.subr.mxu0 0.0
  %1903 = vmatpush1.msra.mxu0 0.0
  %1904 = vmatprep.subr.mxu0 0.0
  %1905 = vmatpush1.msra.mxu0 0.0
  %1906 = vmatprep.subr.mxu0 0.0
  %1907 = vmatpush1.msra.mxu0 0.0
  %1908 = vmatprep.subr.mxu0 0.0
  %1909 = vmatpush1.msra.mxu0 0.0
  %1910 = vmatprep.subr.mxu0 0.0
  %1911 = vmatpush1.msra.mxu0 0.0
  %1912 = vmatprep.subr.mxu0 0.0
  %1913 = vmatpush1.msra.mxu0 0.0
  %1914 = vmatprep.subr.mxu0 0.0
  %1915 = vmatpush1.msra.mxu0 0.0
  %1916 = vmatprep.subr.mxu0 0.0
  %1917 = vmatpush1.msra.mxu0 0.0
  %1918 = vmatprep.subr.mxu0 0.0
  %1919 = vmatpush1.msra.mxu0 0.0
  %1920 = vmatprep.subr.mxu0 0.0
  %1921 = vmatpush1.msra.mxu0 0.0
  %1922 = vmatprep.subr.mxu0 0.0
  %1923 = vmatpush1.msra.mxu0 0.0
  %1924 = vmatprep.subr.mxu0 0.0
  %1925 = vmatpush1.msra.mxu0 0.0
  %1926 = vmatprep.subr.mxu0 0.0
  %1927 = vmatpush1.msra.mxu0 0.0
  %1928 = vmatprep.subr.mxu0 0.0
  %1929 = vmatpush1.msra.mxu0 0.0
  %1930 = vmatprep.subr.mxu0 0.0
  %1931 = vmatpush1.msra.mxu0 0.0
  %1932 = vmatprep.subr.mxu0 0.0
  %1933 = vmatpush1.msra.mxu0 0.0
  %1934 = vmatprep.subr.mxu0 0.0
  %1935 = vmatpush1.msra.mxu0 0.0
  %1936 = vmatprep.subr.mxu0 0.0
  %1937 = vmatpush1.msra.mxu0 0.0
  %1938 = vmatprep.subr.mxu0 0.0
  %1939 = vmatpush1.msra.mxu0 0.0
  %1940 = vmatprep.subr.mxu0 0.0
  %1941 = vmatpush1.msra.mxu0 0.0
  %1942 = vmatprep.subr.mxu0 0.0
  %1943 = vmatpush1.msra.mxu0 0.0
  %1944 = vmatprep.subr.mxu0 0.0
  %1945 = vmatpush1.msra.mxu0 0.0
  %1946 = vmatprep.subr.mxu0 0.0
  %1947 = vmatpush1.msra.mxu0 0.0
  %1948 = vmatprep.subr.mxu0 0.0
  %1949 = vmatpush1.msra.mxu0 0.0
  %1950 = vmatprep.subr.mxu0 0.0
  %1951 = vmatpush1.msra.mxu0 0.0
  %1952 = vmatprep.subr.mxu0 0.0
  %1953 = vmatpush1.msra.mxu0 0.0
  %1954 = vmatprep.subr.mxu0 0.0
  %1955 = vmatpush1.msra.mxu0 0.0
  %1956 = vmatprep.subr.mxu0 0.0
  %1957 = vmatpush1.msra.mxu0 0.0
  %1958 = vmatprep.subr.mxu0 0.0
  %1959 = vmatpush1.msra.mxu0 0.0
  %1960 = vmatprep.subr.mxu0 0.0
  %1961 = vmatpush1.msra.mxu0 0.0
  %1962 = vmatprep.mubr.f32.mxu0 0.0
  %1963 = vmatmul.mubr.f32.gmra.mrb[0].mxu0 %v1896
  %v1964 = vpop.f32.mrb[0].mxu0
  %v1965 = vadd.f32 0.0, %v1964
  %v1966 = vpop.f32.mrb[0].mxu0
  %1967 = vdwg.mxu0
  %1969 = vrot.lane.b32.xlu0 %v1965, 32
  %v1970 = vpop.permute.xlu0 %1969
  %1972 = vst.msk [vmem:[#allocation3 + $0x8] sm:$0xff] %vm1280, %v1970
  %v1973 = vld [vmem:[#allocation2 + $0x10] sm:$0xff]
  %v1974 = vld [vmem:[#allocation2 + $0x18] sm:$0xff]
  %1976 = vrot.lane.b32.xlu0 %v1973, 80
  %v1977 = vpop.permute.xlu0 %1976
  %1978 = vrot.lane.b32.xlu0 %v1973, 16
  %v1979 = vpop.permute.xlu0 %1978
  %v1980 = vsel %vm282, %v1977, 0
  %v1982 = vsel %vm282, %v1979, 0
  %1984 = vmatprep.subr.mxu0 0.0
  %1985 = vmatpush1.xpose.msra.mxu0 %v1982
  %1986 = vmatprep.subr.mxu0 0.0
  %1987 = vmatpush1.xpose.msra.mxu0 0.0
  %1988 = vmatprep.subr.mxu0 0.0
  %1989 = vmatpush1.xpose.msra.mxu0 0.0
  %1990 = vmatprep.subr.mxu0 0.0
  %1991 = vmatpush1.xpose.msra.mxu0 0.0
  %1992 = vmatprep.subr.mxu0 0.0
  %1993 = vmatpush1.xpose.msra.mxu0 0.0
  %1994 = vmatprep.subr.mxu0 0.0
  %1995 = vmatpush1.xpose.msra.mxu0 0.0
  %1996 = vmatprep.subr.mxu0 0.0
  %1997 = vmatpush1.xpose.msra.mxu0 0.0
  %1998 = vmatprep.subr.mxu0 0.0
  %1999 = vmatpush1.xpose.msra.mxu0 0.0
  %2000 = vmatprep.subr.mxu0 0.0
  %2001 = vmatpush1.xpose.msra.mxu0 0.0
  %2002 = vmatprep.subr.mxu0 0.0
  %2003 = vmatpush1.xpose.msra.mxu0 0.0
  %2004 = vmatprep.subr.mxu0 0.0
  %2005 = vmatpush1.xpose.msra.mxu0 0.0
  %2006 = vmatprep.subr.mxu0 0.0
  %2007 = vmatpush1.xpose.msra.mxu0 0.0
  %2008 = vmatprep.subr.mxu0 0.0
  %2009 = vmatpush1.xpose.msra.mxu0 0.0
  %2010 = vmatprep.subr.mxu0 0.0
  %2011 = vmatpush1.xpose.msra.mxu0 0.0
  %2012 = vmatprep.subr.mxu0 0.0
  %2013 = vmatpush1.xpose.msra.mxu0 0.0
  %2014 = vmatprep.subr.mxu0 0.0
  %2015 = vmatpush1.xpose.msra.mxu0 0.0
  %2016 = vmatprep.subr.mxu0 0.0
  %2017 = vmatpush1.xpose.msra.mxu0 0.0
  %2018 = vmatprep.subr.mxu0 0.0
  %2019 = vmatpush1.xpose.msra.mxu0 0.0
  %2020 = vmatprep.subr.mxu0 0.0
  %2021 = vmatpush1.xpose.msra.mxu0 0.0
  %2022 = vmatprep.subr.mxu0 0.0
  %2023 = vmatpush1.xpose.msra.mxu0 0.0
  %2024 = vmatprep.subr.mxu0 0.0
  %2025 = vmatpush1.xpose.msra.mxu0 0.0
  %2026 = vmatprep.subr.mxu0 0.0
  %2027 = vmatpush1.xpose.msra.mxu0 0.0
  %2028 = vmatprep.subr.mxu0 0.0
  %2029 = vmatpush1.xpose.msra.mxu0 0.0
  %2030 = vmatprep.subr.mxu0 0.0
  %2031 = vmatpush1.xpose.msra.mxu0 0.0
  %2032 = vmatprep.subr.mxu0 0.0
  %2033 = vmatpush1.xpose.msra.mxu0 0.0
  %2034 = vmatprep.subr.mxu0 0.0
  %2035 = vmatpush1.xpose.msra.mxu0 0.0
  %2036 = vmatprep.subr.mxu0 0.0
  %2037 = vmatpush1.xpose.msra.mxu0 0.0
  %2038 = vmatprep.subr.mxu0 0.0
  %2039 = vmatpush1.xpose.msra.mxu0 0.0
  %2040 = vmatprep.subr.mxu0 0.0
  %2041 = vmatpush1.xpose.msra.mxu0 0.0
  %2042 = vmatprep.subr.mxu0 0.0
  %2043 = vmatpush1.xpose.msra.mxu0 0.0
  %2044 = vmatprep.subr.mxu0 0.0
  %2045 = vmatpush1.xpose.msra.mxu0 0.0
  %2046 = vmatprep.subr.mxu0 0.0
  %2047 = vmatpush1.xpose.msra.mxu0 0.0
  %2048 = vmatprep.mubr.f32.mxu0 0.0
  %2049 = vmatmul.mubr.f32.gmra.mrb[0].mxu0 %v1980
  %v2050 = vpop.f32.mrb[0].mxu0
  %v2051 = vadd.f32 0.0, %v2050
  %v2052 = vpop.f32.mrb[0].mxu0
  %2053 = vdwg.mxu0
  %v2054 = vmul.f32 %v2051, 0.25
  %v2055 = vsel %vm844, %v2054, -inf
  %2056 = vmax.xlane.f32.xlu0 %v2055
  %v2057 = vpop.xlane.xlu0 %2056
  %v2058 = vsub.f32 %v2054, %v2057
  %v2059 = vmul.f32 %v2058, 1.442695
  %v2060 = vpow.pop %v2059
  %v2061 = vsel %vm844, %v2060, 0.0
  %2062 = vadd.xlane.f32.xlu0 %v2061
  %v2063 = vpop.xlane.xlu0 %2062
  %v2064 = vrcp.pop %v2063
  %v2065 = vmul.f32 %v2060, %v2064
  %2067 = vrot.lane.b32.xlu0 %v1974, 80
  %v2068 = vpop.permute.xlu0 %2067
  %v2071 = vsel %vm844, %v2065, 0
  %2073 = vmatprep.subr.mxu0 0.0
  %2074 = vmatpush1.msra.mxu0 %v2068
  %2075 = vmatprep.subr.mxu0 0.0
  %2076 = vmatpush1.msra.mxu0 0.0
  %2077 = vmatprep.subr.mxu0 0.0
  %2078 = vmatpush1.msra.mxu0 0.0
  %2079 = vmatprep.subr.mxu0 0.0
  %2080 = vmatpush1.msra.mxu0 0.0
  %2081 = vmatprep.subr.mxu0 0.0
  %2082 = vmatpush1.msra.mxu0 0.0
  %2083 = vmatprep.subr.mxu0 0.0
  %2084 = vmatpush1.msra.mxu0 0.0
  %2085 = vmatprep.subr.mxu0 0.0
  %2086 = vmatpush1.msra.mxu0 0.0
  %2087 = vmatprep.subr.mxu0 0.0
  %2088 = vmatpush1.msra.mxu0 0.0
  %2089 = vmatprep.subr.mxu0 0.0
  %2090 = vmatpush1.msra.mxu0 0.0
  %2091 = vmatprep.subr.mxu0 0.0
  %2092 = vmatpush1.msra.mxu0 0.0
  %2093 = vmatprep.subr.mxu0 0.0
  %2094 = vmatpush1.msra.mxu0 0.0
  %2095 = vmatprep.subr.mxu0 0.0
  %2096 = vmatpush1.msra.mxu0 0.0
  %2097 = vmatprep.subr.mxu0 0.0
  %2098 = vmatpush1.msra.mxu0 0.0
  %2099 = vmatprep.subr.mxu0 0.0
  %2100 = vmatpush1.msra.mxu0 0.0
  %2101 = vmatprep.subr.mxu0 0.0
  %2102 = vmatpush1.msra.mxu0 0.0
  %2103 = vmatprep.subr.mxu0 0.0
  %2104 = vmatpush1.msra.mxu0 0.0
  %2105 = vmatprep.subr.mxu0 0.0
  %2106 = vmatpush1.msra.mxu0 0.0
  %2107 = vmatprep.subr.mxu0 0.0
  %2108 = vmatpush1.msra.mxu0 0.0
  %2109 = vmatprep.subr.mxu0 0.0
  %2110 = vmatpush1.msra.mxu0 0.0
  %2111 = vmatprep.subr.mxu0 0.0
  %2112 = vmatpush1.msra.mxu0 0.0
  %2113 = vmatprep.subr.mxu0 0.0
  %2114 = vmatpush1.msra.mxu0 0.0
  %2115 = vmatprep.subr.mxu0 0.0
  %2116 = vmatpush1.msra.mxu0 0.0
  %2117 = vmatprep.subr.mxu0 0.0
  %2118 = vmatpush1.msra.mxu0 0.0
  %2119 = vmatprep.subr.mxu0 0.0
  %2120 = vmatpush1.msra.mxu0 0.0
  %2121 = vmatprep.subr.mxu0 0.0
  %2122 = vmatpush1.msra.mxu0 0.0
  %2123 = vmatprep.subr.mxu0 0.0
  %2124 = vmatpush1.msra.mxu0 0.0
  %2125 = vmatprep.subr.mxu0 0.0
  %2126 = vmatpush1.msra.mxu0 0.0
  %2127 = vmatprep.subr.mxu0 0.0
  %2128 = vmatpush1.msra.mxu0 0.0
  %2129 = vmatprep.subr.mxu0 0.0
  %2130 = vmatpush1.msra.mxu0 0.0
  %2131 = vmatprep.subr.mxu0 0.0
  %2132 = vmatpush1.msra.mxu0 0.0
  %2133 = vmatprep.subr.mxu0 0.0
  %2134 = vmatpush1.msra.mxu0 0.0
  %2135 = vmatprep.subr.mxu0 0.0
  %2136 = vmatpush1.msra.mxu0 0.0
  %2137 = vmatprep.mubr.f32.mxu0 0.0
  %2138 = vmatmul.mubr.f32.gmra.mrb[0].mxu0 %v2071
  %v2139 = vpop.f32.mrb[0].mxu0
  %v2140 = vadd.f32 0.0, %v2139
  %v2141 = vpop.f32.mrb[0].mxu0
  %2142 = vdwg.mxu0
  %2144 = vrot.lane.b32.xlu0 %v2140, 48
  %v2145 = vpop.permute.xlu0 %2144
  %2147 = vst.msk [vmem:[#allocation3 + $0x8] sm:$0xff] %vm1456, %v2145
  %v2148 = vld [vmem:[#allocation3] sm:$0xff]
  %v2149 = vld [vmem:[#allocation3 + $0x8] sm:$0xff]
  %v2151 = vlaneseq
  %v2152 = vshrl.u32 %v2151, 7
  %v2153 = vsub.s32 0, %v2152
  %v2154 = vrot.slane %v634, %v2153
  %v2157 = vsel %vm676, %v2148, 0
  %v2160 = vsel %vm676, %v2149, 0
  %2162 = vmatprep.subr.mxu0 0.0
  %2163 = vmatpush1.msra.mxu0 %v626
  %2164 = vmatprep.subr.mxu0 0.0
  %2165 = vmatpush1.msra.mxu0 %v627
  %2166 = vmatprep.subr.mxu0 0.0
  %2167 = vmatpush1.msra.mxu0 %v628
  %2168 = vmatprep.subr.mxu0 0.0
  %2169 = vmatpush1.msra.mxu0 %v629
  %2170 = vmatprep.subr.mxu0 0.0
  %2171 = vmatpush1.msra.mxu0 %v630
  %2172 = vmatprep.subr.mxu0 0.0
  %2173 = vmatpush1.msra.mxu0 %v631
  %2174 = vmatprep.subr.mxu0 0.0
  %2175 = vmatpush1.msra.mxu0 %v632
  %2176 = vmatprep.subr.mxu0 0.0
  %2177 = vmatpush1.msra.mxu0 %v633
  %2178 = vmatprep.subr.mxu0 0.0
  %2179 = vmatpush1.msra.mxu0 0.0
  %2180 = vmatprep.subr.mxu0 0.0
  %2181 = vmatpush1.msra.mxu0 0.0
  %2182 = vmatprep.subr.mxu0 0.0
  %2183 = vmatpush1.msra.mxu0 0.0
  %2184 = vmatprep.subr.mxu0 0.0
  %2185 = vmatpush1.msra.mxu0 0.0
  %2186 = vmatprep.subr.mxu0 0.0
  %2187 = vmatpush1.msra.mxu0 0.0
  %2188 = vmatprep.subr.mxu0 0.0
  %2189 = vmatpush1.msra.mxu0 0.0
  %2190 = vmatprep.subr.mxu0 0.0
  %2191 = vmatpush1.msra.mxu0 0.0
  %2192 = vmatprep.subr.mxu0 0.0
  %2193 = vmatpush1.msra.mxu0 0.0
  %2194 = vmatprep.subr.mxu0 0.0
  %2195 = vmatpush1.msra.mxu0 0.0
  %2196 = vmatprep.subr.mxu0 0.0
  %2197 = vmatpush1.msra.mxu0 0.0
  %2198 = vmatprep.subr.mxu0 0.0
  %2199 = vmatpush1.msra.mxu0 0.0
  %2200 = vmatprep.subr.mxu0 0.0
  %2201 = vmatpush1.msra.mxu0 0.0
  %2202 = vmatprep.subr.mxu0 0.0
  %2203 = vmatpush1.msra.mxu0 0.0
  %2204 = vmatprep.subr.mxu0 0.0
  %2205 = vmatpush1.msra.mxu0 0.0
  %2206 = vmatprep.subr.mxu0 0.0
  %2207 = vmatpush1.msra.mxu0 0.0
  %2208 = vmatprep.subr.mxu0 0.0
  %2209 = vmatpush1.msra.mxu0 0.0
  %2210 = vmatprep.subr.mxu0 0.0
  %2211 = vmatpush1.msra.mxu0 0.0
  %2212 = vmatprep.subr.mxu0 0.0
  %2213 = vmatpush1.msra.mxu0 0.0
  %2214 = vmatprep.subr.mxu0 0.0
  %2215 = vmatpush1.msra.mxu0 0.0
  %2216 = vmatprep.subr.mxu0 0.0
  %2217 = vmatpush1.msra.mxu0 0.0
  %2218 = vmatprep.subr.mxu0 0.0
  %2219 = vmatpush1.msra.mxu0 0.0
  %2220 = vmatprep.subr.mxu0 0.0
  %2221 = vmatpush1.msra.mxu0 0.0
  %2222 = vmatprep.subr.mxu0 0.0
  %2223 = vmatpush1.msra.mxu0 0.0
  %2224 = vmatprep.subr.mxu0 0.0
  %2225 = vmatpush1.msra.mxu0 0.0
  %2226 = vmatprep.mubr.f32.mxu0 0.0
  %2227 = vmatmul.mubr.f32.gmra.mrb[0].mxu0 %v2157
  %v2228 = vpop.f32.mrb[0].mxu0
  %v2229 = vadd.f32 %v2154, %v2228
  %v2230 = vpop.f32.mrb[0].mxu0
  %2231 = vmatprep.mubr.f32.mxu0 0.0
  %2232 = vmatmul.mubr.f32.gmra.mrb[0].mxu0 %v2160
  %v2233 = vpop.f32.mrb[0].mxu0
  %v2234 = vadd.f32 %v2154, %v2233
  %v2235 = vpop.f32.mrb[0].mxu0
  %2236 = vdwg.mxu0
  %v2237 = vadd.f32 %v607, %v2229
  %v2238 = vadd.f32 %v608, %v2234
  %v2239 = vsel %vm676, %v2237, 0.0
  %2240 = vadd.xlane.f32.xlu0 %v2239
  %v2241 = vpop.xlane.xlu0 %2240
  %v2242 = vsel %vm676, %v2238, 0.0
  %2243 = vadd.xlane.f32.xlu0 %v2242
  %v2244 = vpop.xlane.xlu0 %2243
  %v2245 = vrcp.pop 64.0
  %v2246 = vmul.f32 %v2241, %v2245
  %v2247 = vmul.f32 %v2244, %v2245
  %v2248 = vsub.f32 %v2237, %v2246
  %v2249 = vsub.f32 %v2238, %v2247
  %v2250 = vmul.f32 %v2248, %v2248
  %v2251 = vmul.f32 %v2249, %v2249
  %v2252 = vsel %vm676, %v2250, 0.0
  %2253 = vadd.xlane.f32.xlu0 %v2252
  %v2254 = vpop.xlane.xlu0 %2253
  %v2255 = vsel %vm676, %v2251, 0.0
  %2256 = vadd.xlane.f32.xlu0 %v2255
  %v2257 = vpop.xlane.xlu0 %2256
  %v2258 = vmul.f32 %v2254, %v2245
  %v2259 = vmul.f32 %v2257, %v2245
  %v2260 = vadd.f32 %v2258, 1e-05
  %v2261 = vadd.f32 %v2259, 1e-05
  %v2262 = vrsqrt.pop %v2260
  %v2263 = vrsqrt.pop %v2261
  %v2264 = vmul.f32 %v2248, %v2262
  %v2265 = vmul.f32 %v2249, %v2263
  %v2267 = vlaneseq
  %v2268 = vshrl.u32 %v2267, 7
  %v2269 = vsub.s32 0, %v2268
  %v2270 = vrot.slane %v661, %v2269
  %v2272 = vmul.f32 %v2264, %v2270
  %v2273 = vmul.f32 %v2265, %v2270
  %v2275 = vlaneseq
  %v2276 = vshrl.u32 %v2275, 7
  %v2277 = vsub.s32 0, %v2276
  %v2278 = vrot.slane %v662, %v2277
  %v2280 = vadd.f32 %v2272, %v2278
  %v2281 = vadd.f32 %v2273, %v2278
  %v2283 = vlaneseq
  %v2284 = vshrl.u32 %v2283, 7
  %v2285 = vsub.s32 0, %v2284
  %v2286 = vrot.slane %v643, %v2285
  %v2289 = vsel %vm676, %v2280, 0
  %v2292 = vsel %vm676, %v2281, 0
  %2294 = vmatprep.subr.mxu0 0.0
  %2295 = vmatpush1.msra.mxu0 %v635
  %2296 = vmatprep.subr.mxu0 0.0
  %2297 = vmatpush1.msra.mxu0 %v636
  %2298 = vmatprep.subr.mxu0 0.0
  %2299 = vmatpush1.msra.mxu0 %v637
  %2300 = vmatprep.subr.mxu0 0.0
  %2301 = vmatpush1.msra.mxu0 %v638
  %2302 = vmatprep.subr.mxu0 0.0
  %2303 = vmatpush1.msra.mxu0 %v639
  %2304 = vmatprep.subr.mxu0 0.0
  %2305 = vmatpush1.msra.mxu0 %v640
  %2306 = vmatprep.subr.mxu0 0.0
  %2307 = vmatpush1.msra.mxu0 %v641
  %2308 = vmatprep.subr.mxu0 0.0
  %2309 = vmatpush1.msra.mxu0 %v642
  %2310 = vmatprep.subr.mxu0 0.0
  %2311 = vmatpush1.msra.mxu0 0.0
  %2312 = vmatprep.subr.mxu0 0.0
  %2313 = vmatpush1.msra.mxu0 0.0
  %2314 = vmatprep.subr.mxu0 0.0
  %2315 = vmatpush1.msra.mxu0 0.0
  %2316 = vmatprep.subr.mxu0 0.0
  %2317 = vmatpush1.msra.mxu0 0.0
  %2318 = vmatprep.subr.mxu0 0.0
  %2319 = vmatpush1.msra.mxu0 0.0
  %2320 = vmatprep.subr.mxu0 0.0
  %2321 = vmatpush1.msra.mxu0 0.0
  %2322 = vmatprep.subr.mxu0 0.0
  %2323 = vmatpush1.msra.mxu0 0.0
  %2324 = vmatprep.subr.mxu0 0.0
  %2325 = vmatpush1.msra.mxu0 0.0
  %2326 = vmatprep.subr.mxu0 0.0
  %2327 = vmatpush1.msra.mxu0 0.0
  %2328 = vmatprep.subr.mxu0 0.0
  %2329 = vmatpush1.msra.mxu0 0.0
  %2330 = vmatprep.subr.mxu0 0.0
  %2331 = vmatpush1.msra.mxu0 0.0
  %2332 = vmatprep.subr.mxu0 0.0
  %2333 = vmatpush1.msra.mxu0 0.0
  %2334 = vmatprep.subr.mxu0 0.0
  %2335 = vmatpush1.msra.mxu0 0.0
  %2336 = vmatprep.subr.mxu0 0.0
  %2337 = vmatpush1.msra.mxu0 0.0
  %2338 = vmatprep.subr.mxu0 0.0
  %2339 = vmatpush1.msra.mxu0 0.0
  %2340 = vmatprep.subr.mxu0 0.0
  %2341 = vmatpush1.msra.mxu0 0.0
  %2342 = vmatprep.subr.mxu0 0.0
  %2343 = vmatpush1.msra.mxu0 0.0
  %2344 = vmatprep.subr.mxu0 0.0
  %2345 = vmatpush1.msra.mxu0 0.0
  %2346 = vmatprep.subr.mxu0 0.0
  %2347 = vmatpush1.msra.mxu0 0.0
  %2348 = vmatprep.subr.mxu0 0.0
  %2349 = vmatpush1.msra.mxu0 0.0
  %2350 = vmatprep.subr.mxu0 0.0
  %2351 = vmatpush1.msra.mxu0 0.0
  %2352 = vmatprep.subr.mxu0 0.0
  %2353 = vmatpush1.msra.mxu0 0.0
  %2354 = vmatprep.subr.mxu0 0.0
  %2355 = vmatpush1.msra.mxu0 0.0
  %2356 = vmatprep.subr.mxu0 0.0
  %2357 = vmatpush1.msra.mxu0 0.0
  %2358 = vmatprep.mubr.f32.mxu0 0.0
  %2359 = vmatmul.mubr.f32.gmra.mrb[0].mxu0 %v2289
  %v2360 = vpop.f32.mrb[0].mxu0
  %v2361 = vadd.f32 %v2286, %v2360
  %v2362 = vpop.f32.mrb[0].mxu0
  %2363 = vmatprep.mubr.f32.mxu0 0.0
  %2364 = vmatmul.mubr.f32.gmra.mrb[0].mxu0 %v2292
  %v2365 = vpop.f32.mrb[0].mxu0
  %v2366 = vadd.f32 %v2286, %v2365
  %v2367 = vpop.f32.mrb[0].mxu0
  %2368 = vdwg.mxu0
  %v2369 = vmax.f32 %v2361, 0.0
  %v2370 = vmax.f32 %v2366, 0.0
  %v2372 = vlaneseq
  %v2373 = vshrl.u32 %v2372, 7
  %v2374 = vsub.s32 0, %v2373
  %v2375 = vrot.slane %v660, %v2374
  %2377 = vmatprep.subr.mxu0 0.0
  %2378 = vmatpush1.msra.mxu0 %v644
  %2379 = vmatprep.subr.mxu0 0.0
  %2380 = vmatpush1.msra.mxu0 %v645
  %2381 = vmatprep.subr.mxu0 0.0
  %2382 = vmatpush1.msra.mxu0 %v646
  %2383 = vmatprep.subr.mxu0 0.0
  %2384 = vmatpush1.msra.mxu0 %v647
  %2385 = vmatprep.subr.mxu0 0.0
  %2386 = vmatpush1.msra.mxu0 %v648
  %2387 = vmatprep.subr.mxu0 0.0
  %2388 = vmatpush1.msra.mxu0 %v649
  %2389 = vmatprep.subr.mxu0 0.0
  %2390 = vmatpush1.msra.mxu0 %v650
  %2391 = vmatprep.subr.mxu0 0.0
  %2392 = vmatpush1.msra.mxu0 %v651
  %2393 = vmatprep.subr.mxu0 0.0
  %2394 = vmatpush1.msra.mxu0 %v652
  %2395 = vmatprep.subr.mxu0 0.0
  %2396 = vmatpush1.msra.mxu0 %v653
  %2397 = vmatprep.subr.mxu0 0.0
  %2398 = vmatpush1.msra.mxu0 %v654
  %2399 = vmatprep.subr.mxu0 0.0
  %2400 = vmatpush1.msra.mxu0 %v655
  %2401 = vmatprep.subr.mxu0 0.0
  %2402 = vmatpush1.msra.mxu0 %v656
  %2403 = vmatprep.subr.mxu0 0.0
  %2404 = vmatpush1.msra.mxu0 %v657
  %2405 = vmatprep.subr.mxu0 0.0
  %2406 = vmatpush1.msra.mxu0 %v658
  %2407 = vmatprep.subr.mxu0 0.0
  %2408 = vmatpush1.msra.mxu0 %v659
  %2409 = vmatprep.subr.mxu0 0.0
  %2410 = vmatpush1.msra.mxu0 0.0
  %2411 = vmatprep.subr.mxu0 0.0
  %2412 = vmatpush1.msra.mxu0 0.0
  %2413 = vmatprep.subr.mxu0 0.0
  %2414 = vmatpush1.msra.mxu0 0.0
  %2415 = vmatprep.subr.mxu0 0.0
  %2416 = vmatpush1.msra.mxu0 0.0
  %2417 = vmatprep.subr.mxu0 0.0
  %2418 = vmatpush1.msra.mxu0 0.0
  %2419 = vmatprep.subr.mxu0 0.0
  %2420 = vmatpush1.msra.mxu0 0.0
  %2421 = vmatprep.subr.mxu0 0.0
  %2422 = vmatpush1.msra.mxu0 0.0
  %2423 = vmatprep.subr.mxu0 0.0
  %2424 = vmatpush1.msra.mxu0 0.0
  %2425 = vmatprep.subr.mxu0 0.0
  %2426 = vmatpush1.msra.mxu0 0.0
  %2427 = vmatprep.subr.mxu0 0.0
  %2428 = vmatpush1.msra.mxu0 0.0
  %2429 = vmatprep.subr.mxu0 0.0
  %2430 = vmatpush1.msra.mxu0 0.0
  %2431 = vmatprep.subr.mxu0 0.0
  %2432 = vmatpush1.msra.mxu0 0.0
  %2433 = vmatprep.subr.mxu0 0.0
  %2434 = vmatpush1.msra.mxu0 0.0
  %2435 = vmatprep.subr.mxu0 0.0
  %2436 = vmatpush1.msra.mxu0 0.0
  %2437 = vmatprep.subr.mxu0 0.0
  %2438 = vmatpush1.msra.mxu0 0.0
  %2439 = vmatprep.subr.mxu0 0.0
  %2440 = vmatpush1.msra.mxu0 0.0
  %2441 = vmatprep.mubr.f32.mxu0 0.0
  %2442 = vmatmul.mubr.f32.gmra.mrb[0].mxu0 %v2369
  %v2443 = vpop.f32.mrb[0].mxu0
  %v2444 = vadd.f32 %v2375, %v2443
  %v2445 = vpop.f32.mrb[0].mxu0
  %2446 = vmatprep.mubr.f32.mxu0 0.0
  %2447 = vmatmul.mubr.f32.gmra.mrb[0].mxu0 %v2370
  %v2448 = vpop.f32.mrb[0].mxu0
  %v2449 = vadd.f32 %v2375, %v2448
  %v2450 = vpop.f32.mrb[0].mxu0
  %2451 = vdwg.mxu0
  %v2452 = vadd.f32 %v2280, %v2444
  %v2453 = vadd.f32 %v2281, %v2449
  %v2454 = vsel %vm676, %v2452, 0.0
  %2455 = vadd.xlane.f32.xlu0 %v2454
  %v2456 = vpop.xlane.xlu0 %2455
  %v2457 = vsel %vm676, %v2453, 0.0
  %2458 = vadd.xlane.f32.xlu0 %v2457
  %v2459 = vpop.xlane.xlu0 %2458
  %v2460 = vmul.f32 %v2456, %v2245
  %v2461 = vmul.f32 %v2459, %v2245
  %v2462 = vsub.f32 %v2452, %v2460
  %v2463 = vsub.f32 %v2453, %v2461
  %v2464 = vmul.f32 %v2462, %v2462
  %v2465 = vmul.f32 %v2463, %v2463
  %v2466 = vsel %vm676, %v2464, 0.0
  %2467 = vadd.xlane.f32.xlu0 %v2466
  %v2468 = vpop.xlane.xlu0 %2467
  %v2469 = vsel %vm676, %v2465, 0.0
  %2470 = vadd.xlane.f32.xlu0 %v2469
  %v2471 = vpop.xlane.xlu0 %2470
  %v2472 = vmul.f32 %v2468, %v2245
  %v2473 = vmul.f32 %v2471, %v2245
  %v2474 = vadd.f32 %v2472, 1e-05
  %v2475 = vadd.f32 %v2473, 1e-05
  %v2476 = vrsqrt.pop %v2474
  %v2477 = vrsqrt.pop %v2475
  %v2478 = vmul.f32 %v2462, %v2476
  %v2479 = vmul.f32 %v2463, %v2477
  %v2481 = vlaneseq
  %v2482 = vshrl.u32 %v2481, 7
  %v2483 = vsub.s32 0, %v2482
  %v2484 = vrot.slane %v663, %v2483
  %v2486 = vmul.f32 %v2478, %v2484
  %v2487 = vmul.f32 %v2479, %v2484
  %v2489 = vlaneseq
  %v2490 = vshrl.u32 %v2489, 7
  %v2491 = vsub.s32 0, %v2490
  %v2492 = vrot.slane %v664, %v2491
  %v2494 = vadd.f32 %v2486, %v2492
  %v2495 = vadd.f32 %v2487, %v2492
  %v2496 = vld [vmem:[%s45] sm:$0xff]
  %v2497 = vld [vmem:[%s45 + $0x8] sm:$0xff]
  %v2498 = vld [vmem:[%s45 + $0x10] sm:$0xff]
  %v2499 = vld [vmem:[%s45 + $0x18] sm:$0xff]
  %v2500 = vld [vmem:[%s45 + $0x20] sm:$0xff]
  %v2501 = vld [vmem:[%s45 + $0x28] sm:$0xff]
  %v2502 = vld [vmem:[%s45 + $0x30] sm:$0xff]
  %v2503 = vld [vmem:[%s45 + $0x38] sm:$0xff]
  %v2504 = vld [vmem:[%s45 + $0x40] sm:$0xff]
  %v2505 = vld [vmem:[%s45 + $0x48] sm:$0xff]
  %v2506 = vld [vmem:[%s45 + $0x50] sm:$0xff]
  %v2507 = vld [vmem:[%s45 + $0x58] sm:$0xff]
  %v2508 = vld [vmem:[%s45 + $0x60] sm:$0xff]
  %v2509 = vld [vmem:[%s45 + $0x68] sm:$0xff]
  %v2510 = vld [vmem:[%s45 + $0x70] sm:$0xff]
  %v2511 = vld [vmem:[%s45 + $0x78] sm:$0xff]
  %v2512 = vld [vmem:[%s47] sm:$0x3]
  %v2513 = vld [vmem:[%s49] sm:$0xff]
  %v2514 = vld [vmem:[%s49 + $0x8] sm:$0xff]
  %v2515 = vld [vmem:[%s49 + $0x10] sm:$0xff]
  %v2516 = vld [vmem:[%s49 + $0x18] sm:$0xff]
  %v2517 = vld [vmem:[%s49 + $0x20] sm:$0xff]
  %v2518 = vld [vmem:[%s49 + $0x28] sm:$0xff]
  %v2519 = vld [vmem:[%s49 + $0x30] sm:$0xff]
  %v2520 = vld [vmem:[%s49 + $0x38] sm:$0xff]
  %v2521 = vld [vmem:[%s51] sm:$0x1]
  %v2522 = vld [vmem:[%s53] sm:$0xff]
  %v2523 = vld [vmem:[%s53 + $0x8] sm:$0xff]
  %v2524 = vld [vmem:[%s53 + $0x10] sm:$0xff]
  %v2525 = vld [vmem:[%s53 + $0x18] sm:$0xff]
  %v2526 = vld [vmem:[%s53 + $0x20] sm:$0xff]
  %v2527 = vld [vmem:[%s53 + $0x28] sm:$0xff]
  %v2528 = vld [vmem:[%s53 + $0x30] sm:$0xff]
  %v2529 = vld [vmem:[%s53 + $0x38] sm:$0xff]
  %v2530 = vld [vmem:[%s55] sm:$0x1]
  %v2531 = vld [vmem:[%s57] sm:$0xff]
  %v2532 = vld [vmem:[%s57 + $0x8] sm:$0xff]
  %v2533 = vld [vmem:[%s57 + $0x10] sm:$0xff]
  %v2534 = vld [vmem:[%s57 + $0x18] sm:$0xff]
  %v2535 = vld [vmem:[%s57 + $0x20] sm:$0xff]
  %v2536 = vld [vmem:[%s57 + $0x28] sm:$0xff]
  %v2537 = vld [vmem:[%s57 + $0x30] sm:$0xff]
  %v2538 = vld [vmem:[%s57 + $0x38] sm:$0xff]
  %v2539 = vld [vmem:[%s57 + $0x40] sm:$0xff]
  %v2540 = vld [vmem:[%s57 + $0x48] sm:$0xff]
  %v2541 = vld [vmem:[%s57 + $0x50] sm:$0xff]
  %v2542 = vld [vmem:[%s57 + $0x58] sm:$0xff]
  %v2543 = vld [vmem:[%s57 + $0x60] sm:$0xff]
  %v2544 = vld [vmem:[%s57 + $0x68] sm:$0xff]
  %v2545 = vld [vmem:[%s57 + $0x70] sm:$0xff]
  %v2546 = vld [vmem:[%s57 + $0x78] sm:$0xff]
  %v2547 = vld [vmem:[%s59] sm:$0x1]
  %v2548 = vld [vmem:[%s61] sm:$0x1]
  %v2549 = vld [vmem:[%s63] sm:$0x1]
  %v2550 = vld [vmem:[%s65] sm:$0x1]
  %v2551 = vld [vmem:[%s67] sm:$0x1]
  %v2553 = vlaneseq
  %v2554 = vshrl.u32 %v2553, 7
  %v2555 = vsub.s32 0, %v2554
  %v2556 = vrot.slane %v2512, %v2555
  %v2557 = vlaneseq
  %v2558 = vshrl.u32 %v2557, 7
  %v2559 = vsub.s32 1, %v2558
  %v2560 = vrot.slane %v2512, %v2559
  %v2564 = vsel %vm676, %v2494, 0
  %v2567 = vsel %vm676, %v2495, 0
  %2569 = vmatprep.subr.mxu0 %v2497
  %2570 = vmatpush1.msra.mxu0 %v2496
  %2571 = vmatprep.subr.mxu0 %v2499
  %2572 = vmatpush1.msra.mxu0 %v2498
  %2573 = vmatprep.subr.mxu0 %v2501
  %2574 = vmatpush1.msra.mxu0 %v2500
  %2575 = vmatprep.subr.mxu0 %v2503
  %2576 = vmatpush1.msra.mxu0 %v2502
  %2577 = vmatprep.subr.mxu0 %v2505
  %2578 = vmatpush1.msra.mxu0 %v2504
  %2579 = vmatprep.subr.mxu0 %v2507
  %2580 = vmatpush1.msra.mxu0 %v2506
  %2581 = vmatprep.subr.mxu0 %v2509
  %2582 = vmatpush1.msra.mxu0 %v2508
  %2583 = vmatprep.subr.mxu0 %v2511
  %2584 = vmatpush1.msra.mxu0 %v2510
  %2585 = vmatprep.subr.mxu0 0.0
  %2586 = vmatpush1.msra.mxu0 0.0
  %2587 = vmatprep.subr.mxu0 0.0
  %2588 = vmatpush1.msra.mxu0 0.0
  %2589 = vmatprep.subr.mxu0 0.0
  %2590 = vmatpush1.msra.mxu0 0.0
  %2591 = vmatprep.subr.mxu0 0.0
  %2592 = vmatpush1.msra.mxu0 0.0
  %2593 = vmatprep.subr.mxu0 0.0
  %2594 = vmatpush1.msra.mxu0 0.0
  %2595 = vmatprep.subr.mxu0 0.0
  %2596 = vmatpush1.msra.mxu0 0.0
  %2597 = vmatprep.subr.mxu0 0.0
  %2598 = vmatpush1.msra.mxu0 0.0
  %2599 = vmatprep.subr.mxu0 0.0
  %2600 = vmatpush1.msra.mxu0 0.0
  %2601 = vmatprep.subr.mxu0 0.0
  %2602 = vmatpush1.msra.mxu0 0.0
  %2603 = vmatprep.subr.mxu0 0.0
  %2604 = vmatpush1.msra.mxu0 0.0
  %2605 = vmatprep.subr.mxu0 0.0
  %2606 = vmatpush1.msra.mxu0 0.0
  %2607 = vmatprep.subr.mxu0 0.0
  %2608 = vmatpush1.msra.mxu0 0.0
  %2609 = vmatprep.subr.mxu0 0.0
  %2610 = vmatpush1.msra.mxu0 0.0
  %2611 = vmatprep.subr.mxu0 0.0
  %2612 = vmatpush1.msra.mxu0 0.0
  %2613 = vmatprep.subr.mxu0 0.0
  %2614 = vmatpush1.msra.mxu0 0.0
  %2615 = vmatprep.subr.mxu0 0.0
  %2616 = vmatpush1.msra.mxu0 0.0
  %2617 = vmatprep.subr.mxu0 0.0
  %2618 = vmatpush1.msra.mxu0 0.0
  %2619 = vmatprep.subr.mxu0 0.0
  %2620 = vmatpush1.msra.mxu0 0.0
  %2621 = vmatprep.subr.mxu0 0.0
  %2622 = vmatpush1.msra.mxu0 0.0
  %2623 = vmatprep.subr.mxu0 0.0
  %2624 = vmatpush1.msra.mxu0 0.0
  %2625 = vmatprep.subr.mxu0 0.0
  %2626 = vmatpush1.msra.mxu0 0.0
  %2627 = vmatprep.subr.mxu0 0.0
  %2628 = vmatpush1.msra.mxu0 0.0
  %2629 = vmatprep.subr.mxu0 0.0
  %2630 = vmatpush1.msra.mxu0 0.0
  %2631 = vmatprep.subr.mxu0 0.0
  %2632 = vmatpush1.msra.mxu0 0.0
  %2633 = vmatprep.mubr.f32.mxu0 0.0
  %2634 = vmatmul.mubr.f32.gmra.mrb[0].mxu0 %v2564
  %v2635 = vpop.f32.mrb[0].mxu0
  %v2636 = vadd.f32 %v2556, %v2635
  %v2637 = vpop.f32.mrb[0].mxu0
  %v2638 = vadd.f32 %v2560, %v2637
  %2639 = vmatprep.mubr.f32.mxu0 0.0
  %2640 = vmatmul.mubr.f32.gmra.mrb[0].mxu0 %v2567
  %v2641 = vpop.f32.mrb[0].mxu0
  %v2642 = vadd.f32 %v2556, %v2641
  %v2643 = vpop.f32.mrb[0].mxu0
  %v2644 = vadd.f32 %v2560, %v2643
  %2645 = vdwg.mxu0
  %2646 = vst [vmem:[#allocation2] sm:$0xff] %v2636
  %2647 = vst.msk [vmem:[#allocation2 + $0x8] sm:$0xff] %vm676, %v2638
  %2648 = vst [vmem:[#allocation2 + $0x10] sm:$0xff] %v2642
  %2649 = vst.msk [vmem:[#allocation2 + $0x18] sm:$0xff] %vm676, %v2644
  %v2650 = vld [vmem:[#allocation2] sm:$0xff]
  %v2651 = vld [vmem:[#allocation2 + $0x8] sm:$0xff]
  %2653 = vrot.lane.b32.xlu0 %v2650, 64
  %v2654 = vpop.permute.xlu0 %2653
  %v2655 = vsel %vm282, %v2650, 0
  %v2657 = vsel %vm282, %v2654, 0
  %2659 = vmatprep.subr.mxu0 0.0
  %2660 = vmatpush1.xpose.msra.mxu0 %v2657
  %2661 = vmatprep.subr.mxu0 0.0
  %2662 = vmatpush1.xpose.msra.mxu0 0.0
  %2663 = vmatprep.subr.mxu0 0.0
  %2664 = vmatpush1.xpose.msra.mxu0 0.0
  %2665 = vmatprep.subr.mxu0 0.0
  %2666 = vmatpush1.xpose.msra.mxu0 0.0
  %2667 = vmatprep.subr.mxu0 0.0
  %2668 = vmatpush1.xpose.msra.mxu0 0.0
  %2669 = vmatprep.subr.mxu0 0.0
  %2670 = vmatpush1.xpose.msra.mxu0 0.0
  %2671 = vmatprep.subr.mxu0 0.0
  %2672 = vmatpush1.xpose.msra.mxu0 0.0
  %2673 = vmatprep.subr.mxu0 0.0
  %2674 = vmatpush1.xpose.msra.mxu0 0.0
  %2675 = vmatprep.subr.mxu0 0.0
  %2676 = vmatpush1.xpose.msra.mxu0 0.0
  %2677 = vmatprep.subr.mxu0 0.0
  %2678 = vmatpush1.xpose.msra.mxu0 0.0
  %2679 = vmatprep.subr.mxu0 0.0
  %2680 = vmatpush1.xpose.msra.mxu0 0.0
  %2681 = vmatprep.subr.mxu0 0.0
  %2682 = vmatpush1.xpose.msra.mxu0 0.0
  %2683 = vmatprep.subr.mxu0 0.0
  %2684 = vmatpush1.xpose.msra.mxu0 0.0
  %2685 = vmatprep.subr.mxu0 0.0
  %2686 = vmatpush1.xpose.msra.mxu0 0.0
  %2687 = vmatprep.subr.mxu0 0.0
  %2688 = vmatpush1.xpose.msra.mxu0 0.0
  %2689 = vmatprep.subr.mxu0 0.0
  %2690 = vmatpush1.xpose.msra.mxu0 0.0
  %2691 = vmatprep.subr.mxu0 0.0
  %2692 = vmatpush1.xpose.msra.mxu0 0.0
  %2693 = vmatprep.subr.mxu0 0.0
  %2694 = vmatpush1.xpose.msra.mxu0 0.0
  %2695 = vmatprep.subr.mxu0 0.0
  %2696 = vmatpush1.xpose.msra.mxu0 0.0
  %2697 = vmatprep.subr.mxu0 0.0
  %2698 = vmatpush1.xpose.msra.mxu0 0.0
  %2699 = vmatprep.subr.mxu0 0.0
  %2700 = vmatpush1.xpose.msra.mxu0 0.0
  %2701 = vmatprep.subr.mxu0 0.0
  %2702 = vmatpush1.xpose.msra.mxu0 0.0
  %2703 = vmatprep.subr.mxu0 0.0
  %2704 = vmatpush1.xpose.msra.mxu0 0.0
  %2705 = vmatprep.subr.mxu0 0.0
  %2706 = vmatpush1.xpose.msra.mxu0 0.0
  %2707 = vmatprep.subr.mxu0 0.0
  %2708 = vmatpush1.xpose.msra.mxu0 0.0
  %2709 = vmatprep.subr.mxu0 0.0
  %2710 = vmatpush1.xpose.msra.mxu0 0.0
  %2711 = vmatprep.subr.mxu0 0.0
  %2712 = vmatpush1.xpose.msra.mxu0 0.0
  %2713 = vmatprep.subr.mxu0 0.0
  %2714 = vmatpush1.xpose.msra.mxu0 0.0
  %2715 = vmatprep.subr.mxu0 0.0
  %2716 = vmatpush1.xpose.msra.mxu0 0.0
  %2717 = vmatprep.subr.mxu0 0.0
  %2718 = vmatpush1.xpose.msra.mxu0 0.0
  %2719 = vmatprep.subr.mxu0 0.0
  %2720 = vmatpush1.xpose.msra.mxu0 0.0
  %2721 = vmatprep.subr.mxu0 0.0
  %2722 = vmatpush1.xpose.msra.mxu0 0.0
  %2723 = vmatprep.mubr.f32.mxu0 0.0
  %2724 = vmatmul.mubr.f32.gmra.mrb[0].mxu0 %v2655
  %v2725 = vpop.f32.mrb[0].mxu0
  %v2726 = vadd.f32 0.0, %v2725
  %v2727 = vpop.f32.mrb[0].mxu0
  %2728 = vdwg.mxu0
  %v2729 = vmul.f32 %v2726, 0.25
  %v2730 = vsel %vm844, %v2729, -inf
  %2731 = vmax.xlane.f32.xlu0 %v2730
  %v2732 = vpop.xlane.xlu0 %2731
  %v2733 = vsub.f32 %v2729, %v2732
  %v2734 = vmul.f32 %v2733, 1.442695
  %v2735 = vpow.pop %v2734
  %v2736 = vsel %vm844, %v2735, 0.0
  %2737 = vadd.xlane.f32.xlu0 %v2736
  %v2738 = vpop.xlane.xlu0 %2737
  %v2739 = vrcp.pop %v2738
  %v2740 = vmul.f32 %v2735, %v2739
  %v2742 = vsel %vm844, %v2740, 0
  %2744 = vmatprep.subr.mxu0 0.0
  %2745 = vmatpush1.msra.mxu0 %v2651
  %2746 = vmatprep.subr.mxu0 0.0
  %2747 = vmatpush1.msra.mxu0 0.0
  %2748 = vmatprep.subr.mxu0 0.0
  %2749 = vmatpush1.msra.mxu0 0.0
  %2750 = vmatprep.subr.mxu0 0.0
  %2751 = vmatpush1.msra.mxu0 0.0
  %2752 = vmatprep.subr.mxu0 0.0
  %2753 = vmatpush1.msra.mxu0 0.0
  %2754 = vmatprep.subr.mxu0 0.0
  %2755 = vmatpush1.msra.mxu0 0.0
  %2756 = vmatprep.subr.mxu0 0.0
  %2757 = vmatpush1.msra.mxu0 0.0
  %2758 = vmatprep.subr.mxu0 0.0
  %2759 = vmatpush1.msra.mxu0 0.0
  %2760 = vmatprep.subr.mxu0 0.0
  %2761 = vmatpush1.msra.mxu0 0.0
  %2762 = vmatprep.subr.mxu0 0.0
  %2763 = vmatpush1.msra.mxu0 0.0
  %2764 = vmatprep.subr.mxu0 0.0
  %2765 = vmatpush1.msra.mxu0 0.0
  %2766 = vmatprep.subr.mxu0 0.0
  %2767 = vmatpush1.msra.mxu0 0.0
  %2768 = vmatprep.subr.mxu0 0.0
  %2769 = vmatpush1.msra.mxu0 0.0
  %2770 = vmatprep.subr.mxu0 0.0
  %2771 = vmatpush1.msra.mxu0 0.0
  %2772 = vmatprep.subr.mxu0 0.0
  %2773 = vmatpush1.msra.mxu0 0.0
  %2774 = vmatprep.subr.mxu0 0.0
  %2775 = vmatpush1.msra.mxu0 0.0
  %2776 = vmatprep.subr.mxu0 0.0
  %2777 = vmatpush1.msra.mxu0 0.0
  %2778 = vmatprep.subr.mxu0 0.0
  %2779 = vmatpush1.msra.mxu0 0.0
  %2780 = vmatprep.subr.mxu0 0.0
  %2781 = vmatpush1.msra.mxu0 0.0
  %2782 = vmatprep.subr.mxu0 0.0
  %2783 = vmatpush1.msra.mxu0 0.0
  %2784 = vmatprep.subr.mxu0 0.0
  %2785 = vmatpush1.msra.mxu0 0.0
  %2786 = vmatprep.subr.mxu0 0.0
  %2787 = vmatpush1.msra.mxu0 0.0
  %2788 = vmatprep.subr.mxu0 0.0
  %2789 = vmatpush1.msra.mxu0 0.0
  %2790 = vmatprep.subr.mxu0 0.0
  %2791 = vmatpush1.msra.mxu0 0.0
  %2792 = vmatprep.subr.mxu0 0.0
  %2793 = vmatpush1.msra.mxu0 0.0
  %2794 = vmatprep.subr.mxu0 0.0
  %2795 = vmatpush1.msra.mxu0 0.0
  %2796 = vmatprep.subr.mxu0 0.0
  %2797 = vmatpush1.msra.mxu0 0.0
  %2798 = vmatprep.subr.mxu0 0.0
  %2799 = vmatpush1.msra.mxu0 0.0
  %2800 = vmatprep.subr.mxu0 0.0
  %2801 = vmatpush1.msra.mxu0 0.0
  %2802 = vmatprep.subr.mxu0 0.0
  %2803 = vmatpush1.msra.mxu0 0.0
  %2804 = vmatprep.subr.mxu0 0.0
  %2805 = vmatpush1.msra.mxu0 0.0
  %2806 = vmatprep.subr.mxu0 0.0
  %2807 = vmatpush1.msra.mxu0 0.0
  %2808 = vmatprep.mubr.f32.mxu0 0.0
  %2809 = vmatmul.mubr.f32.gmra.mrb[0].mxu0 %v2742
  %v2810 = vpop.f32.mrb[0].mxu0
  %v2811 = vadd.f32 0.0, %v2810
  %v2812 = vpop.f32.mrb[0].mxu0
  %2813 = vdwg.mxu0
  %2814 = vst.msk [vmem:[#allocation3] sm:$0xff] %vm282, %v2811
  %v2815 = vld [vmem:[#allocation2] sm:$0xff]
  %v2816 = vld [vmem:[#allocation2 + $0x8] sm:$0xff]
  %2818 = vrot.lane.b32.xlu0 %v2815, 112
  %v2819 = vpop.permute.xlu0 %2818
  %2820 = vrot.lane.b32.xlu0 %v2815, 48
  %v2821 = vpop.permute.xlu0 %2820
  %v2822 = vsel %vm282, %v2819, 0
  %v2824 = vsel %vm282, %v2821, 0
  %2826 = vmatprep.subr.mxu0 0.0
  %2827 = vmatpush1.xpose.msra.mxu0 %v2824
  %2828 = vmatprep.subr.mxu0 0.0
  %2829 = vmatpush1.xpose.msra.mxu0 0.0
  %2830 = vmatprep.subr.mxu0 0.0
  %2831 = vmatpush1.xpose.msra.mxu0 0.0
  %2832 = vmatprep.subr.mxu0 0.0
  %2833 = vmatpush1.xpose.msra.mxu0 0.0
  %2834 = vmatprep.subr.mxu0 0.0
  %2835 = vmatpush1.xpose.msra.mxu0 0.0
  %2836 = vmatprep.subr.mxu0 0.0
  %2837 = vmatpush1.xpose.msra.mxu0 0.0
  %2838 = vmatprep.subr.mxu0 0.0
  %2839 = vmatpush1.xpose.msra.mxu0 0.0
  %2840 = vmatprep.subr.mxu0 0.0
  %2841 = vmatpush1.xpose.msra.mxu0 0.0
  %2842 = vmatprep.subr.mxu0 0.0
  %2843 = vmatpush1.xpose.msra.mxu0 0.0
  %2844 = vmatprep.subr.mxu0 0.0
  %2845 = vmatpush1.xpose.msra.mxu0 0.0
  %2846 = vmatprep.subr.mxu0 0.0
  %2847 = vmatpush1.xpose.msra.mxu0 0.0
  %2848 = vmatprep.subr.mxu0 0.0
  %2849 = vmatpush1.xpose.msra.mxu0 0.0
  %2850 = vmatprep.subr.mxu0 0.0
  %2851 = vmatpush1.xpose.msra.mxu0 0.0
  %2852 = vmatprep.subr.mxu0 0.0
  %2853 = vmatpush1.xpose.msra.mxu0 0.0
  %2854 = vmatprep.subr.mxu0 0.0
  %2855 = vmatpush1.xpose.msra.mxu0 0.0
  %2856 = vmatprep.subr.mxu0 0.0
  %2857 = vmatpush1.xpose.msra.mxu0 0.0
  %2858 = vmatprep.subr.mxu0 0.0
  %2859 = vmatpush1.xpose.msra.mxu0 0.0
  %2860 = vmatprep.subr.mxu0 0.0
  %2861 = vmatpush1.xpose.msra.mxu0 0.0
  %2862 = vmatprep.subr.mxu0 0.0
  %2863 = vmatpush1.xpose.msra.mxu0 0.0
  %2864 = vmatprep.subr.mxu0 0.0
  %2865 = vmatpush1.xpose.msra.mxu0 0.0
  %2866 = vmatprep.subr.mxu0 0.0
  %2867 = vmatpush1.xpose.msra.mxu0 0.0
  %2868 = vmatprep.subr.mxu0 0.0
  %2869 = vmatpush1.xpose.msra.mxu0 0.0
  %2870 = vmatprep.subr.mxu0 0.0
  %2871 = vmatpush1.xpose.msra.mxu0 0.0
  %2872 = vmatprep.subr.mxu0 0.0
  %2873 = vmatpush1.xpose.msra.mxu0 0.0
  %2874 = vmatprep.subr.mxu0 0.0
  %2875 = vmatpush1.xpose.msra.mxu0 0.0
  %2876 = vmatprep.subr.mxu0 0.0
  %2877 = vmatpush1.xpose.msra.mxu0 0.0
  %2878 = vmatprep.subr.mxu0 0.0
  %2879 = vmatpush1.xpose.msra.mxu0 0.0
  %2880 = vmatprep.subr.mxu0 0.0
  %2881 = vmatpush1.xpose.msra.mxu0 0.0
  %2882 = vmatprep.subr.mxu0 0.0
  %2883 = vmatpush1.xpose.msra.mxu0 0.0
  %2884 = vmatprep.subr.mxu0 0.0
  %2885 = vmatpush1.xpose.msra.mxu0 0.0
  %2886 = vmatprep.subr.mxu0 0.0
  %2887 = vmatpush1.xpose.msra.mxu0 0.0
  %2888 = vmatprep.subr.mxu0 0.0
  %2889 = vmatpush1.xpose.msra.mxu0 0.0
  %2890 = vmatprep.mubr.f32.mxu0 0.0
  %2891 = vmatmul.mubr.f32.gmra.mrb[0].mxu0 %v2822
  %v2892 = vpop.f32.mrb[0].mxu0
  %v2893 = vadd.f32 0.0, %v2892
  %v2894 = vpop.f32.mrb[0].mxu0
  %2895 = vdwg.mxu0
  %v2896 = vmul.f32 %v2893, 0.25
  %v2897 = vsel %vm844, %v2896, -inf
  %2898 = vmax.xlane.f32.xlu0 %v2897
  %v2899 = vpop.xlane.xlu0 %2898
  %v2900 = vsub.f32 %v2896, %v2899
  %v2901 = vmul.f32 %v2900, 1.442695
  %v2902 = vpow.pop %v2901
  %v2903 = vsel %vm844, %v2902, 0.0
  %2904 = vadd.xlane.f32.xlu0 %v2903
  %v2905 = vpop.xlane.xlu0 %2904
  %v2906 = vrcp.pop %v2905
  %v2907 = vmul.f32 %v2902, %v2906
  %2909 = vrot.lane.b32.xlu0 %v2816, 112
  %v2910 = vpop.permute.xlu0 %2909
  %v2913 = vsel %vm844, %v2907, 0
  %2915 = vmatprep.subr.mxu0 0.0
  %2916 = vmatpush1.msra.mxu0 %v2910
  %2917 = vmatprep.subr.mxu0 0.0
  %2918 = vmatpush1.msra.mxu0 0.0
  %2919 = vmatprep.subr.mxu0 0.0
  %2920 = vmatpush1.msra.mxu0 0.0
  %2921 = vmatprep.subr.mxu0 0.0
  %2922 = vmatpush1.msra.mxu0 0.0
  %2923 = vmatprep.subr.mxu0 0.0
  %2924 = vmatpush1.msra.mxu0 0.0
  %2925 = vmatprep.subr.mxu0 0.0
  %2926 = vmatpush1.msra.mxu0 0.0
  %2927 = vmatprep.subr.mxu0 0.0
  %2928 = vmatpush1.msra.mxu0 0.0
  %2929 = vmatprep.subr.mxu0 0.0
  %2930 = vmatpush1.msra.mxu0 0.0
  %2931 = vmatprep.subr.mxu0 0.0
  %2932 = vmatpush1.msra.mxu0 0.0
  %2933 = vmatprep.subr.mxu0 0.0
  %2934 = vmatpush1.msra.mxu0 0.0
  %2935 = vmatprep.subr.mxu0 0.0
  %2936 = vmatpush1.msra.mxu0 0.0
  %2937 = vmatprep.subr.mxu0 0.0
  %2938 = vmatpush1.msra.mxu0 0.0
  %2939 = vmatprep.subr.mxu0 0.0
  %2940 = vmatpush1.msra.mxu0 0.0
  %2941 = vmatprep.subr.mxu0 0.0
  %2942 = vmatpush1.msra.mxu0 0.0
  %2943 = vmatprep.subr.mxu0 0.0
  %2944 = vmatpush1.msra.mxu0 0.0
  %2945 = vmatprep.subr.mxu0 0.0
  %2946 = vmatpush1.msra.mxu0 0.0
  %2947 = vmatprep.subr.mxu0 0.0
  %2948 = vmatpush1.msra.mxu0 0.0
  %2949 = vmatprep.subr.mxu0 0.0
  %2950 = vmatpush1.msra.mxu0 0.0
  %2951 = vmatprep.subr.mxu0 0.0
  %2952 = vmatpush1.msra.mxu0 0.0
  %2953 = vmatprep.subr.mxu0 0.0
  %2954 = vmatpush1.msra.mxu0 0.0
  %2955 = vmatprep.subr.mxu0 0.0
  %2956 = vmatpush1.msra.mxu0 0.0
  %2957 = vmatprep.subr.mxu0 0.0
  %2958 = vmatpush1.msra.mxu0 0.0
  %2959 = vmatprep.subr.mxu0 0.0
  %2960 = vmatpush1.msra.mxu0 0.0
  %2961 = vmatprep.subr.mxu0 0.0
  %2962 = vmatpush1.msra.mxu0 0.0
  %2963 = vmatprep.subr.mxu0 0.0
  %2964 = vmatpush1.msra.mxu0 0.0
  %2965 = vmatprep.subr.mxu0 0.0
  %2966 = vmatpush1.msra.mxu0 0.0
  %2967 = vmatprep.subr.mxu0 0.0
  %2968 = vmatpush1.msra.mxu0 0.0
  %2969 = vmatprep.subr.mxu0 0.0
  %2970 = vmatpush1.msra.mxu0 0.0
  %2971 = vmatprep.subr.mxu0 0.0
  %2972 = vmatpush1.msra.mxu0 0.0
  %2973 = vmatprep.subr.mxu0 0.0
  %2974 = vmatpush1.msra.mxu0 0.0
  %2975 = vmatprep.subr.mxu0 0.0
  %2976 = vmatpush1.msra.mxu0 0.0
  %2977 = vmatprep.subr.mxu0 0.0
  %2978 = vmatpush1.msra.mxu0 0.0
  %2979 = vmatprep.mubr.f32.mxu0 0.0
  %2980 = vmatmul.mubr.f32.gmra.mrb[0].mxu0 %v2913
  %v2981 = vpop.f32.mrb[0].mxu0
  %v2982 = vadd.f32 0.0, %v2981
  %v2983 = vpop.f32.mrb[0].mxu0
  %2984 = vdwg.mxu0
  %2986 = vrot.lane.b32.xlu0 %v2982, 16
  %v2987 = vpop.permute.xlu0 %2986
  %2989 = vst.msk [vmem:[#allocation3] sm:$0xff] %vm1104, %v2987
  %v2990 = vld [vmem:[#allocation2] sm:$0xff]
  %v2991 = vld [vmem:[#allocation2 + $0x8] sm:$0xff]
  %2993 = vrot.lane.b32.xlu0 %v2990, 96
  %v2994 = vpop.permute.xlu0 %2993
  %2995 = vrot.lane.b32.xlu0 %v2990, 32
  %v2996 = vpop.permute.xlu0 %2995
  %v2997 = vsel %vm282, %v2994, 0
  %v2999 = vsel %vm282, %v2996, 0
  %3001 = vmatprep.subr.mxu0 0.0
  %3002 = vmatpush1.xpose.msra.mxu0 %v2999
  %3003 = vmatprep.subr.mxu0 0.0
  %3004 = vmatpush1.xpose.msra.mxu0 0.0
  %3005 = vmatprep.subr.mxu0 0.0
  %3006 = vmatpush1.xpose.msra.mxu0 0.0
  %3007 = vmatprep.subr.mxu0 0.0
  %3008 = vmatpush1.xpose.msra.mxu0 0.0
  %3009 = vmatprep.subr.mxu0 0.0
  %3010 = vmatpush1.xpose.msra.mxu0 0.0
  %3011 = vmatprep.subr.mxu0 0.0
  %3012 = vmatpush1.xpose.msra.mxu0 0.0
  %3013 = vmatprep.subr.mxu0 0.0
  %3014 = vmatpush1.xpose.msra.mxu0 0.0
  %3015 = vmatprep.subr.mxu0 0.0
  %3016 = vmatpush1.xpose.msra.mxu0 0.0
  %3017 = vmatprep.subr.mxu0 0.0
  %3018 = vmatpush1.xpose.msra.mxu0 0.0
  %3019 = vmatprep.subr.mxu0 0.0
  %3020 = vmatpush1.xpose.msra.mxu0 0.0
  %3021 = vmatprep.subr.mxu0 0.0
  %3022 = vmatpush1.xpose.msra.mxu0 0.0
  %3023 = vmatprep.subr.mxu0 0.0
  %3024 = vmatpush1.xpose.msra.mxu0 0.0
  %3025 = vmatprep.subr.mxu0 0.0
  %3026 = vmatpush1.xpose.msra.mxu0 0.0
  %3027 = vmatprep.subr.mxu0 0.0
  %3028 = vmatpush1.xpose.msra.mxu0 0.0
  %3029 = vmatprep.subr.mxu0 0.0
  %3030 = vmatpush1.xpose.msra.mxu0 0.0
  %3031 = vmatprep.subr.mxu0 0.0
  %3032 = vmatpush1.xpose.msra.mxu0 0.0
  %3033 = vmatprep.subr.mxu0 0.0
  %3034 = vmatpush1.xpose.msra.mxu0 0.0
  %3035 = vmatprep.subr.mxu0 0.0
  %3036 = vmatpush1.xpose.msra.mxu0 0.0
  %3037 = vmatprep.subr.mxu0 0.0
  %3038 = vmatpush1.xpose.msra.mxu0 0.0
  %3039 = vmatprep.subr.mxu0 0.0
  %3040 = vmatpush1.xpose.msra.mxu0 0.0
  %3041 = vmatprep.subr.mxu0 0.0
  %3042 = vmatpush1.xpose.msra.mxu0 0.0
  %3043 = vmatprep.subr.mxu0 0.0
  %3044 = vmatpush1.xpose.msra.mxu0 0.0
  %3045 = vmatprep.subr.mxu0 0.0
  %3046 = vmatpush1.xpose.msra.mxu0 0.0
  %3047 = vmatprep.subr.mxu0 0.0
  %3048 = vmatpush1.xpose.msra.mxu0 0.0
  %3049 = vmatprep.subr.mxu0 0.0
  %3050 = vmatpush1.xpose.msra.mxu0 0.0
  %3051 = vmatprep.subr.mxu0 0.0
  %3052 = vmatpush1.xpose.msra.mxu0 0.0
  %3053 = vmatprep.subr.mxu0 0.0
  %3054 = vmatpush1.xpose.msra.mxu0 0.0
  %3055 = vmatprep.subr.mxu0 0.0
  %3056 = vmatpush1.xpose.msra.mxu0 0.0
  %3057 = vmatprep.subr.mxu0 0.0
  %3058 = vmatpush1.xpose.msra.mxu0 0.0
  %3059 = vmatprep.subr.mxu0 0.0
  %3060 = vmatpush1.xpose.msra.mxu0 0.0
  %3061 = vmatprep.subr.mxu0 0.0
  %3062 = vmatpush1.xpose.msra.mxu0 0.0
  %3063 = vmatprep.subr.mxu0 0.0
  %3064 = vmatpush1.xpose.msra.mxu0 0.0
  %3065 = vmatprep.mubr.f32.mxu0 0.0
  %3066 = vmatmul.mubr.f32.gmra.mrb[0].mxu0 %v2997
  %v3067 = vpop.f32.mrb[0].mxu0
  %v3068 = vadd.f32 0.0, %v3067
  %v3069 = vpop.f32.mrb[0].mxu0
  %3070 = vdwg.mxu0
  %v3071 = vmul.f32 %v3068, 0.25
  %v3072 = vsel %vm844, %v3071, -inf
  %3073 = vmax.xlane.f32.xlu0 %v3072
  %v3074 = vpop.xlane.xlu0 %3073
  %v3075 = vsub.f32 %v3071, %v3074
  %v3076 = vmul.f32 %v3075, 1.442695
  %v3077 = vpow.pop %v3076
  %v3078 = vsel %vm844, %v3077, 0.0
  %3079 = vadd.xlane.f32.xlu0 %v3078
  %v3080 = vpop.xlane.xlu0 %3079
  %v3081 = vrcp.pop %v3080
  %v3082 = vmul.f32 %v3077, %v3081
  %3084 = vrot.lane.b32.xlu0 %v2991, 96
  %v3085 = vpop.permute.xlu0 %3084
  %v3088 = vsel %vm844, %v3082, 0
  %3090 = vmatprep.subr.mxu0 0.0
  %3091 = vmatpush1.msra.mxu0 %v3085
  %3092 = vmatprep.subr.mxu0 0.0
  %3093 = vmatpush1.msra.mxu0 0.0
  %3094 = vmatprep.subr.mxu0 0.0
  %3095 = vmatpush1.msra.mxu0 0.0
  %3096 = vmatprep.subr.mxu0 0.0
  %3097 = vmatpush1.msra.mxu0 0.0
  %3098 = vmatprep.subr.mxu0 0.0
  %3099 = vmatpush1.msra.mxu0 0.0
  %3100 = vmatprep.subr.mxu0 0.0
  %3101 = vmatpush1.msra.mxu0 0.0
  %3102 = vmatprep.subr.mxu0 0.0
  %3103 = vmatpush1.msra.mxu0 0.0
  %3104 = vmatprep.subr.mxu0 0.0
  %3105 = vmatpush1.msra.mxu0 0.0
  %3106 = vmatprep.subr.mxu0 0.0
  %3107 = vmatpush1.msra.mxu0 0.0
  %3108 = vmatprep.subr.mxu0 0.0
  %3109 = vmatpush1.msra.mxu0 0.0
  %3110 = vmatprep.subr.mxu0 0.0
  %3111 = vmatpush1.msra.mxu0 0.0
  %3112 = vmatprep.subr.mxu0 0.0
  %3113 = vmatpush1.msra.mxu0 0.0
  %3114 = vmatprep.subr.mxu0 0.0
  %3115 = vmatpush1.msra.mxu0 0.0
  %3116 = vmatprep.subr.mxu0 0.0
  %3117 = vmatpush1.msra.mxu0 0.0
  %3118 = vmatprep.subr.mxu0 0.0
  %3119 = vmatpush1.msra.mxu0 0.0
  %3120 = vmatprep.subr.mxu0 0.0
  %3121 = vmatpush1.msra.mxu0 0.0
  %3122 = vmatprep.subr.mxu0 0.0
  %3123 = vmatpush1.msra.mxu0 0.0
  %3124 = vmatprep.subr.mxu0 0.0
  %3125 = vmatpush1.msra.mxu0 0.0
  %3126 = vmatprep.subr.mxu0 0.0
  %3127 = vmatpush1.msra.mxu0 0.0
  %3128 = vmatprep.subr.mxu0 0.0
  %3129 = vmatpush1.msra.mxu0 0.0
  %3130 = vmatprep.subr.mxu0 0.0
  %3131 = vmatpush1.msra.mxu0 0.0
  %3132 = vmatprep.subr.mxu0 0.0
  %3133 = vmatpush1.msra.mxu0 0.0
  %3134 = vmatprep.subr.mxu0 0.0
  %3135 = vmatpush1.msra.mxu0 0.0
  %3136 = vmatprep.subr.mxu0 0.0
  %3137 = vmatpush1.msra.mxu0 0.0
  %3138 = vmatprep.subr.mxu0 0.0
  %3139 = vmatpush1.msra.mxu0 0.0
  %3140 = vmatprep.subr.mxu0 0.0
  %3141 = vmatpush1.msra.mxu0 0.0
  %3142 = vmatprep.subr.mxu0 0.0
  %3143 = vmatpush1.msra.mxu0 0.0
  %3144 = vmatprep.subr.mxu0 0.0
  %3145 = vmatpush1.msra.mxu0 0.0
  %3146 = vmatprep.subr.mxu0 0.0
  %3147 = vmatpush1.msra.mxu0 0.0
  %3148 = vmatprep.subr.mxu0 0.0
  %3149 = vmatpush1.msra.mxu0 0.0
  %3150 = vmatprep.subr.mxu0 0.0
  %3151 = vmatpush1.msra.mxu0 0.0
  %3152 = vmatprep.subr.mxu0 0.0
  %3153 = vmatpush1.msra.mxu0 0.0
  %3154 = vmatprep.mubr.f32.mxu0 0.0
  %3155 = vmatmul.mubr.f32.gmra.mrb[0].mxu0 %v3088
  %v3156 = vpop.f32.mrb[0].mxu0
  %v3157 = vadd.f32 0.0, %v3156
  %v3158 = vpop.f32.mrb[0].mxu0
  %3159 = vdwg.mxu0
  %3161 = vrot.lane.b32.xlu0 %v3157, 32
  %v3162 = vpop.permute.xlu0 %3161
  %3164 = vst.msk [vmem:[#allocation3] sm:$0xff] %vm1280, %v3162
  %v3165 = vld [vmem:[#allocation2] sm:$0xff]
  %v3166 = vld [vmem:[#allocation2 + $0x8] sm:$0xff]
  %3168 = vrot.lane.b32.xlu0 %v3165, 80
  %v3169 = vpop.permute.xlu0 %3168
  %3170 = vrot.lane.b32.xlu0 %v3165, 16
  %v3171 = vpop.permute.xlu0 %3170
  %v3172 = vsel %vm282, %v3169, 0
  %v3174 = vsel %vm282, %v3171, 0
  %3176 = vmatprep.subr.mxu0 0.0
  %3177 = vmatpush1.xpose.msra.mxu0 %v3174
  %3178 = vmatprep.subr.mxu0 0.0
  %3179 = vmatpush1.xpose.msra.mxu0 0.0
  %3180 = vmatprep.subr.mxu0 0.0
  %3181 = vmatpush1.xpose.msra.mxu0 0.0
  %3182 = vmatprep.subr.mxu0 0.0
  %3183 = vmatpush1.xpose.msra.mxu0 0.0
  %3184 = vmatprep.subr.mxu0 0.0
  %3185 = vmatpush1.xpose.msra.mxu0 0.0
  %3186 = vmatprep.subr.mxu0 0.0
  %3187 = vmatpush1.xpose.msra.mxu0 0.0
  %3188 = vmatprep.subr.mxu0 0.0
  %3189 = vmatpush1.xpose.msra.mxu0 0.0
  %3190 = vmatprep.subr.mxu0 0.0
  %3191 = vmatpush1.xpose.msra.mxu0 0.0
  %3192 = vmatprep.subr.mxu0 0.0
  %3193 = vmatpush1.xpose.msra.mxu0 0.0
  %3194 = vmatprep.subr.mxu0 0.0
  %3195 = vmatpush1.xpose.msra.mxu0 0.0
  %3196 = vmatprep.subr.mxu0 0.0
  %3197 = vmatpush1.xpose.msra.mxu0 0.0
  %3198 = vmatprep.subr.mxu0 0.0
  %3199 = vmatpush1.xpose.msra.mxu0 0.0
  %3200 = vmatprep.subr.mxu0 0.0
  %3201 = vmatpush1.xpose.msra.mxu0 0.0
  %3202 = vmatprep.subr.mxu0 0.0
  %3203 = vmatpush1.xpose.msra.mxu0 0.0
  %3204 = vmatprep.subr.mxu0 0.0
  %3205 = vmatpush1.xpose.msra.mxu0 0.0
  %3206 = vmatprep.subr.mxu0 0.0
  %3207 = vmatpush1.xpose.msra.mxu0 0.0
  %3208 = vmatprep.subr.mxu0 0.0
  %3209 = vmatpush1.xpose.msra.mxu0 0.0
  %3210 = vmatprep.subr.mxu0 0.0
  %3211 = vmatpush1.xpose.msra.mxu0 0.0
  %3212 = vmatprep.subr.mxu0 0.0
  %3213 = vmatpush1.xpose.msra.mxu0 0.0
  %3214 = vmatprep.subr.mxu0 0.0
  %3215 = vmatpush1.xpose.msra.mxu0 0.0
  %3216 = vmatprep.subr.mxu0 0.0
  %3217 = vmatpush1.xpose.msra.mxu0 0.0
  %3218 = vmatprep.subr.mxu0 0.0
  %3219 = vmatpush1.xpose.msra.mxu0 0.0
  %3220 = vmatprep.subr.mxu0 0.0
  %3221 = vmatpush1.xpose.msra.mxu0 0.0
  %3222 = vmatprep.subr.mxu0 0.0
  %3223 = vmatpush1.xpose.msra.mxu0 0.0
  %3224 = vmatprep.subr.mxu0 0.0
  %3225 = vmatpush1.xpose.msra.mxu0 0.0
  %3226 = vmatprep.subr.mxu0 0.0
  %3227 = vmatpush1.xpose.msra.mxu0 0.0
  %3228 = vmatprep.subr.mxu0 0.0
  %3229 = vmatpush1.xpose.msra.mxu0 0.0
  %3230 = vmatprep.subr.mxu0 0.0
  %3231 = vmatpush1.xpose.msra.mxu0 0.0
  %3232 = vmatprep.subr.mxu0 0.0
  %3233 = vmatpush1.xpose.msra.mxu0 0.0
  %3234 = vmatprep.subr.mxu0 0.0
  %3235 = vmatpush1.xpose.msra.mxu0 0.0
  %3236 = vmatprep.subr.mxu0 0.0
  %3237 = vmatpush1.xpose.msra.mxu0 0.0
  %3238 = vmatprep.subr.mxu0 0.0
  %3239 = vmatpush1.xpose.msra.mxu0 0.0
  %3240 = vmatprep.mubr.f32.mxu0 0.0
  %3241 = vmatmul.mubr.f32.gmra.mrb[0].mxu0 %v3172
  %v3242 = vpop.f32.mrb[0].mxu0
  %v3243 = vadd.f32 0.0, %v3242
  %v3244 = vpop.f32.mrb[0].mxu0
  %3245 = vdwg.mxu0
  %v3246 = vmul.f32 %v3243, 0.25
  %v3247 = vsel %vm844, %v3246, -inf
  %3248 = vmax.xlane.f32.xlu0 %v3247
  %v3249 = vpop.xlane.xlu0 %3248
  %v3250 = vsub.f32 %v3246, %v3249
  %v3251 = vmul.f32 %v3250, 1.442695
  %v3252 = vpow.pop %v3251
  %v3253 = vsel %vm844, %v3252, 0.0
  %3254 = vadd.xlane.f32.xlu0 %v3253
  %v3255 = vpop.xlane.xlu0 %3254
  %v3256 = vrcp.pop %v3255
  %v3257 = vmul.f32 %v3252, %v3256
  %3259 = vrot.lane.b32.xlu0 %v3166, 80
  %v3260 = vpop.permute.xlu0 %3259
  %v3263 = vsel %vm844, %v3257, 0
  %3265 = vmatprep.subr.mxu0 0.0
  %3266 = vmatpush1.msra.mxu0 %v3260
  %3267 = vmatprep.subr.mxu0 0.0
  %3268 = vmatpush1.msra.mxu0 0.0
  %3269 = vmatprep.subr.mxu0 0.0
  %3270 = vmatpush1.msra.mxu0 0.0
  %3271 = vmatprep.subr.mxu0 0.0
  %3272 = vmatpush1.msra.mxu0 0.0
  %3273 = vmatprep.subr.mxu0 0.0
  %3274 = vmatpush1.msra.mxu0 0.0
  %3275 = vmatprep.subr.mxu0 0.0
  %3276 = vmatpush1.msra.mxu0 0.0
  %3277 = vmatprep.subr.mxu0 0.0
  %3278 = vmatpush1.msra.mxu0 0.0
  %3279 = vmatprep.subr.mxu0 0.0
  %3280 = vmatpush1.msra.mxu0 0.0
  %3281 = vmatprep.subr.mxu0 0.0
  %3282 = vmatpush1.msra.mxu0 0.0
  %3283 = vmatprep.subr.mxu0 0.0
  %3284 = vmatpush1.msra.mxu0 0.0
  %3285 = vmatprep.subr.mxu0 0.0
  %3286 = vmatpush1.msra.mxu0 0.0
  %3287 = vmatprep.subr.mxu0 0.0
  %3288 = vmatpush1.msra.mxu0 0.0
  %3289 = vmatprep.subr.mxu0 0.0
  %3290 = vmatpush1.msra.mxu0 0.0
  %3291 = vmatprep.subr.mxu0 0.0
  %3292 = vmatpush1.msra.mxu0 0.0
  %3293 = vmatprep.subr.mxu0 0.0
  %3294 = vmatpush1.msra.mxu0 0.0
  %3295 = vmatprep.subr.mxu0 0.0
  %3296 = vmatpush1.msra.mxu0 0.0
  %3297 = vmatprep.subr.mxu0 0.0
  %3298 = vmatpush1.msra.mxu0 0.0
  %3299 = vmatprep.subr.mxu0 0.0
  %3300 = vmatpush1.msra.mxu0 0.0
  %3301 = vmatprep.subr.mxu0 0.0
  %3302 = vmatpush1.msra.mxu0 0.0
  %3303 = vmatprep.subr.mxu0 0.0
  %3304 = vmatpush1.msra.mxu0 0.0
  %3305 = vmatprep.subr.mxu0 0.0
  %3306 = vmatpush1.msra.mxu0 0.0
  %3307 = vmatprep.subr.mxu0 0.0
  %3308 = vmatpush1.msra.mxu0 0.0
  %3309 = vmatprep.subr.mxu0 0.0
  %3310 = vmatpush1.msra.mxu0 0.0
  %3311 = vmatprep.subr.mxu0 0.0
  %3312 = vmatpush1.msra.mxu0 0.0
  %3313 = vmatprep.subr.mxu0 0.0
  %3314 = vmatpush1.msra.mxu0 0.0
  %3315 = vmatprep.subr.mxu0 0.0
  %3316 = vmatpush1.msra.mxu0 0.0
  %3317 = vmatprep.subr.mxu0 0.0
  %3318 = vmatpush1.msra.mxu0 0.0
  %3319 = vmatprep.subr.mxu0 0.0
  %3320 = vmatpush1.msra.mxu0 0.0
  %3321 = vmatprep.subr.mxu0 0.0
  %3322 = vmatpush1.msra.mxu0 0.0
  %3323 = vmatprep.subr.mxu0 0.0
  %3324 = vmatpush1.msra.mxu0 0.0
  %3325 = vmatprep.subr.mxu0 0.0
  %3326 = vmatpush1.msra.mxu0 0.0
  %3327 = vmatprep.subr.mxu0 0.0
  %3328 = vmatpush1.msra.mxu0 0.0
  %3329 = vmatprep.mubr.f32.mxu0 0.0
  %3330 = vmatmul.mubr.f32.gmra.mrb[0].mxu0 %v3263
  %v3331 = vpop.f32.mrb[0].mxu0
  %v3332 = vadd.f32 0.0, %v3331
  %v3333 = vpop.f32.mrb[0].mxu0
  %3334 = vdwg.mxu0
  %3336 = vrot.lane.b32.xlu0 %v3332, 48
  %v3337 = vpop.permute.xlu0 %3336
  %3339 = vst.msk [vmem:[#allocation3] sm:$0xff] %vm1456, %v3337
  %v3340 = vld [vmem:[#allocation2 + $0x10] sm:$0xff]
  %v3341 = vld [vmem:[#allocation2 + $0x18] sm:$0xff]
  %3343 = vrot.lane.b32.xlu0 %v3340, 64
  %v3344 = vpop.permute.xlu0 %3343
  %v3345 = vsel %vm282, %v3340, 0
  %v3347 = vsel %vm282, %v3344, 0
  %3349 = vmatprep.subr.mxu0 0.0
  %3350 = vmatpush1.xpose.msra.mxu0 %v3347
  %3351 = vmatprep.subr.mxu0 0.0
  %3352 = vmatpush1.xpose.msra.mxu0 0.0
  %3353 = vmatprep.subr.mxu0 0.0
  %3354 = vmatpush1.xpose.msra.mxu0 0.0
  %3355 = vmatprep.subr.mxu0 0.0
  %3356 = vmatpush1.xpose.msra.mxu0 0.0
  %3357 = vmatprep.subr.mxu0 0.0
  %3358 = vmatpush1.xpose.msra.mxu0 0.0
  %3359 = vmatprep.subr.mxu0 0.0
  %3360 = vmatpush1.xpose.msra.mxu0 0.0
  %3361 = vmatprep.subr.mxu0 0.0
  %3362 = vmatpush1.xpose.msra.mxu0 0.0
  %3363 = vmatprep.subr.mxu0 0.0
  %3364 = vmatpush1.xpose.msra.mxu0 0.0
  %3365 = vmatprep.subr.mxu0 0.0
  %3366 = vmatpush1.xpose.msra.mxu0 0.0
  %3367 = vmatprep.subr.mxu0 0.0
  %3368 = vmatpush1.xpose.msra.mxu0 0.0
  %3369 = vmatprep.subr.mxu0 0.0
  %3370 = vmatpush1.xpose.msra.mxu0 0.0
  %3371 = vmatprep.subr.mxu0 0.0
  %3372 = vmatpush1.xpose.msra.mxu0 0.0
  %3373 = vmatprep.subr.mxu0 0.0
  %3374 = vmatpush1.xpose.msra.mxu0 0.0
  %3375 = vmatprep.subr.mxu0 0.0
  %3376 = vmatpush1.xpose.msra.mxu0 0.0
  %3377 = vmatprep.subr.mxu0 0.0
  %3378 = vmatpush1.xpose.msra.mxu0 0.0
  %3379 = vmatprep.subr.mxu0 0.0
  %3380 = vmatpush1.xpose.msra.mxu0 0.0
  %3381 = vmatprep.subr.mxu0 0.0
  %3382 = vmatpush1.xpose.msra.mxu0 0.0
  %3383 = vmatprep.subr.mxu0 0.0
  %3384 = vmatpush1.xpose.msra.mxu0 0.0
  %3385 = vmatprep.subr.mxu0 0.0
  %3386 = vmatpush1.xpose.msra.mxu0 0.0
  %3387 = vmatprep.subr.mxu0 0.0
  %3388 = vmatpush1.xpose.msra.mxu0 0.0
  %3389 = vmatprep.subr.mxu0 0.0
  %3390 = vmatpush1.xpose.msra.mxu0 0.0
  %3391 = vmatprep.subr.mxu0 0.0
  %3392 = vmatpush1.xpose.msra.mxu0 0.0
  %3393 = vmatprep.subr.mxu0 0.0
  %3394 = vmatpush1.xpose.msra.mxu0 0.0
  %3395 = vmatprep.subr.mxu0 0.0
  %3396 = vmatpush1.xpose.msra.mxu0 0.0
  %3397 = vmatprep.subr.mxu0 0.0
  %3398 = vmatpush1.xpose.msra.mxu0 0.0
  %3399 = vmatprep.subr.mxu0 0.0
  %3400 = vmatpush1.xpose.msra.mxu0 0.0
  %3401 = vmatprep.subr.mxu0 0.0
  %3402 = vmatpush1.xpose.msra.mxu0 0.0
  %3403 = vmatprep.subr.mxu0 0.0
  %3404 = vmatpush1.xpose.msra.mxu0 0.0
  %3405 = vmatprep.subr.mxu0 0.0
  %3406 = vmatpush1.xpose.msra.mxu0 0.0
  %3407 = vmatprep.subr.mxu0 0.0
  %3408 = vmatpush1.xpose.msra.mxu0 0.0
  %3409 = vmatprep.subr.mxu0 0.0
  %3410 = vmatpush1.xpose.msra.mxu0 0.0
  %3411 = vmatprep.subr.mxu0 0.0
  %3412 = vmatpush1.xpose.msra.mxu0 0.0
  %3413 = vmatprep.mubr.f32.mxu0 0.0
  %3414 = vmatmul.mubr.f32.gmra.mrb[0].mxu0 %v3345
  %v3415 = vpop.f32.mrb[0].mxu0
  %v3416 = vadd.f32 0.0, %v3415
  %v3417 = vpop.f32.mrb[0].mxu0
  %3418 = vdwg.mxu0
  %v3419 = vmul.f32 %v3416, 0.25
  %v3420 = vsel %vm844, %v3419, -inf
  %3421 = vmax.xlane.f32.xlu0 %v3420
  %v3422 = vpop.xlane.xlu0 %3421
  %v3423 = vsub.f32 %v3419, %v3422
  %v3424 = vmul.f32 %v3423, 1.442695
  %v3425 = vpow.pop %v3424
  %v3426 = vsel %vm844, %v3425, 0.0
  %3427 = vadd.xlane.f32.xlu0 %v3426
  %v3428 = vpop.xlane.xlu0 %3427
  %v3429 = vrcp.pop %v3428
  %v3430 = vmul.f32 %v3425, %v3429
  %v3432 = vsel %vm844, %v3430, 0
  %3434 = vmatprep.subr.mxu0 0.0
  %3435 = vmatpush1.msra.mxu0 %v3341
  %3436 = vmatprep.subr.mxu0 0.0
  %3437 = vmatpush1.msra.mxu0 0.0
  %3438 = vmatprep.subr.mxu0 0.0
  %3439 = vmatpush1.msra.mxu0 0.0
  %3440 = vmatprep.subr.mxu0 0.0
  %3441 = vmatpush1.msra.mxu0 0.0
  %3442 = vmatprep.subr.mxu0 0.0
  %3443 = vmatpush1.msra.mxu0 0.0
  %3444 = vmatprep.subr.mxu0 0.0
  %3445 = vmatpush1.msra.mxu0 0.0
  %3446 = vmatprep.subr.mxu0 0.0
  %3447 = vmatpush1.msra.mxu0 0.0
  %3448 = vmatprep.subr.mxu0 0.0
  %3449 = vmatpush1.msra.mxu0 0.0
  %3450 = vmatprep.subr.mxu0 0.0
  %3451 = vmatpush1.msra.mxu0 0.0
  %3452 = vmatprep.subr.mxu0 0.0
  %3453 = vmatpush1.msra.mxu0 0.0
  %3454 = vmatprep.subr.mxu0 0.0
  %3455 = vmatpush1.msra.mxu0 0.0
  %3456 = vmatprep.subr.mxu0 0.0
  %3457 = vmatpush1.msra.mxu0 0.0
  %3458 = vmatprep.subr.mxu0 0.0
  %3459 = vmatpush1.msra.mxu0 0.0
  %3460 = vmatprep.subr.mxu0 0.0
  %3461 = vmatpush1.msra.mxu0 0.0
  %3462 = vmatprep.subr.mxu0 0.0
  %3463 = vmatpush1.msra.mxu0 0.0
  %3464 = vmatprep.subr.mxu0 0.0
  %3465 = vmatpush1.msra.mxu0 0.0
  %3466 = vmatprep.subr.mxu0 0.0
  %3467 = vmatpush1.msra.mxu0 0.0
  %3468 = vmatprep.subr.mxu0 0.0
  %3469 = vmatpush1.msra.mxu0 0.0
  %3470 = vmatprep.subr.mxu0 0.0
  %3471 = vmatpush1.msra.mxu0 0.0
  %3472 = vmatprep.subr.mxu0 0.0
  %3473 = vmatpush1.msra.mxu0 0.0
  %3474 = vmatprep.subr.mxu0 0.0
  %3475 = vmatpush1.msra.mxu0 0.0
  %3476 = vmatprep.subr.mxu0 0.0
  %3477 = vmatpush1.msra.mxu0 0.0
  %3478 = vmatprep.subr.mxu0 0.0
  %3479 = vmatpush1.msra.mxu0 0.0
  %3480 = vmatprep.subr.mxu0 0.0
  %3481 = vmatpush1.msra.mxu0 0.0
  %3482 = vmatprep.subr.mxu0 0.0
  %3483 = vmatpush1.msra.mxu0 0.0
  %3484 = vmatprep.subr.mxu0 0.0
  %3485 = vmatpush1.msra.mxu0 0.0
  %3486 = vmatprep.subr.mxu0 0.0
  %3487 = vmatpush1.msra.mxu0 0.0
  %3488 = vmatprep.subr.mxu0 0.0
  %3489 = vmatpush1.msra.mxu0 0.0
  %3490 = vmatprep.subr.mxu0 0.0
  %3491 = vmatpush1.msra.mxu0 0.0
  %3492 = vmatprep.subr.mxu0 0.0
  %3493 = vmatpush1.msra.mxu0 0.0
  %3494 = vmatprep.subr.mxu0 0.0
  %3495 = vmatpush1.msra.mxu0 0.0
  %3496 = vmatprep.subr.mxu0 0.0
  %3497 = vmatpush1.msra.mxu0 0.0
  %3498 = vmatprep.mubr.f32.mxu0 0.0
  %3499 = vmatmul.mubr.f32.gmra.mrb[0].mxu0 %v3432
  %v3500 = vpop.f32.mrb[0].mxu0
  %v3501 = vadd.f32 0.0, %v3500
  %v3502 = vpop.f32.mrb[0].mxu0
  %3503 = vdwg.mxu0
  %3504 = vst.msk [vmem:[#allocation3 + $0x8] sm:$0xff] %vm282, %v3501
  %v3505 = vld [vmem:[#allocation2 + $0x10] sm:$0xff]
  %v3506 = vld [vmem:[#allocation2 + $0x18] sm:$0xff]
  %3508 = vrot.lane.b32.xlu0 %v3505, 112
  %v3509 = vpop.permute.xlu0 %3508
  %3510 = vrot.lane.b32.xlu0 %v3505, 48
  %v3511 = vpop.permute.xlu0 %3510
  %v3512 = vsel %vm282, %v3509, 0
  %v3514 = vsel %vm282, %v3511, 0
  %3516 = vmatprep.subr.mxu0 0.0
  %3517 = vmatpush1.xpose.msra.mxu0 %v3514
  %3518 = vmatprep.subr.mxu0 0.0
  %3519 = vmatpush1.xpose.msra.mxu0 0.0
  %3520 = vmatprep.subr.mxu0 0.0
  %3521 = vmatpush1.xpose.msra.mxu0 0.0
  %3522 = vmatprep.subr.mxu0 0.0
  %3523 = vmatpush1.xpose.msra.mxu0 0.0
  %3524 = vmatprep.subr.mxu0 0.0
  %3525 = vmatpush1.xpose.msra.mxu0 0.0
  %3526 = vmatprep.subr.mxu0 0.0
  %3527 = vmatpush1.xpose.msra.mxu0 0.0
  %3528 = vmatprep.subr.mxu0 0.0
  %3529 = vmatpush1.xpose.msra.mxu0 0.0
  %3530 = vmatprep.subr.mxu0 0.0
  %3531 = vmatpush1.xpose.msra.mxu0 0.0
  %3532 = vmatprep.subr.mxu0 0.0
  %3533 = vmatpush1.xpose.msra.mxu0 0.0
  %3534 = vmatprep.subr.mxu0 0.0
  %3535 = vmatpush1.xpose.msra.mxu0 0.0
  %3536 = vmatprep.subr.mxu0 0.0
  %3537 = vmatpush1.xpose.msra.mxu0 0.0
  %3538 = vmatprep.subr.mxu0 0.0
  %3539 = vmatpush1.xpose.msra.mxu0 0.0
  %3540 = vmatprep.subr.mxu0 0.0
  %3541 = vmatpush1.xpose.msra.mxu0 0.0
  %3542 = vmatprep.subr.mxu0 0.0
  %3543 = vmatpush1.xpose.msra.mxu0 0.0
  %3544 = vmatprep.subr.mxu0 0.0
  %3545 = vmatpush1.xpose.msra.mxu0 0.0
  %3546 = vmatprep.subr.mxu0 0.0
  %3547 = vmatpush1.xpose.msra.mxu0 0.0
  %3548 = vmatprep.subr.mxu0 0.0
  %3549 = vmatpush1.xpose.msra.mxu0 0.0
  %3550 = vmatprep.subr.mxu0 0.0
  %3551 = vmatpush1.xpose.msra.mxu0 0.0
  %3552 = vmatprep.subr.mxu0 0.0
  %3553 = vmatpush1.xpose.msra.mxu0 0.0
  %3554 = vmatprep.subr.mxu0 0.0
  %3555 = vmatpush1.xpose.msra.mxu0 0.0
  %3556 = vmatprep.subr.mxu0 0.0
  %3557 = vmatpush1.xpose.msra.mxu0 0.0
  %3558 = vmatprep.subr.mxu0 0.0
  %3559 = vmatpush1.xpose.msra.mxu0 0.0
  %3560 = vmatprep.subr.mxu0 0.0
  %3561 = vmatpush1.xpose.msra.mxu0 0.0
  %3562 = vmatprep.subr.mxu0 0.0
  %3563 = vmatpush1.xpose.msra.mxu0 0.0
  %3564 = vmatprep.subr.mxu0 0.0
  %3565 = vmatpush1.xpose.msra.mxu0 0.0
  %3566 = vmatprep.subr.mxu0 0.0
  %3567 = vmatpush1.xpose.msra.mxu0 0.0
  %3568 = vmatprep.subr.mxu0 0.0
  %3569 = vmatpush1.xpose.msra.mxu0 0.0
  %3570 = vmatprep.subr.mxu0 0.0
  %3571 = vmatpush1.xpose.msra.mxu0 0.0
  %3572 = vmatprep.subr.mxu0 0.0
  %3573 = vmatpush1.xpose.msra.mxu0 0.0
  %3574 = vmatprep.subr.mxu0 0.0
  %3575 = vmatpush1.xpose.msra.mxu0 0.0
  %3576 = vmatprep.subr.mxu0 0.0
  %3577 = vmatpush1.xpose.msra.mxu0 0.0
  %3578 = vmatprep.subr.mxu0 0.0
  %3579 = vmatpush1.xpose.msra.mxu0 0.0
  %3580 = vmatprep.mubr.f32.mxu0 0.0
  %3581 = vmatmul.mubr.f32.gmra.mrb[0].mxu0 %v3512
  %v3582 = vpop.f32.mrb[0].mxu0
  %v3583 = vadd.f32 0.0, %v3582
  %v3584 = vpop.f32.mrb[0].mxu0
  %3585 = vdwg.mxu0
  %v3586 = vmul.f32 %v3583, 0.25
  %v3587 = vsel %vm844, %v3586, -inf
  %3588 = vmax.xlane.f32.xlu0 %v3587
  %v3589 = vpop.xlane.xlu0 %3588
  %v3590 = vsub.f32 %v3586, %v3589
  %v3591 = vmul.f32 %v3590, 1.442695
  %v3592 = vpow.pop %v3591
  %v3593 = vsel %vm844, %v3592, 0.0
  %3594 = vadd.xlane.f32.xlu0 %v3593
  %v3595 = vpop.xlane.xlu0 %3594
  %v3596 = vrcp.pop %v3595
  %v3597 = vmul.f32 %v3592, %v3596
  %3599 = vrot.lane.b32.xlu0 %v3506, 112
  %v3600 = vpop.permute.xlu0 %3599
  %v3603 = vsel %vm844, %v3597, 0
  %3605 = vmatprep.subr.mxu0 0.0
  %3606 = vmatpush1.msra.mxu0 %v3600
  %3607 = vmatprep.subr.mxu0 0.0
  %3608 = vmatpush1.msra.mxu0 0.0
  %3609 = vmatprep.subr.mxu0 0.0
  %3610 = vmatpush1.msra.mxu0 0.0
  %3611 = vmatprep.subr.mxu0 0.0
  %3612 = vmatpush1.msra.mxu0 0.0
  %3613 = vmatprep.subr.mxu0 0.0
  %3614 = vmatpush1.msra.mxu0 0.0
  %3615 = vmatprep.subr.mxu0 0.0
  %3616 = vmatpush1.msra.mxu0 0.0
  %3617 = vmatprep.subr.mxu0 0.0
  %3618 = vmatpush1.msra.mxu0 0.0
  %3619 = vmatprep.subr.mxu0 0.0
  %3620 = vmatpush1.msra.mxu0 0.0
  %3621 = vmatprep.subr.mxu0 0.0
  %3622 = vmatpush1.msra.mxu0 0.0
  %3623 = vmatprep.subr.mxu0 0.0
  %3624 = vmatpush1.msra.mxu0 0.0
  %3625 = vmatprep.subr.mxu0 0.0
  %3626 = vmatpush1.msra.mxu0 0.0
  %3627 = vmatprep.subr.mxu0 0.0
  %3628 = vmatpush1.msra.mxu0 0.0
  %3629 = vmatprep.subr.mxu0 0.0
  %3630 = vmatpush1.msra.mxu0 0.0
  %3631 = vmatprep.subr.mxu0 0.0
  %3632 = vmatpush1.msra.mxu0 0.0
  %3633 = vmatprep.subr.mxu0 0.0
  %3634 = vmatpush1.msra.mxu0 0.0
  %3635 = vmatprep.subr.mxu0 0.0
  %3636 = vmatpush1.msra.mxu0 0.0
  %3637 = vmatprep.subr.mxu0 0.0
  %3638 = vmatpush1.msra.mxu0 0.0
  %3639 = vmatprep.subr.mxu0 0.0
  %3640 = vmatpush1.msra.mxu0 0.0
  %3641 = vmatprep.subr.mxu0 0.0
  %3642 = vmatpush1.msra.mxu0 0.0
  %3643 = vmatprep.subr.mxu0 0.0
  %3644 = vmatpush1.msra.mxu0 0.0
  %3645 = vmatprep.subr.mxu0 0.0
  %3646 = vmatpush1.msra.mxu0 0.0
  %3647 = vmatprep.subr.mxu0 0.0
  %3648 = vmatpush1.msra.mxu0 0.0
  %3649 = vmatprep.subr.mxu0 0.0
  %3650 = vmatpush1.msra.mxu0 0.0
  %3651 = vmatprep.subr.mxu0 0.0
  %3652 = vmatpush1.msra.mxu0 0.0
  %3653 = vmatprep.subr.mxu0 0.0
  %3654 = vmatpush1.msra.mxu0 0.0
  %3655 = vmatprep.subr.mxu0 0.0
  %3656 = vmatpush1.msra.mxu0 0.0
  %3657 = vmatprep.subr.mxu0 0.0
  %3658 = vmatpush1.msra.mxu0 0.0
  %3659 = vmatprep.subr.mxu0 0.0
  %3660 = vmatpush1.msra.mxu0 0.0
  %3661 = vmatprep.subr.mxu0 0.0
  %3662 = vmatpush1.msra.mxu0 0.0
  %3663 = vmatprep.subr.mxu0 0.0
  %3664 = vmatpush1.msra.mxu0 0.0
  %3665 = vmatprep.subr.mxu0 0.0
  %3666 = vmatpush1.msra.mxu0 0.0
  %3667 = vmatprep.subr.mxu0 0.0
  %3668 = vmatpush1.msra.mxu0 0.0
  %3669 = vmatprep.mubr.f32.mxu0 0.0
  %3670 = vmatmul.mubr.f32.gmra.mrb[0].mxu0 %v3603
  %v3671 = vpop.f32.mrb[0].mxu0
  %v3672 = vadd.f32 0.0, %v3671
  %v3673 = vpop.f32.mrb[0].mxu0
  %3674 = vdwg.mxu0
  %3676 = vrot.lane.b32.xlu0 %v3672, 16
  %v3677 = vpop.permute.xlu0 %3676
  %3679 = vst.msk [vmem:[#allocation3 + $0x8] sm:$0xff] %vm1104, %v3677
  %v3680 = vld [vmem:[#allocation2 + $0x10] sm:$0xff]
  %v3681 = vld [vmem:[#allocation2 + $0x18] sm:$0xff]
  %3683 = vrot.lane.b32.xlu0 %v3680, 96
  %v3684 = vpop.permute.xlu0 %3683
  %3685 = vrot.lane.b32.xlu0 %v3680, 32
  %v3686 = vpop.permute.xlu0 %3685
  %v3687 = vsel %vm282, %v3684, 0
  %v3689 = vsel %vm282, %v3686, 0
  %3691 = vmatprep.subr.mxu0 0.0
  %3692 = vmatpush1.xpose.msra.mxu0 %v3689
  %3693 = vmatprep.subr.mxu0 0.0
  %3694 = vmatpush1.xpose.msra.mxu0 0.0
  %3695 = vmatprep.subr.mxu0 0.0
  %3696 = vmatpush1.xpose.msra.mxu0 0.0
  %3697 = vmatprep.subr.mxu0 0.0
  %3698 = vmatpush1.xpose.msra.mxu0 0.0
  %3699 = vmatprep.subr.mxu0 0.0
  %3700 = vmatpush1.xpose.msra.mxu0 0.0
  %3701 = vmatprep.subr.mxu0 0.0
  %3702 = vmatpush1.xpose.msra.mxu0 0.0
  %3703 = vmatprep.subr.mxu0 0.0
  %3704 = vmatpush1.xpose.msra.mxu0 0.0
  %3705 = vmatprep.subr.mxu0 0.0
  %3706 = vmatpush1.xpose.msra.mxu0 0.0
  %3707 = vmatprep.subr.mxu0 0.0
  %3708 = vmatpush1.xpose.msra.mxu0 0.0
  %3709 = vmatprep.subr.mxu0 0.0
  %3710 = vmatpush1.xpose.msra.mxu0 0.0
  %3711 = vmatprep.subr.mxu0 0.0
  %3712 = vmatpush1.xpose.msra.mxu0 0.0
  %3713 = vmatprep.subr.mxu0 0.0
  %3714 = vmatpush1.xpose.msra.mxu0 0.0
  %3715 = vmatprep.subr.mxu0 0.0
  %3716 = vmatpush1.xpose.msra.mxu0 0.0
  %3717 = vmatprep.subr.mxu0 0.0
  %3718 = vmatpush1.xpose.msra.mxu0 0.0
  %3719 = vmatprep.subr.mxu0 0.0
  %3720 = vmatpush1.xpose.msra.mxu0 0.0
  %3721 = vmatprep.subr.mxu0 0.0
  %3722 = vmatpush1.xpose.msra.mxu0 0.0
  %3723 = vmatprep.subr.mxu0 0.0
  %3724 = vmatpush1.xpose.msra.mxu0 0.0
  %3725 = vmatprep.subr.mxu0 0.0
  %3726 = vmatpush1.xpose.msra.mxu0 0.0
  %3727 = vmatprep.subr.mxu0 0.0
  %3728 = vmatpush1.xpose.msra.mxu0 0.0
  %3729 = vmatprep.subr.mxu0 0.0
  %3730 = vmatpush1.xpose.msra.mxu0 0.0
  %3731 = vmatprep.subr.mxu0 0.0
  %3732 = vmatpush1.xpose.msra.mxu0 0.0
  %3733 = vmatprep.subr.mxu0 0.0
  %3734 = vmatpush1.xpose.msra.mxu0 0.0
  %3735 = vmatprep.subr.mxu0 0.0
  %3736 = vmatpush1.xpose.msra.mxu0 0.0
  %3737 = vmatprep.subr.mxu0 0.0
  %3738 = vmatpush1.xpose.msra.mxu0 0.0
  %3739 = vmatprep.subr.mxu0 0.0
  %3740 = vmatpush1.xpose.msra.mxu0 0.0
  %3741 = vmatprep.subr.mxu0 0.0
  %3742 = vmatpush1.xpose.msra.mxu0 0.0
  %3743 = vmatprep.subr.mxu0 0.0
  %3744 = vmatpush1.xpose.msra.mxu0 0.0
  %3745 = vmatprep.subr.mxu0 0.0
  %3746 = vmatpush1.xpose.msra.mxu0 0.0
  %3747 = vmatprep.subr.mxu0 0.0
  %3748 = vmatpush1.xpose.msra.mxu0 0.0
  %3749 = vmatprep.subr.mxu0 0.0
  %3750 = vmatpush1.xpose.msra.mxu0 0.0
  %3751 = vmatprep.subr.mxu0 0.0
  %3752 = vmatpush1.xpose.msra.mxu0 0.0
  %3753 = vmatprep.subr.mxu0 0.0
  %3754 = vmatpush1.xpose.msra.mxu0 0.0
  %3755 = vmatprep.mubr.f32.mxu0 0.0
  %3756 = vmatmul.mubr.f32.gmra.mrb[0].mxu0 %v3687
  %v3757 = vpop.f32.mrb[0].mxu0
  %v3758 = vadd.f32 0.0, %v3757
  %v3759 = vpop.f32.mrb[0].mxu0
  %3760 = vdwg.mxu0
  %v3761 = vmul.f32 %v3758, 0.25
  %v3762 = vsel %vm844, %v3761, -inf
  %3763 = vmax.xlane.f32.xlu0 %v3762
  %v3764 = vpop.xlane.xlu0 %3763
  %v3765 = vsub.f32 %v3761, %v3764
  %v3766 = vmul.f32 %v3765, 1.442695
  %v3767 = vpow.pop %v3766
  %v3768 = vsel %vm844, %v3767, 0.0
  %3769 = vadd.xlane.f32.xlu0 %v3768
  %v3770 = vpop.xlane.xlu0 %3769
  %v3771 = vrcp.pop %v3770
  %v3772 = vmul.f32 %v3767, %v3771
  %3774 = vrot.lane.b32.xlu0 %v3681, 96
  %v3775 = vpop.permute.xlu0 %3774
  %v3778 = vsel %vm844, %v3772, 0
  %3780 = vmatprep.subr.mxu0 0.0
  %3781 = vmatpush1.msra.mxu0 %v3775
  %3782 = vmatprep.subr.mxu0 0.0
  %3783 = vmatpush1.msra.mxu0 0.0
  %3784 = vmatprep.subr.mxu0 0.0
  %3785 = vmatpush1.msra.mxu0 0.0
  %3786 = vmatprep.subr.mxu0 0.0
  %3787 = vmatpush1.msra.mxu0 0.0
  %3788 = vmatprep.subr.mxu0 0.0
  %3789 = vmatpush1.msra.mxu0 0.0
  %3790 = vmatprep.subr.mxu0 0.0
  %3791 = vmatpush1.msra.mxu0 0.0
  %3792 = vmatprep.subr.mxu0 0.0
  %3793 = vmatpush1.msra.mxu0 0.0
  %3794 = vmatprep.subr.mxu0 0.0
  %3795 = vmatpush1.msra.mxu0 0.0
  %3796 = vmatprep.subr.mxu0 0.0
  %3797 = vmatpush1.msra.mxu0 0.0
  %3798 = vmatprep.subr.mxu0 0.0
  %3799 = vmatpush1.msra.mxu0 0.0
  %3800 = vmatprep.subr.mxu0 0.0
  %3801 = vmatpush1.msra.mxu0 0.0
  %3802 = vmatprep.subr.mxu0 0.0
  %3803 = vmatpush1.msra.mxu0 0.0
  %3804 = vmatprep.subr.mxu0 0.0
  %3805 = vmatpush1.msra.mxu0 0.0
  %3806 = vmatprep.subr.mxu0 0.0
  %3807 = vmatpush1.msra.mxu0 0.0
  %3808 = vmatprep.subr.mxu0 0.0
  %3809 = vmatpush1.msra.mxu0 0.0
  %3810 = vmatprep.subr.mxu0 0.0
  %3811 = vmatpush1.msra.mxu0 0.0
  %3812 = vmatprep.subr.mxu0 0.0
  %3813 = vmatpush1.msra.mxu0 0.0
  %3814 = vmatprep.subr.mxu0 0.0
  %3815 = vmatpush1.msra.mxu0 0.0
  %3816 = vmatprep.subr.mxu0 0.0
  %3817 = vmatpush1.msra.mxu0 0.0
  %3818 = vmatprep.subr.mxu0 0.0
  %3819 = vmatpush1.msra.mxu0 0.0
  %3820 = vmatprep.subr.mxu0 0.0
  %3821 = vmatpush1.msra.mxu0 0.0
  %3822 = vmatprep.subr.mxu0 0.0
  %3823 = vmatpush1.msra.mxu0 0.0
  %3824 = vmatprep.subr.mxu0 0.0
  %3825 = vmatpush1.msra.mxu0 0.0
  %3826 = vmatprep.subr.mxu0 0.0
  %3827 = vmatpush1.msra.mxu0 0.0
  %3828 = vmatprep.subr.mxu0 0.0
  %3829 = vmatpush1.msra.mxu0 0.0
  %3830 = vmatprep.subr.mxu0 0.0
  %3831 = vmatpush1.msra.mxu0 0.0
  %3832 = vmatprep.subr.mxu0 0.0
  %3833 = vmatpush1.msra.mxu0 0.0
  %3834 = vmatprep.subr.mxu0 0.0
  %3835 = vmatpush1.msra.mxu0 0.0
  %3836 = vmatprep.subr.mxu0 0.0
  %3837 = vmatpush1.msra.mxu0 0.0
  %3838 = vmatprep.subr.mxu0 0.0
  %3839 = vmatpush1.msra.mxu0 0.0
  %3840 = vmatprep.subr.mxu0 0.0
  %3841 = vmatpush1.msra.mxu0 0.0
  %3842 = vmatprep.subr.mxu0 0.0
  %3843 = vmatpush1.msra.mxu0 0.0
  %3844 = vmatprep.mubr.f32.mxu0 0.0
  %3845 = vmatmul.mubr.f32.gmra.mrb[0].mxu0 %v3778
  %v3846 = vpop.f32.mrb[0].mxu0
  %v3847 = vadd.f32 0.0, %v3846
  %v3848 = vpop.f32.mrb[0].mxu0
  %3849 = vdwg.mxu0
  %3851 = vrot.lane.b32.xlu0 %v3847, 32
  %v3852 = vpop.permute.xlu0 %3851
  %3854 = vst.msk [vmem:[#allocation3 + $0x8] sm:$0xff] %vm1280, %v3852
  %v3855 = vld [vmem:[#allocation2 + $0x10] sm:$0xff]
  %v3856 = vld [vmem:[#allocation2 + $0x18] sm:$0xff]
  %3858 = vrot.lane.b32.xlu0 %v3855, 80
  %v3859 = vpop.permute.xlu0 %3858
  %3860 = vrot.lane.b32.xlu0 %v3855, 16
  %v3861 = vpop.permute.xlu0 %3860
  %v3862 = vsel %vm282, %v3859, 0
  %v3864 = vsel %vm282, %v3861, 0
  %3866 = vmatprep.subr.mxu0 0.0
  %3867 = vmatpush1.xpose.msra.mxu0 %v3864
  %3868 = vmatprep.subr.mxu0 0.0
  %3869 = vmatpush1.xpose.msra.mxu0 0.0
  %3870 = vmatprep.subr.mxu0 0.0
  %3871 = vmatpush1.xpose.msra.mxu0 0.0
  %3872 = vmatprep.subr.mxu0 0.0
  %3873 = vmatpush1.xpose.msra.mxu0 0.0
  %3874 = vmatprep.subr.mxu0 0.0
  %3875 = vmatpush1.xpose.msra.mxu0 0.0
  %3876 = vmatprep.subr.mxu0 0.0
  %3877 = vmatpush1.xpose.msra.mxu0 0.0
  %3878 = vmatprep.subr.mxu0 0.0
  %3879 = vmatpush1.xpose.msra.mxu0 0.0
  %3880 = vmatprep.subr.mxu0 0.0
  %3881 = vmatpush1.xpose.msra.mxu0 0.0
  %3882 = vmatprep.subr.mxu0 0.0
  %3883 = vmatpush1.xpose.msra.mxu0 0.0
  %3884 = vmatprep.subr.mxu0 0.0
  %3885 = vmatpush1.xpose.msra.mxu0 0.0
  %3886 = vmatprep.subr.mxu0 0.0
  %3887 = vmatpush1.xpose.msra.mxu0 0.0
  %3888 = vmatprep.subr.mxu0 0.0
  %3889 = vmatpush1.xpose.msra.mxu0 0.0
  %3890 = vmatprep.subr.mxu0 0.0
  %3891 = vmatpush1.xpose.msra.mxu0 0.0
  %3892 = vmatprep.subr.mxu0 0.0
  %3893 = vmatpush1.xpose.msra.mxu0 0.0
  %3894 = vmatprep.subr.mxu0 0.0
  %3895 = vmatpush1.xpose.msra.mxu0 0.0
  %3896 = vmatprep.subr.mxu0 0.0
  %3897 = vmatpush1.xpose.msra.mxu0 0.0
  %3898 = vmatprep.subr.mxu0 0.0
  %3899 = vmatpush1.xpose.msra.mxu0 0.0
  %3900 = vmatprep.subr.mxu0 0.0
  %3901 = vmatpush1.xpose.msra.mxu0 0.0
  %3902 = vmatprep.subr.mxu0 0.0
  %3903 = vmatpush1.xpose.msra.mxu0 0.0
  %3904 = vmatprep.subr.mxu0 0.0
  %3905 = vmatpush1.xpose.msra.mxu0 0.0
  %3906 = vmatprep.subr.mxu0 0.0
  %3907 = vmatpush1.xpose.msra.mxu0 0.0
  %3908 = vmatprep.subr.mxu0 0.0
  %3909 = vmatpush1.xpose.msra.mxu0 0.0
  %3910 = vmatprep.subr.mxu0 0.0
  %3911 = vmatpush1.xpose.msra.mxu0 0.0
  %3912 = vmatprep.subr.mxu0 0.0
  %3913 = vmatpush1.xpose.msra.mxu0 0.0
  %3914 = vmatprep.subr.mxu0 0.0
  %3915 = vmatpush1.xpose.msra.mxu0 0.0
  %3916 = vmatprep.subr.mxu0 0.0
  %3917 = vmatpush1.xpose.msra.mxu0 0.0
  %3918 = vmatprep.subr.mxu0 0.0
  %3919 = vmatpush1.xpose.msra.mxu0 0.0
  %3920 = vmatprep.subr.mxu0 0.0
  %3921 = vmatpush1.xpose.msra.mxu0 0.0
  %3922 = vmatprep.subr.mxu0 0.0
  %3923 = vmatpush1.xpose.msra.mxu0 0.0
  %3924 = vmatprep.subr.mxu0 0.0
  %3925 = vmatpush1.xpose.msra.mxu0 0.0
  %3926 = vmatprep.subr.mxu0 0.0
  %3927 = vmatpush1.xpose.msra.mxu0 0.0
  %3928 = vmatprep.subr.mxu0 0.0
  %3929 = vmatpush1.xpose.msra.mxu0 0.0
  %3930 = vmatprep.mubr.f32.mxu0 0.0
  %3931 = vmatmul.mubr.f32.gmra.mrb[0].mxu0 %v3862
  %v3932 = vpop.f32.mrb[0].mxu0
  %v3933 = vadd.f32 0.0, %v3932
  %v3934 = vpop.f32.mrb[0].mxu0
  %3935 = vdwg.mxu0
  %v3936 = vmul.f32 %v3933, 0.25
  %v3937 = vsel %vm844, %v3936, -inf
  %3938 = vmax.xlane.f32.xlu0 %v3937
  %v3939 = vpop.xlane.xlu0 %3938
  %v3940 = vsub.f32 %v3936, %v3939
  %v3941 = vmul.f32 %v3940, 1.442695
  %v3942 = vpow.pop %v3941
  %v3943 = vsel %vm844, %v3942, 0.0
  %3944 = vadd.xlane.f32.xlu0 %v3943
  %v3945 = vpop.xlane.xlu0 %3944
  %v3946 = vrcp.pop %v3945
  %v3947 = vmul.f32 %v3942, %v3946
  %3949 = vrot.lane.b32.xlu0 %v3856, 80
  %v3950 = vpop.permute.xlu0 %3949
  %v3953 = vsel %vm844, %v3947, 0
  %3955 = vmatprep.subr.mxu0 0.0
  %3956 = vmatpush1.msra.mxu0 %v3950
  %3957 = vmatprep.subr.mxu0 0.0
  %3958 = vmatpush1.msra.mxu0 0.0
  %3959 = vmatprep.subr.mxu0 0.0
  %3960 = vmatpush1.msra.mxu0 0.0
  %3961 = vmatprep.subr.mxu0 0.0
  %3962 = vmatpush1.msra.mxu0 0.0
  %3963 = vmatprep.subr.mxu0 0.0
  %3964 = vmatpush1.msra.mxu0 0.0
  %3965 = vmatprep.subr.mxu0 0.0
  %3966 = vmatpush1.msra.mxu0 0.0
  %3967 = vmatprep.subr.mxu0 0.0
  %3968 = vmatpush1.msra.mxu0 0.0
  %3969 = vmatprep.subr.mxu0 0.0
  %3970 = vmatpush1.msra.mxu0 0.0
  %3971 = vmatprep.subr.mxu0 0.0
  %3972 = vmatpush1.msra.mxu0 0.0
  %3973 = vmatprep.subr.mxu0 0.0
  %3974 = vmatpush1.msra.mxu0 0.0
  %3975 = vmatprep.subr.mxu0 0.0
  %3976 = vmatpush1.msra.mxu0 0.0
  %3977 = vmatprep.subr.mxu0 0.0
  %3978 = vmatpush1.msra.mxu0 0.0
  %3979 = vmatprep.subr.mxu0 0.0
  %3980 = vmatpush1.msra.mxu0 0.0
  %3981 = vmatprep.subr.mxu0 0.0
  %3982 = vmatpush1.msra.mxu0 0.0
  %3983 = vmatprep.subr.mxu0 0.0
  %3984 = vmatpush1.msra.mxu0 0.0
  %3985 = vmatprep.subr.mxu0 0.0
  %3986 = vmatpush1.msra.mxu0 0.0
  %3987 = vmatprep.subr.mxu0 0.0
  %3988 = vmatpush1.msra.mxu0 0.0
  %3989 = vmatprep.subr.mxu0 0.0
  %3990 = vmatpush1.msra.mxu0 0.0
  %3991 = vmatprep.subr.mxu0 0.0
  %3992 = vmatpush1.msra.mxu0 0.0
  %3993 = vmatprep.subr.mxu0 0.0
  %3994 = vmatpush1.msra.mxu0 0.0
  %3995 = vmatprep.subr.mxu0 0.0
  %3996 = vmatpush1.msra.mxu0 0.0
  %3997 = vmatprep.subr.mxu0 0.0
  %3998 = vmatpush1.msra.mxu0 0.0
  %3999 = vmatprep.subr.mxu0 0.0
  %4000 = vmatpush1.msra.mxu0 0.0
  %4001 = vmatprep.subr.mxu0 0.0
  %4002 = vmatpush1.msra.mxu0 0.0
  %4003 = vmatprep.subr.mxu0 0.0
  %4004 = vmatpush1.msra.mxu0 0.0
  %4005 = vmatprep.subr.mxu0 0.0
  %4006 = vmatpush1.msra.mxu0 0.0
  %4007 = vmatprep.subr.mxu0 0.0
  %4008 = vmatpush1.msra.mxu0 0.0
  %4009 = vmatprep.subr.mxu0 0.0
  %4010 = vmatpush1.msra.mxu0 0.0
  %4011 = vmatprep.subr.mxu0 0.0
  %4012 = vmatpush1.msra.mxu0 0.0
  %4013 = vmatprep.subr.mxu0 0.0
  %4014 = vmatpush1.msra.mxu0 0.0
  %4015 = vmatprep.subr.mxu0 0.0
  %4016 = vmatpush1.msra.mxu0 0.0
  %4017 = vmatprep.subr.mxu0 0.0
  %4018 = vmatpush1.msra.mxu0 0.0
  %4019 = vmatprep.mubr.f32.mxu0 0.0
  %4020 = vmatmul.mubr.f32.gmra.mrb[0].mxu0 %v3953
  %v4021 = vpop.f32.mrb[0].mxu0
  %v4022 = vadd.f32 0.0, %v4021
  %v4023 = vpop.f32.mrb[0].mxu0
  %4024 = vdwg.mxu0
  %4026 = vrot.lane.b32.xlu0 %v4022, 48
  %v4027 = vpop.permute.xlu0 %4026
  %4029 = vst.msk [vmem:[#allocation3 + $0x8] sm:$0xff] %vm1456, %v4027
  %v4030 = vld [vmem:[#allocation3] sm:$0xff]
  %v4031 = vld [vmem:[#allocation3 + $0x8] sm:$0xff]
  %v4033 = vlaneseq
  %v4034 = vshrl.u32 %v4033, 7
  %v4035 = vsub.s32 0, %v4034
  %v4036 = vrot.slane %v2521, %v4035
  %v4039 = vsel %vm676, %v4030, 0
  %v4042 = vsel %vm676, %v4031, 0
  %4044 = vmatprep.subr.mxu0 0.0
  %4045 = vmatpush1.msra.mxu0 %v2513
  %4046 = vmatprep.subr.mxu0 0.0
  %4047 = vmatpush1.msra.mxu0 %v2514
  %4048 = vmatprep.subr.mxu0 0.0
  %4049 = vmatpush1.msra.mxu0 %v2515
  %4050 = vmatprep.subr.mxu0 0.0
  %4051 = vmatpush1.msra.mxu0 %v2516
  %4052 = vmatprep.subr.mxu0 0.0
  %4053 = vmatpush1.msra.mxu0 %v2517
  %4054 = vmatprep.subr.mxu0 0.0
  %4055 = vmatpush1.msra.mxu0 %v2518
  %4056 = vmatprep.subr.mxu0 0.0
  %4057 = vmatpush1.msra.mxu0 %v2519
  %4058 = vmatprep.subr.mxu0 0.0
  %4059 = vmatpush1.msra.mxu0 %v2520
  %4060 = vmatprep.subr.mxu0 0.0
  %4061 = vmatpush1.msra.mxu0 0.0
  %4062 = vmatprep.subr.mxu0 0.0
  %4063 = vmatpush1.msra.mxu0 0.0
  %4064 = vmatprep.subr.mxu0 0.0
  %4065 = vmatpush1.msra.mxu0 0.0
  %4066 = vmatprep.subr.mxu0 0.0
  %4067 = vmatpush1.msra.mxu0 0.0
  %4068 = vmatprep.subr.mxu0 0.0
  %4069 = vmatpush1.msra.mxu0 0.0
  %4070 = vmatprep.subr.mxu0 0.0
  %4071 = vmatpush1.msra.mxu0 0.0
  %4072 = vmatprep.subr.mxu0 0.0
  %4073 = vmatpush1.msra.mxu0 0.0
  %4074 = vmatprep.subr.mxu0 0.0
  %4075 = vmatpush1.msra.mxu0 0.0
  %4076 = vmatprep.subr.mxu0 0.0
  %4077 = vmatpush1.msra.mxu0 0.0
  %4078 = vmatprep.subr.mxu0 0.0
  %4079 = vmatpush1.msra.mxu0 0.0
  %4080 = vmatprep.subr.mxu0 0.0
  %4081 = vmatpush1.msra.mxu0 0.0
  %4082 = vmatprep.subr.mxu0 0.0
  %4083 = vmatpush1.msra.mxu0 0.0
  %4084 = vmatprep.subr.mxu0 0.0
  %4085 = vmatpush1.msra.mxu0 0.0
  %4086 = vmatprep.subr.mxu0 0.0
  %4087 = vmatpush1.msra.mxu0 0.0
  %4088 = vmatprep.subr.mxu0 0.0
  %4089 = vmatpush1.msra.mxu0 0.0
  %4090 = vmatprep.subr.mxu0 0.0
  %4091 = vmatpush1.msra.mxu0 0.0
  %4092 = vmatprep.subr.mxu0 0.0
  %4093 = vmatpush1.msra.mxu0 0.0
  %4094 = vmatprep.subr.mxu0 0.0
  %4095 = vmatpush1.msra.mxu0 0.0
  %4096 = vmatprep.subr.mxu0 0.0
  %4097 = vmatpush1.msra.mxu0 0.0
  %4098 = vmatprep.subr.mxu0 0.0
  %4099 = vmatpush1.msra.mxu0 0.0
  %4100 = vmatprep.subr.mxu0 0.0
  %4101 = vmatpush1.msra.mxu0 0.0
  %4102 = vmatprep.subr.mxu0 0.0
  %4103 = vmatpush1.msra.mxu0 0.0
  %4104 = vmatprep.subr.mxu0 0.0
  %4105 = vmatpush1.msra.mxu0 0.0
  %4106 = vmatprep.subr.mxu0 0.0
  %4107 = vmatpush1.msra.mxu0 0.0
  %4108 = vmatprep.mubr.f32.mxu0 0.0
  %4109 = vmatmul.mubr.f32.gmra.mrb[0].mxu0 %v4039
  %v4110 = vpop.f32.mrb[0].mxu0
  %v4111 = vadd.f32 %v4036, %v4110
  %v4112 = vpop.f32.mrb[0].mxu0
  %4113 = vmatprep.mubr.f32.mxu0 0.0
  %4114 = vmatmul.mubr.f32.gmra.mrb[0].mxu0 %v4042
  %v4115 = vpop.f32.mrb[0].mxu0
  %v4116 = vadd.f32 %v4036, %v4115
  %v4117 = vpop.f32.mrb[0].mxu0
  %4118 = vdwg.mxu0
  %v4119 = vadd.f32 %v2494, %v4111
  %v4120 = vadd.f32 %v2495, %v4116
  %v4121 = vsel %vm676, %v4119, 0.0
  %4122 = vadd.xlane.f32.xlu0 %v4121
  %v4123 = vpop.xlane.xlu0 %4122
  %v4124 = vsel %vm676, %v4120, 0.0
  %4125 = vadd.xlane.f32.xlu0 %v4124
  %v4126 = vpop.xlane.xlu0 %4125
  %v4127 = vmul.f32 %v4123, %v2245
  %v4128 = vmul.f32 %v4126, %v2245
  %v4129 = vsub.f32 %v4119, %v4127
  %v4130 = vsub.f32 %v4120, %v4128
  %v4131 = vmul.f32 %v4129, %v4129
  %v4132 = vmul.f32 %v4130, %v4130
  %v4133 = vsel %vm676, %v4131, 0.0
  %4134 = vadd.xlane.f32.xlu0 %v4133
  %v4135 = vpop.xlane.xlu0 %4134
  %v4136 = vsel %vm676, %v4132, 0.0
  %4137 = vadd.xlane.f32.xlu0 %v4136
  %v4138 = vpop.xlane.xlu0 %4137
  %v4139 = vmul.f32 %v4135, %v2245
  %v4140 = vmul.f32 %v4138, %v2245
  %v4141 = vadd.f32 %v4139, 1e-05
  %v4142 = vadd.f32 %v4140, 1e-05
  %v4143 = vrsqrt.pop %v4141
  %v4144 = vrsqrt.pop %v4142
  %v4145 = vmul.f32 %v4129, %v4143
  %v4146 = vmul.f32 %v4130, %v4144
  %v4148 = vlaneseq
  %v4149 = vshrl.u32 %v4148, 7
  %v4150 = vsub.s32 0, %v4149
  %v4151 = vrot.slane %v2548, %v4150
  %v4153 = vmul.f32 %v4145, %v4151
  %v4154 = vmul.f32 %v4146, %v4151
  %v4156 = vlaneseq
  %v4157 = vshrl.u32 %v4156, 7
  %v4158 = vsub.s32 0, %v4157
  %v4159 = vrot.slane %v2549, %v4158
  %v4161 = vadd.f32 %v4153, %v4159
  %v4162 = vadd.f32 %v4154, %v4159
  %v4164 = vlaneseq
  %v4165 = vshrl.u32 %v4164, 7
  %v4166 = vsub.s32 0, %v4165
  %v4167 = vrot.slane %v2530, %v4166
  %v4170 = vsel %vm676, %v4161, 0
  %v4173 = vsel %vm676, %v4162, 0
  %4175 = vmatprep.subr.mxu0 0.0
  %4176 = vmatpush1.msra.mxu0 %v2522
  %4177 = vmatprep.subr.mxu0 0.0
  %4178 = vmatpush1.msra.mxu0 %v2523
  %4179 = vmatprep.subr.mxu0 0.0
  %4180 = vmatpush1.msra.mxu0 %v2524
  %4181 = vmatprep.subr.mxu0 0.0
  %4182 = vmatpush1.msra.mxu0 %v2525
  %4183 = vmatprep.subr.mxu0 0.0
  %4184 = vmatpush1.msra.mxu0 %v2526
  %4185 = vmatprep.subr.mxu0 0.0
  %4186 = vmatpush1.msra.mxu0 %v2527
  %4187 = vmatprep.subr.mxu0 0.0
  %4188 = vmatpush1.msra.mxu0 %v2528
  %4189 = vmatprep.subr.mxu0 0.0
  %4190 = vmatpush1.msra.mxu0 %v2529
  %4191 = vmatprep.subr.mxu0 0.0
  %4192 = vmatpush1.msra.mxu0 0.0
  %4193 = vmatprep.subr.mxu0 0.0
  %4194 = vmatpush1.msra.mxu0 0.0
  %4195 = vmatprep.subr.mxu0 0.0
  %4196 = vmatpush1.msra.mxu0 0.0
  %4197 = vmatprep.subr.mxu0 0.0
  %4198 = vmatpush1.msra.mxu0 0.0
  %4199 = vmatprep.subr.mxu0 0.0
  %4200 = vmatpush1.msra.mxu0 0.0
  %4201 = vmatprep.subr.mxu0 0.0
  %4202 = vmatpush1.msra.mxu0 0.0
  %4203 = vmatprep.subr.mxu0 0.0
  %4204 = vmatpush1.msra.mxu0 0.0
  %4205 = vmatprep.subr.mxu0 0.0
  %4206 = vmatpush1.msra.mxu0 0.0
  %4207 = vmatprep.subr.mxu0 0.0
  %4208 = vmatpush1.msra.mxu0 0.0
  %4209 = vmatprep.subr.mxu0 0.0
  %4210 = vmatpush1.msra.mxu0 0.0
  %4211 = vmatprep.subr.mxu0 0.0
  %4212 = vmatpush1.msra.mxu0 0.0
  %4213 = vmatprep.subr.mxu0 0.0
  %4214 = vmatpush1.msra.mxu0 0.0
  %4215 = vmatprep.subr.mxu0 0.0
  %4216 = vmatpush1.msra.mxu0 0.0
  %4217 = vmatprep.subr.mxu0 0.0
  %4218 = vmatpush1.msra.mxu0 0.0
  %4219 = vmatprep.subr.mxu0 0.0
  %4220 = vmatpush1.msra.mxu0 0.0
  %4221 = vmatprep.subr.mxu0 0.0
  %4222 = vmatpush1.msra.mxu0 0.0
  %4223 = vmatprep.subr.mxu0 0.0
  %4224 = vmatpush1.msra.mxu0 0.0
  %4225 = vmatprep.subr.mxu0 0.0
  %4226 = vmatpush1.msra.mxu0 0.0
  %4227 = vmatprep.subr.mxu0 0.0
  %4228 = vmatpush1.msra.mxu0 0.0
  %4229 = vmatprep.subr.mxu0 0.0
  %4230 = vmatpush1.msra.mxu0 0.0
  %4231 = vmatprep.subr.mxu0 0.0
  %4232 = vmatpush1.msra.mxu0 0.0
  %4233 = vmatprep.subr.mxu0 0.0
  %4234 = vmatpush1.msra.mxu0 0.0
  %4235 = vmatprep.subr.mxu0 0.0
  %4236 = vmatpush1.msra.mxu0 0.0
  %4237 = vmatprep.subr.mxu0 0.0
  %4238 = vmatpush1.msra.mxu0 0.0
  %4239 = vmatprep.mubr.f32.mxu0 0.0
  %4240 = vmatmul.mubr.f32.gmra.mrb[0].mxu0 %v4170
  %v4241 = vpop.f32.mrb[0].mxu0
  %v4242 = vadd.f32 %v4167, %v4241
  %v4243 = vpop.f32.mrb[0].mxu0
  %4244 = vmatprep.mubr.f32.mxu0 0.0
  %4245 = vmatmul.mubr.f32.gmra.mrb[0].mxu0 %v4173
  %v4246 = vpop.f32.mrb[0].mxu0
  %v4247 = vadd.f32 %v4167, %v4246
  %v4248 = vpop.f32.mrb[0].mxu0
  %4249 = vdwg.mxu0
  %v4250 = vmax.f32 %v4242, 0.0
  %v4251 = vmax.f32 %v4247, 0.0
  %v4253 = vlaneseq
  %v4254 = vshrl.u32 %v4253, 7
  %v4255 = vsub.s32 0, %v4254
  %v4256 = vrot.slane %v2547, %v4255
  %4258 = vmatprep.subr.mxu0 0.0
  %4259 = vmatpush1.msra.mxu0 %v2531
  %4260 = vmatprep.subr.mxu0 0.0
  %4261 = vmatpush1.msra.mxu0 %v2532
  %4262 = vmatprep.subr.mxu0 0.0
  %4263 = vmatpush1.msra.mxu0 %v2533
  %4264 = vmatprep.subr.mxu0 0.0
  %4265 = vmatpush1.msra.mxu0 %v2534
  %4266 = vmatprep.subr.mxu0 0.0
  %4267 = vmatpush1.msra.mxu0 %v2535
  %4268 = vmatprep.subr.mxu0 0.0
  %4269 = vmatpush1.msra.mxu0 %v2536
  %4270 = vmatprep.subr.mxu0 0.0
  %4271 = vmatpush1.msra.mxu0 %v2537
  %4272 = vmatprep.subr.mxu0 0.0
  %4273 = vmatpush1.msra.mxu0 %v2538
  %4274 = vmatprep.subr.mxu0 0.0
  %4275 = vmatpush1.msra.mxu0 %v2539
  %4276 = vmatprep.subr.mxu0 0.0
  %4277 = vmatpush1.msra.mxu0 %v2540
  %4278 = vmatprep.subr.mxu0 0.0
  %4279 = vmatpush1.msra.mxu0 %v2541
  %4280 = vmatprep.subr.mxu0 0.0
  %4281 = vmatpush1.msra.mxu0 %v2542
  %4282 = vmatprep.subr.mxu0 0.0
  %4283 = vmatpush1.msra.mxu0 %v2543
  %4284 = vmatprep.subr.mxu0 0.0
  %4285 = vmatpush1.msra.mxu0 %v2544
  %4286 = vmatprep.subr.mxu0 0.0
  %4287 = vmatpush1.msra.mxu0 %v2545
  %4288 = vmatprep.subr.mxu0 0.0
  %4289 = vmatpush1.msra.mxu0 %v2546
  %4290 = vmatprep.subr.mxu0 0.0
  %4291 = vmatpush1.msra.mxu0 0.0
  %4292 = vmatprep.subr.mxu0 0.0
  %4293 = vmatpush1.msra.mxu0 0.0
  %4294 = vmatprep.subr.mxu0 0.0
  %4295 = vmatpush1.msra.mxu0 0.0
  %4296 = vmatprep.subr.mxu0 0.0
  %4297 = vmatpush1.msra.mxu0 0.0
  %4298 = vmatprep.subr.mxu0 0.0
  %4299 = vmatpush1.msra.mxu0 0.0
  %4300 = vmatprep.subr.mxu0 0.0
  %4301 = vmatpush1.msra.mxu0 0.0
  %4302 = vmatprep.subr.mxu0 0.0
  %4303 = vmatpush1.msra.mxu0 0.0
  %4304 = vmatprep.subr.mxu0 0.0
  %4305 = vmatpush1.msra.mxu0 0.0
  %4306 = vmatprep.subr.mxu0 0.0
  %4307 = vmatpush1.msra.mxu0 0.0
  %4308 = vmatprep.subr.mxu0 0.0
  %4309 = vmatpush1.msra.mxu0 0.0
  %4310 = vmatprep.subr.mxu0 0.0
  %4311 = vmatpush1.msra.mxu0 0.0
  %4312 = vmatprep.subr.mxu0 0.0
  %4313 = vmatpush1.msra.mxu0 0.0
  %4314 = vmatprep.subr.mxu0 0.0
  %4315 = vmatpush1.msra.mxu0 0.0
  %4316 = vmatprep.subr.mxu0 0.0
  %4317 = vmatpush1.msra.mxu0 0.0
  %4318 = vmatprep.subr.mxu0 0.0
  %4319 = vmatpush1.msra.mxu0 0.0
  %4320 = vmatprep.subr.mxu0 0.0
  %4321 = vmatpush1.msra.mxu0 0.0
  %4322 = vmatprep.mubr.f32.mxu0 0.0
  %4323 = vmatmul.mubr.f32.gmra.mrb[0].mxu0 %v4250
  %v4324 = vpop.f32.mrb[0].mxu0
  %v4325 = vadd.f32 %v4256, %v4324
  %v4326 = vpop.f32.mrb[0].mxu0
  %4327 = vmatprep.mubr.f32.mxu0 0.0
  %4328 = vmatmul.mubr.f32.gmra.mrb[0].mxu0 %v4251
  %v4329 = vpop.f32.mrb[0].mxu0
  %v4330 = vadd.f32 %v4256, %v4329
  %v4331 = vpop.f32.mrb[0].mxu0
  %4332 = vdwg.mxu0
  %v4333 = vadd.f32 %v4161, %v4325
  %v4334 = vadd.f32 %v4162, %v4330
  %v4335 = vsel %vm676, %v4333, 0.0
  %4336 = vadd.xlane.f32.xlu0 %v4335
  %v4337 = vpop.xlane.xlu0 %4336
  %v4338 = vsel %vm676, %v4334, 0.0
  %4339 = vadd.xlane.f32.xlu0 %v4338
  %v4340 = vpop.xlane.xlu0 %4339
  %v4341 = vmul.f32 %v4337, %v2245
  %v4342 = vmul.f32 %v4340, %v2245
  %v4343 = vsub.f32 %v4333, %v4341
  %v4344 = vsub.f32 %v4334, %v4342
  %v4345 = vmul.f32 %v4343, %v4343
  %v4346 = vmul.f32 %v4344, %v4344
  %v4347 = vsel %vm676, %v4345, 0.0
  %4348 = vadd.xlane.f32.xlu0 %v4347
  %v4349 = vpop.xlane.xlu0 %4348
  %v4350 = vsel %vm676, %v4346, 0.0
  %4351 = vadd.xlane.f32.xlu0 %v4350
  %v4352 = vpop.xlane.xlu0 %4351
  %v4353 = vmul.f32 %v4349, %v2245
  %v4354 = vmul.f32 %v4352, %v2245
  %v4355 = vadd.f32 %v4353, 1e-05
  %v4356 = vadd.f32 %v4354, 1e-05
  %v4357 = vrsqrt.pop %v4355
  %v4358 = vrsqrt.pop %v4356
  %v4359 = vmul.f32 %v4343, %v4357
  %v4360 = vmul.f32 %v4344, %v4358
  %v4362 = vlaneseq
  %v4363 = vshrl.u32 %v4362, 7
  %v4364 = vsub.s32 0, %v4363
  %v4365 = vrot.slane %v2550, %v4364
  %v4367 = vmul.f32 %v4359, %v4365
  %v4368 = vmul.f32 %v4360, %v4365
  %v4370 = vlaneseq
  %v4371 = vshrl.u32 %v4370, 7
  %v4372 = vsub.s32 0, %v4371
  %v4373 = vrot.slane %v2551, %v4372
  %v4375 = vadd.f32 %v4367, %v4373
  %v4376 = vadd.f32 %v4368, %v4373
  %v4377 = vld [vmem:[%s69] sm:$0xff]
  %v4378 = vld [vmem:[%s69 + $0x8] sm:$0xff]
  %v4379 = vld [vmem:[%s69 + $0x10] sm:$0xff]
  %v4380 = vld [vmem:[%s69 + $0x18] sm:$0xff]
  %v4381 = vld [vmem:[%s69 + $0x20] sm:$0xff]
  %v4382 = vld [vmem:[%s69 + $0x28] sm:$0xff]
  %v4383 = vld [vmem:[%s69 + $0x30] sm:$0xff]
  %v4384 = vld [vmem:[%s69 + $0x38] sm:$0xff]
  %v4385 = vld [vmem:[%s71] sm:$0x1]
  %v4386 = vld [vmem:[%s73] sm:$0x1]
  %v4387 = vld [vmem:[%s75] sm:$0x1]
  %v4388 = vld [vmem:[%s77] sm:$0xff]
  %v4389 = vld [vmem:[%s77 + $0x8] sm:$0xff]
  %v4390 = vld [vmem:[%s77 + $0x10] sm:$0xff]
  %v4391 = vld [vmem:[%s77 + $0x18] sm:$0xff]
  %v4392 = vld [vmem:[%s79] sm:$0x1]
  %v4394 = vlaneseq
  %v4395 = vshrl.u32 %v4394, 7
  %v4396 = vsub.s32 0, %v4395
  %v4397 = vrot.slane %v4385, %v4396
  %v4400 = vsel %vm676, %v4375, 0
  %v4403 = vsel %vm676, %v4376, 0
  %4405 = vmatprep.subr.mxu0 0.0
  %4406 = vmatpush1.msra.mxu0 %v4377
  %4407 = vmatprep.subr.mxu0 0.0
  %4408 = vmatpush1.msra.mxu0 %v4378
  %4409 = vmatprep.subr.mxu0 0.0
  %4410 = vmatpush1.msra.mxu0 %v4379
  %4411 = vmatprep.subr.mxu0 0.0
  %4412 = vmatpush1.msra.mxu0 %v4380
  %4413 = vmatprep.subr.mxu0 0.0
  %4414 = vmatpush1.msra.mxu0 %v4381
  %4415 = vmatprep.subr.mxu0 0.0
  %4416 = vmatpush1.msra.mxu0 %v4382
  %4417 = vmatprep.subr.mxu0 0.0
  %4418 = vmatpush1.msra.mxu0 %v4383
  %4419 = vmatprep.subr.mxu0 0.0
  %4420 = vmatpush1.msra.mxu0 %v4384
  %4421 = vmatprep.subr.mxu0 0.0
  %4422 = vmatpush1.msra.mxu0 0.0
  %4423 = vmatprep.subr.mxu0 0.0
  %4424 = vmatpush1.msra.mxu0 0.0
  %4425 = vmatprep.subr.mxu0 0.0
  %4426 = vmatpush1.msra.mxu0 0.0
  %4427 = vmatprep.subr.mxu0 0.0
  %4428 = vmatpush1.msra.mxu0 0.0
  %4429 = vmatprep.subr.mxu0 0.0
  %4430 = vmatpush1.msra.mxu0 0.0
  %4431 = vmatprep.subr.mxu0 0.0
  %4432 = vmatpush1.msra.mxu0 0.0
  %4433 = vmatprep.subr.mxu0 0.0
  %4434 = vmatpush1.msra.mxu0 0.0
  %4435 = vmatprep.subr.mxu0 0.0
  %4436 = vmatpush1.msra.mxu0 0.0
  %4437 = vmatprep.subr.mxu0 0.0
  %4438 = vmatpush1.msra.mxu0 0.0
  %4439 = vmatprep.subr.mxu0 0.0
  %4440 = vmatpush1.msra.mxu0 0.0
  %4441 = vmatprep.subr.mxu0 0.0
  %4442 = vmatpush1.msra.mxu0 0.0
  %4443 = vmatprep.subr.mxu0 0.0
  %4444 = vmatpush1.msra.mxu0 0.0
  %4445 = vmatprep.subr.mxu0 0.0
  %4446 = vmatpush1.msra.mxu0 0.0
  %4447 = vmatprep.subr.mxu0 0.0
  %4448 = vmatpush1.msra.mxu0 0.0
  %4449 = vmatprep.subr.mxu0 0.0
  %4450 = vmatpush1.msra.mxu0 0.0
  %4451 = vmatprep.subr.mxu0 0.0
  %4452 = vmatpush1.msra.mxu0 0.0
  %4453 = vmatprep.subr.mxu0 0.0
  %4454 = vmatpush1.msra.mxu0 0.0
  %4455 = vmatprep.subr.mxu0 0.0
  %4456 = vmatpush1.msra.mxu0 0.0
  %4457 = vmatprep.subr.mxu0 0.0
  %4458 = vmatpush1.msra.mxu0 0.0
  %4459 = vmatprep.subr.mxu0 0.0
  %4460 = vmatpush1.msra.mxu0 0.0
  %4461 = vmatprep.subr.mxu0 0.0
  %4462 = vmatpush1.msra.mxu0 0.0
  %4463 = vmatprep.subr.mxu0 0.0
  %4464 = vmatpush1.msra.mxu0 0.0
  %4465 = vmatprep.subr.mxu0 0.0
  %4466 = vmatpush1.msra.mxu0 0.0
  %4467 = vmatprep.subr.mxu0 0.0
  %4468 = vmatpush1.msra.mxu0 0.0
  %4469 = vmatprep.mubr.f32.mxu0 0.0
  %4470 = vmatmul.mubr.f32.gmra.mrb[0].mxu0 %v4400
  %v4471 = vpop.f32.mrb[0].mxu0
  %v4472 = vadd.f32 %v4397, %v4471
  %v4473 = vpop.f32.mrb[0].mxu0
  %4474 = vmatprep.mubr.f32.mxu0 0.0
  %4475 = vmatmul.mubr.f32.gmra.mrb[0].mxu0 %v4403
  %v4476 = vpop.f32.mrb[0].mxu0
  %v4477 = vadd.f32 %v4397, %v4476
  %v4478 = vpop.f32.mrb[0].mxu0
  %4479 = vdwg.mxu0
  %v4480 = vsel %vm196, %v4472, 0.0
  %4481 = vadd.xlane.f32.xlu0 %v4480
  %v4482 = vpop.xlane.xlu0 %4481
  %v4483 = vsel %vm196, %v4477, 0.0
  %4484 = vadd.xlane.f32.xlu0 %v4483
  %v4485 = vpop.xlane.xlu0 %4484
  %v4486 = vrcp.pop 32.0
  %v4487 = vmul.f32 %v4482, %v4486
  %v4488 = vmul.f32 %v4485, %v4486
  %v4489 = vsub.f32 %v4472, %v4487
  %v4490 = vsub.f32 %v4477, %v4488
  %v4491 = vmul.f32 %v4489, %v4489
  %v4492 = vmul.f32 %v4490, %v4490
  %v4493 = vsel %vm196, %v4491, 0.0
  %4494 = vadd.xlane.f32.xlu0 %v4493
  %v4495 = vpop.xlane.xlu0 %4494
  %v4496 = vsel %vm196, %v4492, 0.0
  %4497 = vadd.xlane.f32.xlu0 %v4496
  %v4498 = vpop.xlane.xlu0 %4497
  %v4499 = vmul.f32 %v4495, %v4486
  %v4500 = vmul.f32 %v4498, %v4486
  %v4501 = vadd.f32 %v4499, 1e-05
  %v4502 = vadd.f32 %v4500, 1e-05
  %v4503 = vrsqrt.pop %v4501
  %v4504 = vrsqrt.pop %v4502
  %v4505 = vmul.f32 %v4489, %v4503
  %v4506 = vmul.f32 %v4490, %v4504
  %v4508 = vlaneseq
  %v4509 = vshrl.u32 %v4508, 7
  %v4510 = vsub.s32 0, %v4509
  %v4511 = vrot.slane %v4386, %v4510
  %v4513 = vmul.f32 %v4505, %v4511
  %v4514 = vmul.f32 %v4506, %v4511
  %v4516 = vlaneseq
  %v4517 = vshrl.u32 %v4516, 7
  %v4518 = vsub.s32 0, %v4517
  %v4519 = vrot.slane %v4387, %v4518
  %v4521 = vadd.f32 %v4513, %v4519
  %v4522 = vadd.f32 %v4514, %v4519
  %v4523 = vmax.f32 %v4521, 0.0
  %v4524 = vmax.f32 %v4522, 0.0
  %v4526 = vlaneseq
  %v4527 = vshrl.u32 %v4526, 7
  %v4528 = vsub.s32 0, %v4527
  %v4529 = vrot.slane %v4392, %v4528
  %v4532 = vsel %vm196, %v4523, 0
  %v4535 = vsel %vm196, %v4524, 0
  %4537 = vmatprep.subr.mxu0 0.0
  %4538 = vmatpush1.msra.mxu0 %v4388
  %4539 = vmatprep.subr.mxu0 0.0
  %4540 = vmatpush1.msra.mxu0 %v4389
  %4541 = vmatprep.subr.mxu0 0.0
  %4542 = vmatpush1.msra.mxu0 %v4390
  %4543 = vmatprep.subr.mxu0 0.0
  %4544 = vmatpush1.msra.mxu0 %v4391
  %4545 = vmatprep.subr.mxu0 0.0
  %4546 = vmatpush1.msra.mxu0 0.0
  %4547 = vmatprep.subr.mxu0 0.0
  %4548 = vmatpush1.msra.mxu0 0.0
  %4549 = vmatprep.subr.mxu0 0.0
  %4550 = vmatpush1.msra.mxu0 0.0
  %4551 = vmatprep.subr.mxu0 0.0
  %4552 = vmatpush1.msra.mxu0 0.0
  %4553 = vmatprep.subr.mxu0 0.0
  %4554 = vmatpush1.msra.mxu0 0.0
  %4555 = vmatprep.subr.mxu0 0.0
  %4556 = vmatpush1.msra.mxu0 0.0
  %4557 = vmatprep.subr.mxu0 0.0
  %4558 = vmatpush1.msra.mxu0 0.0
  %4559 = vmatprep.subr.mxu0 0.0
  %4560 = vmatpush1.msra.mxu0 0.0
  %4561 = vmatprep.subr.mxu0 0.0
  %4562 = vmatpush1.msra.mxu0 0.0
  %4563 = vmatprep.subr.mxu0 0.0
  %4564 = vmatpush1.msra.mxu0 0.0
  %4565 = vmatprep.subr.mxu0 0.0
  %4566 = vmatpush1.msra.mxu0 0.0
  %4567 = vmatprep.subr.mxu0 0.0
  %4568 = vmatpush1.msra.mxu0 0.0
  %4569 = vmatprep.subr.mxu0 0.0
  %4570 = vmatpush1.msra.mxu0 0.0
  %4571 = vmatprep.subr.mxu0 0.0
  %4572 = vmatpush1.msra.mxu0 0.0
  %4573 = vmatprep.subr.mxu0 0.0
  %4574 = vmatpush1.msra.mxu0 0.0
  %4575 = vmatprep.subr.mxu0 0.0
  %4576 = vmatpush1.msra.mxu0 0.0
  %4577 = vmatprep.subr.mxu0 0.0
  %4578 = vmatpush1.msra.mxu0 0.0
  %4579 = vmatprep.subr.mxu0 0.0
  %4580 = vmatpush1.msra.mxu0 0.0
  %4581 = vmatprep.subr.mxu0 0.0
  %4582 = vmatpush1.msra.mxu0 0.0
  %4583 = vmatprep.subr.mxu0 0.0
  %4584 = vmatpush1.msra.mxu0 0.0
  %4585 = vmatprep.subr.mxu0 0.0
  %4586 = vmatpush1.msra.mxu0 0.0
  %4587 = vmatprep.subr.mxu0 0.0
  %4588 = vmatpush1.msra.mxu0 0.0
  %4589 = vmatprep.subr.mxu0 0.0
  %4590 = vmatpush1.msra.mxu0 0.0
  %4591 = vmatprep.subr.mxu0 0.0
  %4592 = vmatpush1.msra.mxu0 0.0
  %4593 = vmatprep.subr.mxu0 0.0
  %4594 = vmatpush1.msra.mxu0 0.0
  %4595 = vmatprep.subr.mxu0 0.0
  %4596 = vmatpush1.msra.mxu0 0.0
  %4597 = vmatprep.subr.mxu0 0.0
  %4598 = vmatpush1.msra.mxu0 0.0
  %4599 = vmatprep.subr.mxu0 0.0
  %4600 = vmatpush1.msra.mxu0 0.0
  %4601 = vmatprep.mubr.f32.mxu0 0.0
  %4602 = vmatmul.mubr.f32.gmra.mrb[0].mxu0 %v4532
  %v4603 = vpop.f32.mrb[0].mxu0
  %v4604 = vadd.f32 %v4529, %v4603
  %v4605 = vpop.f32.mrb[0].mxu0
  %4606 = vmatprep.mubr.f32.mxu0 0.0
  %4607 = vmatmul.mubr.f32.gmra.mrb[0].mxu0 %v4535
  %v4608 = vpop.f32.mrb[0].mxu0
  %v4609 = vadd.f32 %v4529, %v4608
  %v4610 = vpop.f32.mrb[0].mxu0
  %4611 = vdwg.mxu0
  %vm4612 = vcmask 23552
  %4613 = vst.msk [vmem:[%s81] sm:$0xff] %vm4612, %v4604
  %4614 = vst.msk [vmem:[%s81 + $0x8] sm:$0xff] %vm4612, %v4609
  // Predicated region
  $region162: #{denoiser_bev_forward.1} parent=0 // pred_check
    _
  $region163: #{denoiser_bev_forward.1} parent=0 // pred_check_branch
    %4616 = sbr.rel (0) target = $region165
  $region164: #{denoiser_bev_forward.1} parent=0 // pred_region
    _
  $region165: #{denoiser_bev_forward.1} parent=0 // pred_fallthru
    _
  // Predicated region
  $region166: #{denoiser_bev_forward.1} parent=0 // pred_check
    _
  $region167: #{denoiser_bev_forward.1} parent=0 // pred_check_branch
    %4618 = sbr.rel (0) target = $region169
  $region168: #{denoiser_bev_forward.1} parent=0 // pred_region
    _
  $region169: #{denoiser_bev_forward.1} parent=0 // pred_fallthru
    _

</llo_original>
